<compile_context>
chip_gen: v6e
topology: v6e:2x2x1
jax: 0.10.0
libtpu: 0.0.40
codegen_flags: <defaults>
</compile_context>

<pallas_src>
import jax
import jax.numpy as jnp
from jax.experimental import pallas as pl
from jax.experimental.pallas import tpu as pltpu

NUM_POINTS = 128   # from `out.view(-1, 128, self.num_classes)`
FEAT_DIM = 384     # output channels of the last PointCNNConvDown
LANE = 128
BN_EPS = 1e-5
_MASK = -1e30      # finite in f32; padded class lanes are sliced off outside


def _elu(v, exp_dtype=jnp.float32, out_dtype=jnp.float32):
    """ELU. exp(min(v,0)) avoids +inf intermediates; `exp_dtype` controls the
    EUP precision (bf16 on v6e/v7x halves EUP work), `out_dtype` lets the
    activation be emitted directly in the dtype the next matmul consumes."""
    neg = jnp.exp(jnp.minimum(v, 0.0).astype(exp_dtype)).astype(jnp.float32) - 1.0
    return jnp.where(v > 0.0, v, neg).astype(out_dtype)


def _make_kernel(tile_samples, num_classes, exp_dtype):
    """Fused fc head + per-sample mean + log_softmax for one row tile."""
    def kernel(x_ref, w1_ref, b1_ref, w2_ref, b2_ref, w3_ref, b3_ref, out_ref):
        # Input tile arrives in its HBM dtype (f32); cast to bf16 in VMEM.
        xb = x_ref[...].astype(jnp.bfloat16)

        # Linear(384,256) + ELU        (BN1 affine pre-folded into w2/b2).
        h1 = jnp.dot(xb, w1_ref[...],
                     preferred_element_type=jnp.float32) + b1_ref[...]
        h1 = _elu(h1, exp_dtype=exp_dtype, out_dtype=jnp.bfloat16)

        # Linear(256,128) + ELU        (BN2 affine pre-folded into w3/b3).
        h2 = jnp.dot(h1, w2_ref[...],
                     preferred_element_type=jnp.float32) + b2_ref[...]
        h2 = _elu(h2, exp_dtype=exp_dtype, out_dtype=jnp.float32)

        # Dropout(0.5): identity (eval mode only).

        # Per-sample mean over the 128 points of each sample, in f32 on the
        # VPU (mean commutes with the final affine Linear, so pool first).
        h3 = h2.reshape(tile_samples, NUM_POINTS, h2.shape[-1])
        hm = h3.sum(axis=1) * jnp.float32(1.0 / NUM_POINTS)      # (S, 128) f32

        logits = jnp.dot(hm.astype(jnp.bfloat16), w3_ref[...],
                         preferred_element_type=jnp.float32) + b3_ref[...]

        # Mask the lane-padding (classes >= num_classes) before log_softmax.
        lane = jax.lax.broadcasted_iota(jnp.int32, logits.shape, 1)
        logits = jnp.where(lane < num_classes, logits, _MASK)

        m = jnp.max(logits, axis=-1, keepdims=True)
        z = logits - m
        lse = jnp.log(jnp.sum(jnp.exp(z), axis=-1, keepdims=True))
        out_ref[...] = z - lse

    return kernel


def _tpu_defaults():
    """(tile_samples, vmem_limit_bytes or None, elu exp dtype) per generation."""
    try:
        kind = jax.devices()[0].device_kind.lower()
    except Exception:
        kind = ""
    if "v6" in kind:                                  # 128 MiB VMEM, bf16 EUP
        return 64, 96 * 1024 * 1024, jnp.bfloat16
    if "7x" in kind or "v7" in kind:                  # 64 MiB VMEM/TC, 2 TCs
        return 32, 40 * 1024 * 1024, jnp.bfloat16
    if "v5" in kind or "v4" in kind:                  # 128 MiB VMEM, no bf16 EUP
        return 64, 96 * 1024 * 1024, jnp.float32
    # Unknown generation: conservative (keep default scoped VMEM limit).
    return 8, None, jnp.float32


def _choose_tiling(batch, target_ts):
    """Pick a tile size (multiple of 8, <= target) that minimizes batch
    padding while keeping >=2 grid steps whenever the batch allows it."""
    hi = min(target_ts, batch)
    if batch > 8:
        hi = min(hi, -(-batch // 2))       # ceil(batch/2) -> >=2 grid steps
    hi = max(8, (hi // 8) * 8)
    best_ts, best_pad = 8, None
    for ts in range(8, hi + 1, 8):
        pad = (-batch) % ts
        if best_pad is None or pad < best_pad or (pad == best_pad and ts > best_ts):
            best_ts, best_pad = ts, pad
    return best_ts, batch + best_pad


def pointcnn_fc_head(x, folded_params, num_classes,
                     tile_samples=None, vmem_limit_bytes=None, exp_dtype=None):
    """x: (B*128, 384) point features; returns (B, num_classes) log-probs."""
    n_rows, feat = x.shape
    assert n_rows % NUM_POINTS == 0, "need a whole number of 128-point samples"
    batch = n_rows // NUM_POINTS
    w1, b1, w2, b2, w3, b3 = folded_params
    padded_nc = w3.shape[1]

    ts_def, vmem_def, exp_def = _tpu_defaults()
    ts_target = tile_samples if tile_samples is not None else ts_def
    vmem_limit = vmem_limit_bytes if vmem_limit_bytes is not None else vmem_def
    exp_dtype = exp_dtype if exp_dtype is not None else exp_def

    ts, padded_batch = _choose_tiling(batch, ts_target)
    if padded_batch != batch:
        # Zero-pad whole samples; their outputs are sliced off below.
        x = jnp.pad(x, ((0, (padded_batch - batch) * NUM_POINTS), (0, 0)))
    tile_rows = ts * NUM_POINTS
    grid = (padded_batch // ts,)

    kernel = _make_kernel(ts, num_classes, exp_dtype)

    def resident(a):                       # same block every step -> DMA'd once
        return pl.BlockSpec(a.shape, lambda i: (0, 0))

    cp_kwargs = dict(dimension_semantics=("parallel",))   # shard tiles over TCs
    if vmem_limit is not None:
        cp_kwargs["vmem_limit_bytes"] = vmem_limit

    out = pl.pallas_call(
        kernel,
        out_shape=jax.ShapeDtypeStruct((padded_batch, padded_nc), jnp.float32),
        grid=grid,
        in_specs=[pl.BlockSpec((tile_rows, feat), lambda i: (i, 0)),
                  resident(w1), resident(b1),
                  resident(w2), resident(b2),
                  resident(w3), resident(b3)],
        out_specs=pl.BlockSpec((ts, padded_nc), lambda i: (i, 0)),
        compiler_params=pltpu.CompilerParams(**cp_kwargs),
    )(x, w1, b1, w2, b2, w3, b3)
    return out[:batch, :num_classes]


def init_params(key, num_classes):
    """Deterministic synthetic params matching the fc head shapes."""
    def linear_init(k, fan_in, fan_out):
        k1, k2 = jax.random.split(k)
        bound = 1.0 / jnp.sqrt(jnp.float32(fan_in))
        w = jax.random.uniform(k1, (fan_in, fan_out), jnp.float32, -bound, bound)
        b = jax.random.uniform(k2, (1, fan_out), jnp.float32, -bound, bound)
        return w, b

    def bn_fold(k, c):
        kg, kb, km, kv = jax.random.split(k, 4)
        gamma = 1.0 + 0.1 * jax.random.normal(kg, (1, c), jnp.float32)
        beta = 0.1 * jax.random.normal(kb, (1, c), jnp.float32)
        mean = 0.1 * jax.random.normal(km, (1, c), jnp.float32)
        var = jnp.abs(jax.random.normal(kv, (1, c), jnp.float32)) + 0.5
        scale = gamma / jnp.sqrt(var + BN_EPS)
        shift = beta - mean * scale
        return scale, shift

    k1, k2, k3, k4, k5 = jax.random.split(key, 5)
    w1, b1 = linear_init(k1, FEAT_DIM, 256)
    s1, t1 = bn_fold(k2, 256)
    w2, b2 = linear_init(k3, 256, 128)
    s2, t2 = bn_fold(k4, 128)
    w3, b3 = linear_init(k5, 128, num_classes)
    return (w1, b1, s1, t1, w2, b2, s2, t2, w3, b3)


def fold_params(params, num_classes):
    """Fold eval-mode BN affines into the next Linear, pad classes to a
    lane-dense 128, and cast matmul weights to bf16 (biases stay f32).
    NOTE: only valid for eval-mode semantics (Dropout identity, BN frozen)."""
    (w1, b1, s1, t1, w2, b2, s2, t2, w3, b3) = params
    w2f = w2 * s1.reshape(-1, 1)          # (256,128)
    b2f = t1 @ w2 + b2                    # (1,128)
    w3f = w3 * s2.reshape(-1, 1)          # (128,nc)
    b3f = t2 @ w3 + b3                    # (1,nc)
    padded_nc = ((num_classes + LANE - 1) // LANE) * LANE
    pad = padded_nc - num_classes
    w3p = jnp.pad(w3f, ((0, 0), (0, pad)))
    b3p = jnp.pad(b3f, ((0, 0), (0, pad)))        # padded lanes masked in-kernel
    return (w1.astype(jnp.bfloat16), b1,
            w2f.astype(jnp.bfloat16), b2f,
            w3p.astype(jnp.bfloat16), b3p)


def reference_forward(x, params, num_classes):
    """Pure-JAX f32 reference of the original module's fc-head semantics."""
    (w1, b1, s1, t1, w2, b2, s2, t2, w3, b3) = params
    h = _elu(x @ w1 + b1) * s1 + t1
    h = _elu(h @ w2 + b2) * s2 + t2
    out = h @ w3 + b3                                    # (B*128, nc)
    out = out.reshape(-1, NUM_POINTS, num_classes).mean(axis=1)
    return jax.nn.log_softmax(out, axis=-1)


if __name__ == "__main__":
    num_classes = 10
    batch = 16                             # 16 samples x 128 points
    n_rows = batch * NUM_POINTS

    key = jax.random.PRNGKey(0)
    kx, kp = jax.random.split(key)

    # Features that the (untranslated) xconv stack would emit: (B*128, 384).
    x = jax.random.normal(kx, (n_rows, FEAT_DIM), jnp.float32)
    params = init_params(kp, num_classes)
    folded = fold_params(params, num_classes)

    out = pointcnn_fc_head(x, folded, num_classes)
    out = jax.block_until_ready(out)

    ref = jax.block_until_ready(reference_forward(x, params, num_classes))
    assert out.shape == (batch, num_classes)
    err = float(jnp.max(jnp.abs(out - ref)))
    # bf16 matmul inputs / bf16 EUP (on v6e+) vs pure-f32 reference.
    assert err < 5e-2, f"kernel/reference mismatch: {err}"
    print("KERNEL_OK")
</pallas_src>

<mosaic_0001>
module attributes {stable_mosaic.version = 11 : i64} {
  func.func @kernel(%arg0: i32, %arg1: memref<1024x384xf32, #tpu.memory_space<vmem>>, %arg2: memref<384x256xbf16, #tpu.memory_space<vmem>>, %arg3: memref<1x256xf32, #tpu.memory_space<vmem>>, %arg4: memref<256x128xbf16, #tpu.memory_space<vmem>>, %arg5: memref<1x128xf32, #tpu.memory_space<vmem>>, %arg6: memref<128x128xbf16, #tpu.memory_space<vmem>>, %arg7: memref<1x128xf32, #tpu.memory_space<vmem>>, %arg8: memref<8x128xf32, #tpu.memory_space<vmem>>) attributes {dimension_semantics = [#tpu.dimension_semantics<parallel>], iteration_bounds = array<i64: 2>, scalar_prefetch = 0 : i64, scratch_operands = 0 : i64, tpu.core_type = #tpu.core_type<tc>, window_params = [{transform_indices = @transform_0, window_bounds = array<i64: 1024, 384>}, {pipeline_mode = #tpu.pipeline_mode<synchronous>, transform_indices = @transform_1, window_bounds = array<i64: 384, 256>}, {pipeline_mode = #tpu.pipeline_mode<synchronous>, transform_indices = @transform_2, window_bounds = array<i64: 1, 256>}, {pipeline_mode = #tpu.pipeline_mode<synchronous>, transform_indices = @transform_3, window_bounds = array<i64: 256, 128>}, {pipeline_mode = #tpu.pipeline_mode<synchronous>, transform_indices = @transform_4, window_bounds = array<i64: 1, 128>}, {pipeline_mode = #tpu.pipeline_mode<synchronous>, transform_indices = @transform_5, window_bounds = array<i64: 128, 128>}, {pipeline_mode = #tpu.pipeline_mode<synchronous>, transform_indices = @transform_6, window_bounds = array<i64: 1, 128>}, {transform_indices = @transform_7, window_bounds = array<i64: 8, 128>}]} {
    %c0 = arith.constant 0 : index
    %c0_0 = arith.constant 0 : index
    %0 = vector.load %arg1[%c0, %c0_0] : memref<1024x384xf32, #tpu.memory_space<vmem>>, vector<1024x384xf32>
    %1 = arith.truncf %0 : vector<1024x384xf32> to vector<1024x384xbf16>
    %c0_1 = arith.constant 0 : index
    %c0_2 = arith.constant 0 : index
    %2 = vector.load %arg2[%c0_1, %c0_2] : memref<384x256xbf16, #tpu.memory_space<vmem>>, vector<384x256xbf16>
    %cst = arith.constant dense<0.000000e+00> : vector<1024x256xf32>
    %3 = tpu.matmul %1, %2, %cst {dimension_numbers = #tpu.dot_dimension_numbers<[1], [0], [0], [1], [0, 0, 1, 1], [], []>} : vector<1024x384xbf16>, vector<384x256xbf16>, vector<1024x256xf32> -> vector<1024x256xf32>
    %c0_3 = arith.constant 0 : index
    %c0_4 = arith.constant 0 : index
    %4 = vector.load %arg3[%c0_3, %c0_4] : memref<1x256xf32, #tpu.memory_space<vmem>>, vector<1x256xf32>
    %5 = vector.broadcast %4 : vector<1x256xf32> to vector<1024x256xf32>
    %6 = arith.addf %3, %5 : vector<1024x256xf32>
    %cst_5 = arith.constant 0.000000e+00 : f32
    %7 = vector.broadcast %cst_5 : f32 to vector<1024x256xf32>
    %8 = arith.minimumf %6, %7 : vector<1024x256xf32>
    %9 = math.exp %8 : vector<1024x256xf32>
    %cst_6 = arith.constant 1.000000e+00 : f32
    %10 = vector.broadcast %cst_6 : f32 to vector<1024x256xf32>
    %11 = arith.subf %9, %10 : vector<1024x256xf32>
    %cst_7 = arith.constant 0.000000e+00 : f32
    %12 = vector.broadcast %cst_7 : f32 to vector<1024x256xf32>
    %13 = arith.cmpf ogt, %6, %12 : vector<1024x256xf32>
    %14 = arith.select %13, %6, %11 : vector<1024x256xi1>, vector<1024x256xf32>
    %15 = arith.truncf %14 : vector<1024x256xf32> to vector<1024x256xbf16>
    %c0_8 = arith.constant 0 : index
    %c0_9 = arith.constant 0 : index
    %16 = vector.load %arg4[%c0_8, %c0_9] : memref<256x128xbf16, #tpu.memory_space<vmem>>, vector<256x128xbf16>
    %cst_10 = arith.constant dense<0.000000e+00> : vector<1024x128xf32>
    %17 = tpu.matmul %15, %16, %cst_10 {dimension_numbers = #tpu.dot_dimension_numbers<[1], [0], [0], [1], [0, 0, 1, 1], [], []>} : vector<1024x256xbf16>, vector<256x128xbf16>, vector<1024x128xf32> -> vector<1024x128xf32>
    %c0_11 = arith.constant 0 : index
    %c0_12 = arith.constant 0 : index
    %18 = vector.load %arg5[%c0_11, %c0_12] : memref<1x128xf32, #tpu.memory_space<vmem>>, vector<1x128xf32>
    %19 = vector.broadcast %18 : vector<1x128xf32> to vector<1024x128xf32>
    %20 = arith.addf %17, %19 : vector<1024x128xf32>
    %cst_13 = arith.constant 0.000000e+00 : f32
    %21 = vector.broadcast %cst_13 : f32 to vector<1024x128xf32>
    %22 = arith.minimumf %20, %21 : vector<1024x128xf32>
    %23 = math.exp %22 : vector<1024x128xf32>
    %cst_14 = arith.constant 1.000000e+00 : f32
    %24 = vector.broadcast %cst_14 : f32 to vector<1024x128xf32>
    %25 = arith.subf %23, %24 : vector<1024x128xf32>
    %cst_15 = arith.constant 0.000000e+00 : f32
    %26 = vector.broadcast %cst_15 : f32 to vector<1024x128xf32>
    %27 = arith.cmpf ogt, %20, %26 : vector<1024x128xf32>
    %28 = arith.select %27, %20, %25 : vector<1024x128xi1>, vector<1024x128xf32>
    %29 = vector.shape_cast %28 : vector<1024x128xf32> to vector<8x128x128xf32>
    %cst_16 = arith.constant dense<0.000000e+00> : vector<8x128xf32>
    %30 = vector.multi_reduction <add>, %29, %cst_16 [1] : vector<8x128x128xf32> to vector<8x128xf32>
    %cst_17 = arith.constant 7.812500e-03 : f32
    %31 = vector.broadcast %cst_17 : f32 to vector<8x128xf32>
    %32 = arith.mulf %30, %31 : vector<8x128xf32>
    %33 = arith.truncf %32 : vector<8x128xf32> to vector<8x128xbf16>
    %c0_18 = arith.constant 0 : index
    %c0_19 = arith.constant 0 : index
    %34 = vector.load %arg6[%c0_18, %c0_19] : memref<128x128xbf16, #tpu.memory_space<vmem>>, vector<128x128xbf16>
    %cst_20 = arith.constant dense<0.000000e+00> : vector<8x128xf32>
    %35 = tpu.matmul %33, %34, %cst_20 {dimension_numbers = #tpu.dot_dimension_numbers<[1], [0], [0], [1], [0, 0, 1, 1], [], []>} : vector<8x128xbf16>, vector<128x128xbf16>, vector<8x128xf32> -> vector<8x128xf32>
    %c0_21 = arith.constant 0 : index
    %c0_22 = arith.constant 0 : index
    %36 = vector.load %arg7[%c0_21, %c0_22] : memref<1x128xf32, #tpu.memory_space<vmem>>, vector<1x128xf32>
    %37 = vector.broadcast %36 : vector<1x128xf32> to vector<8x128xf32>
    %38 = arith.addf %35, %37 : vector<8x128xf32>
    %39 = tpu.iota {dimensions = array<i32: 1>} : vector<8x128xi32>
    %c10_i32 = arith.constant 10 : i32
    %40 = vector.broadcast %c10_i32 : i32 to vector<8x128xi32>
    %41 = arith.cmpi slt, %39, %40 : vector<8x128xi32>
    %cst_23 = arith.constant -1.000000e+30 : f32
    %42 = vector.broadcast %cst_23 : f32 to vector<8x128xf32>
    %43 = arith.select %41, %38, %42 : vector<8x128xi1>, vector<8x128xf32>
    %cst_24 = arith.constant dense<0xFF800000> : vector<8xf32>
    %44 = vector.multi_reduction <maximumf>, %43, %cst_24 [1] : vector<8x128xf32> to vector<8xf32>
    %45 = vector.shape_cast %44 : vector<8xf32> to vector<8x1xf32>
    %46 = vector.broadcast %45 : vector<8x1xf32> to vector<8x128xf32>
    %47 = arith.subf %43, %46 : vector<8x128xf32>
    %48 = math.exp %47 : vector<8x128xf32>
    %cst_25 = arith.constant dense<0.000000e+00> : vector<8xf32>
    %49 = vector.multi_reduction <add>, %48, %cst_25 [1] : vector<8x128xf32> to vector<8xf32>
    %50 = vector.shape_cast %49 : vector<8xf32> to vector<8x1xf32>
    %51 = math.log %50 : vector<8x1xf32>
    %52 = vector.broadcast %51 : vector<8x1xf32> to vector<8x128xf32>
    %53 = arith.subf %47, %52 : vector<8x128xf32>
    %c0_26 = arith.constant 0 : index
    %c0_27 = arith.constant 0 : index
    %54 = vector.load %arg8[%c0_26, %c0_27] : memref<8x128xf32, #tpu.memory_space<vmem>>, vector<8x128xf32>
    tpu.vector_store %arg8[%c0_26, %c0_27], %53 {strides = array<i32>} : memref<8x128xf32, #tpu.memory_space<vmem>>, vector<8x128xf32>,
    return
  }
  func.func @transform_0(%arg0: i32) -> (i32, i32) {
    %c0_i32 = arith.constant 0 : i32
    %c0_i32_0 = arith.constant 0 : i32
    return %arg0, %c0_i32 : i32, i32
  }
  func.func @transform_1(%arg0: i32) -> (i32, i32) {
    %c0_i32 = arith.constant 0 : i32
    %c0_i32_0 = arith.constant 0 : i32
    %c0_i32_1 = arith.constant 0 : i32
    return %c0_i32, %c0_i32_0 : i32, i32
  }
  func.func @transform_2(%arg0: i32) -> (i32, i32) {
    %c0_i32 = arith.constant 0 : i32
    %c0_i32_0 = arith.constant 0 : i32
    %c0_i32_1 = arith.constant 0 : i32
    return %c0_i32, %c0_i32_0 : i32, i32
  }
  func.func @transform_3(%arg0: i32) -> (i32, i32) {
    %c0_i32 = arith.constant 0 : i32
    %c0_i32_0 = arith.constant 0 : i32
    %c0_i32_1 = arith.constant 0 : i32
    return %c0_i32, %c0_i32_0 : i32, i32
  }
  func.func @transform_4(%arg0: i32) -> (i32, i32) {
    %c0_i32 = arith.constant 0 : i32
    %c0_i32_0 = arith.constant 0 : i32
    %c0_i32_1 = arith.constant 0 : i32
    return %c0_i32, %c0_i32_0 : i32, i32
  }
  func.func @transform_5(%arg0: i32) -> (i32, i32) {
    %c0_i32 = arith.constant 0 : i32
    %c0_i32_0 = arith.constant 0 : i32
    %c0_i32_1 = arith.constant 0 : i32
    return %c0_i32, %c0_i32_0 : i32, i32
  }
  func.func @transform_6(%arg0: i32) -> (i32, i32) {
    %c0_i32 = arith.constant 0 : i32
    %c0_i32_0 = arith.constant 0 : i32
    %c0_i32_1 = arith.constant 0 : i32
    return %c0_i32, %c0_i32_0 : i32, i32
  }
  func.func @transform_7(%arg0: i32) -> (i32, i32) {
    %c0_i32 = arith.constant 0 : i32
    %c0_i32_0 = arith.constant 0 : i32
    return %arg0, %c0_i32 : i32, i32
  }
}

</mosaic_0001>

<llo_original>
// kernel: tpu_custom_call.1
$region0: #{tpu_custom_call.1}
  #allocation0 [shape = 'u32[]', space=smem, size = 0x4, offset = 0x4, fixed_abs, tag = 'smem constant byte address 0x4 - core index']
  #allocation1 [shape = 'u32[144,128]{1,0:T(1,128)}', space=vmem, size = 0x12000, scoped, tag = 'internal scratch']
  %s0 = inlined_call_operand.hbm [shape: f32[2048,384], index: 0, kind: input, shape index: {}]
  %s1 = inlined_call_operand.hbm [shape: bf16[384,256], index: 1, kind: input, shape index: {}]
  %s2 = inlined_call_operand.hbm [shape: f32[1,256], index: 2, kind: input, shape index: {}]
  %s3 = inlined_call_operand.hbm [shape: bf16[256,128], index: 3, kind: input, shape index: {}]
  %s4 = inlined_call_operand.hbm [shape: f32[1,128], index: 4, kind: input, shape index: {}]
  %s5 = inlined_call_operand.hbm [shape: bf16[128,128], index: 5, kind: input, shape index: {}]
  %s6 = inlined_call_operand.hbm [shape: f32[1,128], index: 6, kind: input, shape index: {}]
  %s7 = inlined_call_operand.hbm [shape: f32[16,128], index: 7, kind: output, shape index: {}]
  %s8 = sld [smem:[#allocation0]]
  $region89: #{tpu_custom_call.1} parent=0
    _
  %s10 = ssub.s32 1, %s8
  %s11 = scalar_select 0, %s10, %s8
  $region1: #{tpu_custom_call.1} parent=0
    #allocation2 [shape = 'u8[3145728]{0}', space=vmem, size = 0x300000, scoped, tag = 'input window, operand 0']
    #allocation3 [shape = 's32[2]{0}', space=sflag, size = 0x8, scoped, tag = 'scoped memory for tpu_custom_call.1']
    #allocation4 [shape = 's32[2]{0}', space=sflag, size = 0x8, scoped, tag = 'scoped memory for tpu_custom_call.1']
    #allocation5 [shape = 'u8[196608]{0}', space=vmem, size = 0x30000, scoped, tag = 'input window, operand 1, single buffered']
    #allocation6 [shape = 's32[1]{0}', space=sflag, size = 0x4, scoped, tag = 'scoped memory for tpu_custom_call.1']
    #allocation7 [shape = 'u8[1024]{0}', space=vmem, size = 0x400, scoped, tag = 'input window, operand 2, single buffered']
    #allocation8 [shape = 'u8[65536]{0}', space=vmem, size = 0x10000, scoped, tag = 'input window, operand 3, single buffered']
    #allocation9 [shape = 's32[1]{0}', space=sflag, size = 0x4, scoped, tag = 'scoped memory for tpu_custom_call.1']
    #allocation10 [shape = 'u8[512]{0}', space=vmem, size = 0x400, scoped, tag = 'input window, operand 4, single buffered']
    #allocation11 [shape = 'u8[32768]{0}', space=vmem, size = 0x8000, scoped, tag = 'input window, operand 5, single buffered']
    #allocation12 [shape = 's32[1]{0}', space=sflag, size = 0x4, scoped, tag = 'scoped memory for tpu_custom_call.1']
    #allocation13 [shape = 'u8[512]{0}', space=vmem, size = 0x400, scoped, tag = 'input window, operand 6, single buffered']
    #allocation14 [shape = 'u8[8192]{0}', space=vmem, size = 0x2000, scoped, tag = 'output window, operand 0']
    %12 = vsyncpa [#allocation3], 0
    %s13 = scalar_lea.sflag [#allocation3], 1
    %14 = vsyncpa %s13, 0
    %15 = vsyncpa [#allocation6], 0
    %16 = vsyncpa [#allocation9], 0
    %17 = vsyncpa [#allocation12], 0
    %18 = vsyncpa [#allocation4], 0
    %s19 = scalar_lea.sflag [#allocation4], 1
    %20 = vsyncpa %s19, 0
    loop: start=0, step=1, limit=4
    $region2: #{tpu_custom_call.1} parent=1 // loop_pre_header
      _
    $region3: #{tpu_custom_call.1} parent=1 // loop_header
      %s22 = sphi 0, %s26
      %p23 = scmp.ge.s32.totalorder %s22, 4
      %s32 = sphi 0, %s34
      %s35 = sphi 0, %s32
      %s36 = sphi 0, %s35
      %s52 = sphi 0, %s36
      %s56 = sphi 0, %s56
      %s58 = sphi 0, %s56
      %s59 = sphi 0, %s58
      %s73 = sphi 0, %s59
      %s77 = sphi 0, %s77
      %s79 = sphi 0, %s77
      %s80 = sphi 0, %s79
      %s94 = sphi 0, %s80
      %s98 = sphi 0, %s98
      %s100 = sphi 0, %s98
      %s101 = sphi 0, %s100
      %s115 = sphi 0, %s101
      %s119 = sphi 0, %s119
      %s121 = sphi 0, %s119
      %s122 = sphi 0, %s121
      %s136 = sphi 0, %s122
      %s140 = sphi 0, %s140
      %s142 = sphi 0, %s140
      %s143 = sphi 0, %s142
      %s157 = sphi 0, %s143
      %s161 = sphi 0, %s161
      %s163 = sphi 0, %s161
      %s164 = sphi 0, %s163
      %s178 = sphi 0, %s164
      %s184 = sphi 0, %s186
      %s187 = sphi 0, %s184
      %s188 = sphi 0, %s187
      %s204 = sphi 0, %s188
    $region4: #{tpu_custom_call.1} parent=1 // loop_header_branch
      %25 = sbr.rel (%p23) target = $region8
    $region5: #{tpu_custom_call.1} parent=1 // loop_body
      %s27 = ssub.s32 %s22, 1
      %s28 = ssub.s32 %s22, 2
      %s29 = sadd.s32 %s22, 1
      %s30 = ssub.s32 %s22, %s29
      %p31 = scmp.eq.s32.totalorder %s30, 0
      %s33 = sadd.s32 %s32, 1
      %s34 = scalar_select %p31, %s32, %s33
      %p37 = pneg %p31
      %p38 = scmp.eq.s32.totalorder %s22, 1
      %p39 = por %p37, %p38
      %p40 = scmp.ne.s32.totalorder %s32, %s35
      %p41 = scmp.eq.s32.totalorder %s22, 0
      %p42 = por %p40, %p41
      %p43 = scmp.ne.s32.totalorder %s32, %s35
      %p44 = scmp.eq.s32.totalorder %s27, 1
      %p45 = por %p43, %p44
      %p46 = scmp.ne.s32.totalorder %s35, %s36
      %p47 = scmp.eq.s32.totalorder %s27, 0
      %p48 = por %p46, %p47
      %p49 = scmp.ne.s32.totalorder %s35, %s36
      %p50 = scmp.eq.s32.totalorder %s28, 1
      %p51 = por %p49, %p50
      %p53 = scmp.ne.s32.totalorder %s36, %s52
      %p54 = scmp.eq.s32.totalorder %s28, 0
      %p55 = por %p53, %p54
      %s57 = sadd.s32 %s56, 1
      %p60 = scmp.eq.s32.totalorder %s22, 1
      %p61 = scmp.ne.s32.totalorder %s56, %s58
      %p62 = scmp.eq.s32.totalorder %s22, 0
      %p63 = por %p61, %p62
      %p64 = scmp.ne.s32.totalorder %s56, %s58
      %p65 = scmp.eq.s32.totalorder %s27, 1
      %p66 = por %p64, %p65
      %p67 = scmp.ne.s32.totalorder %s58, %s59
      %p68 = scmp.eq.s32.totalorder %s27, 0
      %p69 = por %p67, %p68
      %p70 = scmp.ne.s32.totalorder %s58, %s59
      %p71 = scmp.eq.s32.totalorder %s28, 1
      %p72 = por %p70, %p71
      %p74 = scmp.ne.s32.totalorder %s59, %s73
      %p75 = scmp.eq.s32.totalorder %s28, 0
      %p76 = por %p74, %p75
      %s78 = sadd.s32 %s77, 1
      %p81 = scmp.eq.s32.totalorder %s22, 1
      %p82 = scmp.ne.s32.totalorder %s77, %s79
      %p83 = scmp.eq.s32.totalorder %s22, 0
      %p84 = por %p82, %p83
      %p85 = scmp.ne.s32.totalorder %s77, %s79
      %p86 = scmp.eq.s32.totalorder %s27, 1
      %p87 = por %p85, %p86
      %p88 = scmp.ne.s32.totalorder %s79, %s80
      %p89 = scmp.eq.s32.totalorder %s27, 0
      %p90 = por %p88, %p89
      %p91 = scmp.ne.s32.totalorder %s79, %s80
      %p92 = scmp.eq.s32.totalorder %s28, 1
      %p93 = por %p91, %p92
      %p95 = scmp.ne.s32.totalorder %s80, %s94
      %p96 = scmp.eq.s32.totalorder %s28, 0
      %p97 = por %p95, %p96
      %s99 = sadd.s32 %s98, 1
      %p102 = scmp.eq.s32.totalorder %s22, 1
      %p103 = scmp.ne.s32.totalorder %s98, %s100
      %p104 = scmp.eq.s32.totalorder %s22, 0
      %p105 = por %p103, %p104
      %p106 = scmp.ne.s32.totalorder %s98, %s100
      %p107 = scmp.eq.s32.totalorder %s27, 1
      %p108 = por %p106, %p107
      %p109 = scmp.ne.s32.totalorder %s100, %s101
      %p110 = scmp.eq.s32.totalorder %s27, 0
      %p111 = por %p109, %p110
      %p112 = scmp.ne.s32.totalorder %s100, %s101
      %p113 = scmp.eq.s32.totalorder %s28, 1
      %p114 = por %p112, %p113
      %p116 = scmp.ne.s32.totalorder %s101, %s115
      %p117 = scmp.eq.s32.totalorder %s28, 0
      %p118 = por %p116, %p117
      %s120 = sadd.s32 %s119, 1
      %p123 = scmp.eq.s32.totalorder %s22, 1
      %p124 = scmp.ne.s32.totalorder %s119, %s121
      %p125 = scmp.eq.s32.totalorder %s22, 0
      %p126 = por %p124, %p125
      %p127 = scmp.ne.s32.totalorder %s119, %s121
      %p128 = scmp.eq.s32.totalorder %s27, 1
      %p129 = por %p127, %p128
      %p130 = scmp.ne.s32.totalorder %s121, %s122
      %p131 = scmp.eq.s32.totalorder %s27, 0
      %p132 = por %p130, %p131
      %p133 = scmp.ne.s32.totalorder %s121, %s122
      %p134 = scmp.eq.s32.totalorder %s28, 1
      %p135 = por %p133, %p134
      %p137 = scmp.ne.s32.totalorder %s122, %s136
      %p138 = scmp.eq.s32.totalorder %s28, 0
      %p139 = por %p137, %p138
      %s141 = sadd.s32 %s140, 1
      %p144 = scmp.eq.s32.totalorder %s22, 1
      %p145 = scmp.ne.s32.totalorder %s140, %s142
      %p146 = scmp.eq.s32.totalorder %s22, 0
      %p147 = por %p145, %p146
      %p148 = scmp.ne.s32.totalorder %s140, %s142
      %p149 = scmp.eq.s32.totalorder %s27, 1
      %p150 = por %p148, %p149
      %p151 = scmp.ne.s32.totalorder %s142, %s143
      %p152 = scmp.eq.s32.totalorder %s27, 0
      %p153 = por %p151, %p152
      %p154 = scmp.ne.s32.totalorder %s142, %s143
      %p155 = scmp.eq.s32.totalorder %s28, 1
      %p156 = por %p154, %p155
      %p158 = scmp.ne.s32.totalorder %s143, %s157
      %p159 = scmp.eq.s32.totalorder %s28, 0
      %p160 = por %p158, %p159
      %s162 = sadd.s32 %s161, 1
      %p165 = scmp.eq.s32.totalorder %s22, 1
      %p166 = scmp.ne.s32.totalorder %s161, %s163
      %p167 = scmp.eq.s32.totalorder %s22, 0
      %p168 = por %p166, %p167
      %p169 = scmp.ne.s32.totalorder %s161, %s163
      %p170 = scmp.eq.s32.totalorder %s27, 1
      %p171 = por %p169, %p170
      %p172 = scmp.ne.s32.totalorder %s163, %s164
      %p173 = scmp.eq.s32.totalorder %s27, 0
      %p174 = por %p172, %p173
      %p175 = scmp.ne.s32.totalorder %s163, %s164
      %p176 = scmp.eq.s32.totalorder %s28, 1
      %p177 = por %p175, %p176
      %p179 = scmp.ne.s32.totalorder %s164, %s178
      %p180 = scmp.eq.s32.totalorder %s28, 0
      %p181 = por %p179, %p180
      %s182 = ssub.s32 %s22, %s29
      %p183 = scmp.eq.s32.totalorder %s182, 0
      %s185 = sadd.s32 %s184, 1
      %s186 = scalar_select %p183, %s184, %s185
      %p189 = pneg %p183
      %p190 = scmp.eq.s32.totalorder %s22, 1
      %p191 = por %p189, %p190
      %p192 = scmp.ne.s32.totalorder %s184, %s187
      %p193 = scmp.eq.s32.totalorder %s22, 0
      %p194 = por %p192, %p193
      %p195 = scmp.ne.s32.totalorder %s184, %s187
      %p196 = scmp.eq.s32.totalorder %s27, 1
      %p197 = por %p195, %p196
      %p198 = scmp.ne.s32.totalorder %s187, %s188
      %p199 = scmp.eq.s32.totalorder %s27, 0
      %p200 = por %p198, %p199
      %p201 = scmp.ne.s32.totalorder %s187, %s188
      %p202 = scmp.eq.s32.totalorder %s28, 1
      %p203 = por %p201, %p202
      %p205 = scmp.ne.s32.totalorder %s188, %s204
      %p206 = scmp.eq.s32.totalorder %s28, 0
      %p207 = por %p205, %p206
      %p208 = scmp.le.s32.totalorder 1, %s22
      %p209 = scmp.lt.s32.totalorder %s22, 3
      %p210 = pnand %p208, %p209
      %p211 = pneg %p210
      // Predicated region
      $region9: #{tpu_custom_call.1} parent=5 // pred_check
        _
      $region10: #{tpu_custom_call.1} parent=5 // pred_check_branch
        %213 = sbr.rel (%p210) target = $region12
      $region11: #{tpu_custom_call.1} parent=5 // pred_region
        %s214 = ssub.s32 %s22, 1
        // Predicated region
        $region13: #{tpu_custom_call.1} parent=11 // pred_check
          %p215 = pneg %p69
        $region14: #{tpu_custom_call.1} parent=11 // pred_check_branch
          %217 = sbr.rel (%p215) target = $region16
        $region15: #{tpu_custom_call.1} parent=11 // pred_region
          %s219 = ssub.s32 6144, 6144
          %220 = vsyncadd [#allocation6], %s219
          %s221 = sshll.u32 [#allocation5], 4
          %s222 = int_to_ptr.vmem [resolvable:$true] %s221
          %227 = dma.hbm_to_vmem [thread:$0]  %s1, 6144, %s222, [#allocation6], 128, 128, 8
        $region16: #{tpu_custom_call.1} parent=11 // pred_fallthru
          _
        // Predicated region
        $region17: #{tpu_custom_call.1} parent=11 // pred_check
          %p228 = pneg %p90
        $region18: #{tpu_custom_call.1} parent=11 // pred_check_branch
          %230 = sbr.rel (%p228) target = $region20
        $region19: #{tpu_custom_call.1} parent=11 // pred_region
          %s232 = ssub.s32 32, 32
          %233 = vsyncadd [#allocation6], %s232
          %s235 = sshll.u32 [#allocation7], 4
          %s236 = int_to_ptr.vmem [resolvable:$true] %s235
          %238 = dma.hbm_to_vmem [thread:$0]  %s2, 32, %s236, [#allocation6]
        $region20: #{tpu_custom_call.1} parent=11 // pred_fallthru
          _
        // Predicated region
        $region21: #{tpu_custom_call.1} parent=11 // pred_check
          %p239 = pneg %p111
        $region22: #{tpu_custom_call.1} parent=11 // pred_check_branch
          %241 = sbr.rel (%p239) target = $region24
        $region23: #{tpu_custom_call.1} parent=11 // pred_region
          %s243 = ssub.s32 2048, 2048
          %244 = vsyncadd [#allocation9], %s243
          %s245 = sshll.u32 [#allocation8], 4
          %s246 = int_to_ptr.vmem [resolvable:$true] %s245
          %251 = dma.hbm_to_vmem [thread:$0]  %s3, 2048, %s246, [#allocation9], 64, 64, 4
        $region24: #{tpu_custom_call.1} parent=11 // pred_fallthru
          _
        // Predicated region
        $region25: #{tpu_custom_call.1} parent=11 // pred_check
          %p252 = pneg %p132
        $region26: #{tpu_custom_call.1} parent=11 // pred_check_branch
          %254 = sbr.rel (%p252) target = $region28
        $region27: #{tpu_custom_call.1} parent=11 // pred_region
          %s256 = ssub.s32 16, 16
          %257 = vsyncadd [#allocation9], %s256
          %s259 = sshll.u32 [#allocation10], 4
          %s260 = int_to_ptr.vmem [resolvable:$true] %s259
          %262 = dma.hbm_to_vmem [thread:$0]  %s4, 16, %s260, [#allocation9]
        $region28: #{tpu_custom_call.1} parent=11 // pred_fallthru
          _
        // Predicated region
        $region29: #{tpu_custom_call.1} parent=11 // pred_check
          %p263 = pneg %p153
        $region30: #{tpu_custom_call.1} parent=11 // pred_check_branch
          %265 = sbr.rel (%p263) target = $region32
        $region31: #{tpu_custom_call.1} parent=11 // pred_region
          %s267 = ssub.s32 1024, 1024
          %268 = vsyncadd [#allocation12], %s267
          %s269 = sshll.u32 [#allocation11], 4
          %s270 = int_to_ptr.vmem [resolvable:$true] %s269
          %275 = dma.hbm_to_vmem [thread:$0]  %s5, 1024, %s270, [#allocation12], 64, 64, 4
        $region32: #{tpu_custom_call.1} parent=11 // pred_fallthru
          _
        // Predicated region
        $region33: #{tpu_custom_call.1} parent=11 // pred_check
          %p276 = pneg %p174
        $region34: #{tpu_custom_call.1} parent=11 // pred_check_branch
          %278 = sbr.rel (%p276) target = $region36
        $region35: #{tpu_custom_call.1} parent=11 // pred_region
          %s280 = ssub.s32 16, 16
          %281 = vsyncadd [#allocation12], %s280
          %s283 = sshll.u32 [#allocation13], 4
          %s284 = int_to_ptr.vmem [resolvable:$true] %s283
          %286 = dma.hbm_to_vmem [thread:$0]  %s6, 16, %s284, [#allocation12]
        $region36: #{tpu_custom_call.1} parent=11 // pred_fallthru
          _
      $region12: #{tpu_custom_call.1} parent=5 // pred_fallthru
        _
      %p287 = scmp.lt.s32.totalorder %s22, 2
      // Predicated region
      $region37: #{tpu_custom_call.1} parent=5 // pred_check
        %p288 = pneg %p287
      $region38: #{tpu_custom_call.1} parent=5 // pred_check_branch
        %290 = sbr.rel (%p288) target = $region40
      $region39: #{tpu_custom_call.1} parent=5 // pred_region
        // Predicated region
        $region41: #{tpu_custom_call.1} parent=39 // pred_check
          %p291 = pneg %p42
        $region42: #{tpu_custom_call.1} parent=39 // pred_check_branch
          %293 = sbr.rel (%p291) target = $region44
        $region43: #{tpu_custom_call.1} parent=39 // pred_region
          %s294 = sand.u32 %s32, 1
          %s295 = scalar_lea.sflag [#allocation3], %s294
          %s296 = sand.u32 %s32, 1
          %s297 = smul.addr %s296, 3072
          %s298 = scalar_lea.vmem [#allocation2], %s297
          %s299 = smul.u32 128, %s22
          %s301 = ssub.s32 49152, 49152
          %302 = vsyncadd %s295, %s301
          %s303 = smul.addr %s299, 3
          %s304 = smul.addr %s303, 128
          %s305 = scalar_lea.hbm %s0, %s304
          %s306 = sshll.u32 %s298, 4
          %s307 = int_to_ptr.vmem [resolvable:$true] %s306
          %312 = dma.hbm_to_vmem [thread:$0]  %s305, 49152, %s307, %s295, 384, 384, 24
        $region44: #{tpu_custom_call.1} parent=39 // pred_fallthru
          _
      $region40: #{tpu_custom_call.1} parent=5 // pred_fallthru
        _
      %p313 = scmp.le.s32.totalorder 1, %s22
      %p314 = scmp.lt.s32.totalorder %s22, 3
      %p315 = pnand %p313, %p314
      %p316 = pneg %p315
      // Predicated region
      $region45: #{tpu_custom_call.1} parent=5 // pred_check
        _
      $region46: #{tpu_custom_call.1} parent=5 // pred_check_branch
        %318 = sbr.rel (%p315) target = $region48
      $region47: #{tpu_custom_call.1} parent=5 // pred_region
        %s319 = ssub.s32 %s22, 1
        %s320 = sand.u32 %s35, 1
        %s321 = scalar_lea.sflag [#allocation3], %s320
        %s322 = sand.u32 %s35, 1
        %s323 = smul.addr %s322, 3072
        %s324 = scalar_lea.vmem [#allocation2], %s323
        // Predicated region
        $region49: #{tpu_custom_call.1} parent=47 // pred_check
          %p325 = pneg %p48
        $region50: #{tpu_custom_call.1} parent=47 // pred_check_branch
          %327 = sbr.rel (%p325) target = $region52
        $region51: #{tpu_custom_call.1} parent=47 // pred_region
          %328 = dma.done %s321, 49152
        $region52: #{tpu_custom_call.1} parent=47 // pred_fallthru
          _
        // Predicated region
        $region53: #{tpu_custom_call.1} parent=47 // pred_check
          %p329 = pneg %p69
        $region54: #{tpu_custom_call.1} parent=47 // pred_check_branch
          %331 = sbr.rel (%p329) target = $region56
        $region55: #{tpu_custom_call.1} parent=47 // pred_region
          %332 = dma.done [#allocation6], 6144
        $region56: #{tpu_custom_call.1} parent=47 // pred_fallthru
          _
        // Predicated region
        $region57: #{tpu_custom_call.1} parent=47 // pred_check
          %p333 = pneg %p90
        $region58: #{tpu_custom_call.1} parent=47 // pred_check_branch
          %335 = sbr.rel (%p333) target = $region60
        $region59: #{tpu_custom_call.1} parent=47 // pred_region
          %336 = dma.done [#allocation6], 32
        $region60: #{tpu_custom_call.1} parent=47 // pred_fallthru
          _
        // Predicated region
        $region61: #{tpu_custom_call.1} parent=47 // pred_check
          %p337 = pneg %p111
        $region62: #{tpu_custom_call.1} parent=47 // pred_check_branch
          %339 = sbr.rel (%p337) target = $region64
        $region63: #{tpu_custom_call.1} parent=47 // pred_region
          %340 = dma.done [#allocation9], 2048
        $region64: #{tpu_custom_call.1} parent=47 // pred_fallthru
          _
        // Predicated region
        $region65: #{tpu_custom_call.1} parent=47 // pred_check
          %p341 = pneg %p132
        $region66: #{tpu_custom_call.1} parent=47 // pred_check_branch
          %343 = sbr.rel (%p341) target = $region68
        $region67: #{tpu_custom_call.1} parent=47 // pred_region
          %344 = dma.done [#allocation9], 16
        $region68: #{tpu_custom_call.1} parent=47 // pred_fallthru
          _
        // Predicated region
        $region69: #{tpu_custom_call.1} parent=47 // pred_check
          %p345 = pneg %p153
        $region70: #{tpu_custom_call.1} parent=47 // pred_check_branch
          %347 = sbr.rel (%p345) target = $region72
        $region71: #{tpu_custom_call.1} parent=47 // pred_region
          %348 = dma.done [#allocation12], 1024
        $region72: #{tpu_custom_call.1} parent=47 // pred_fallthru
          _
        // Predicated region
        $region73: #{tpu_custom_call.1} parent=47 // pred_check
          %p349 = pneg %p174
        $region74: #{tpu_custom_call.1} parent=47 // pred_check_branch
          %351 = sbr.rel (%p349) target = $region76
        $region75: #{tpu_custom_call.1} parent=47 // pred_region
          %352 = dma.done [#allocation12], 16
        $region76: #{tpu_custom_call.1} parent=47 // pred_fallthru
          _
        %s353 = sand.u32 %s35, 1
        %s354 = scalar_lea.sflag [#allocation3], %s353
        %s355 = sand.u32 %s35, 1
        %s356 = smul.addr %s355, 3072
        %s357 = scalar_lea.vmem [#allocation2], %s356
        %p358 = pneg %p48
        %p359 = pneg %p45
        %p360 = pneg %p69
        %p361 = pneg %p66
        %p362 = pneg %p90
        %p363 = pneg %p87
        %p364 = pneg %p111
        %p365 = pneg %p108
        %p366 = pneg %p132
        %p367 = pneg %p129
        %p368 = pneg %p153
        %p369 = pneg %p150
        %p370 = pneg %p174
        %p371 = pneg %p171
        %p372 = pneg %p200
        %p373 = pneg %p197
        %s374 = sand.u32 %s187, 1
        %s375 = scalar_lea.sflag [#allocation4], %s374
        %s376 = sand.u32 %s187, 1
        %s377 = smul.addr %s376, 8
        %s378 = scalar_lea.vmem [#allocation14], %s377
        %s379 = smul.u32 128, %s27
        %v381 = vld [vmem:[%s324] sm:$0xff]
        %v382 = vld [vmem:[%s324 + $0x8] sm:$0xff]
        %v383 = vld [vmem:[%s324 + $0x10] sm:$0xff]
        %v384 = vld [vmem:[%s324 + $0x18] sm:$0xff]
        %v385 = vld [vmem:[%s324 + $0x20] sm:$0xff]
        %v386 = vld [vmem:[%s324 + $0x28] sm:$0xff]
        %v387 = vld [vmem:[%s324 + $0x30] sm:$0xff]
        %v388 = vld [vmem:[%s324 + $0x38] sm:$0xff]
        %v389 = vld [vmem:[%s324 + $0x40] sm:$0xff]
        %v390 = vld [vmem:[%s324 + $0x48] sm:$0xff]
        %v391 = vld [vmem:[%s324 + $0x50] sm:$0xff]
        %v392 = vld [vmem:[%s324 + $0x58] sm:$0xff]
        %v393 = vld [vmem:[%s324 + $0x60] sm:$0xff]
        %v394 = vld [vmem:[%s324 + $0x68] sm:$0xff]
        %v395 = vld [vmem:[%s324 + $0x70] sm:$0xff]
        %v396 = vld [vmem:[%s324 + $0x78] sm:$0xff]
        %v397 = vld [vmem:[%s324 + $0x80] sm:$0xff]
        %v398 = vld [vmem:[%s324 + $0x88] sm:$0xff]
        %v399 = vld [vmem:[%s324 + $0x90] sm:$0xff]
        %v400 = vld [vmem:[%s324 + $0x98] sm:$0xff]
        %v401 = vld [vmem:[%s324 + $0xa0] sm:$0xff]
        %v402 = vld [vmem:[%s324 + $0xa8] sm:$0xff]
        %v403 = vld [vmem:[%s324 + $0xb0] sm:$0xff]
        %v404 = vld [vmem:[%s324 + $0xb8] sm:$0xff]
        %v405 = vld [vmem:[%s324 + $0xc0] sm:$0xff]
        %v406 = vld [vmem:[%s324 + $0xc8] sm:$0xff]
        %v407 = vld [vmem:[%s324 + $0xd0] sm:$0xff]
        %v408 = vld [vmem:[%s324 + $0xd8] sm:$0xff]
        %v409 = vld [vmem:[%s324 + $0xe0] sm:$0xff]
        %v410 = vld [vmem:[%s324 + $0xe8] sm:$0xff]
        %v411 = vld [vmem:[%s324 + $0xf0] sm:$0xff]
        %v412 = vld [vmem:[%s324 + $0xf8] sm:$0xff]
        %v413 = vld [vmem:[%s324 + $0x100] sm:$0xff]
        %v414 = vld [vmem:[%s324 + $0x108] sm:$0xff]
        %v415 = vld [vmem:[%s324 + $0x110] sm:$0xff]
        %v416 = vld [vmem:[%s324 + $0x118] sm:$0xff]
        %v417 = vld [vmem:[%s324 + $0x120] sm:$0xff]
        %v418 = vld [vmem:[%s324 + $0x128] sm:$0xff]
        %v419 = vld [vmem:[%s324 + $0x130] sm:$0xff]
        %v420 = vld [vmem:[%s324 + $0x138] sm:$0xff]
        %v421 = vld [vmem:[%s324 + $0x140] sm:$0xff]
        %v422 = vld [vmem:[%s324 + $0x148] sm:$0xff]
        %v423 = vld [vmem:[%s324 + $0x150] sm:$0xff]
        %v424 = vld [vmem:[%s324 + $0x158] sm:$0xff]
        %v425 = vld [vmem:[%s324 + $0x160] sm:$0xff]
        %v426 = vld [vmem:[%s324 + $0x168] sm:$0xff]
        %v427 = vld [vmem:[%s324 + $0x170] sm:$0xff]
        %v428 = vld [vmem:[%s324 + $0x178] sm:$0xff]
        %v429 = vld [vmem:[%s324 + $0x180] sm:$0xff]
        %v430 = vld [vmem:[%s324 + $0x188] sm:$0xff]
        %v431 = vld [vmem:[%s324 + $0x190] sm:$0xff]
        %v432 = vld [vmem:[%s324 + $0x198] sm:$0xff]
        %v433 = vld [vmem:[%s324 + $0x1a0] sm:$0xff]
        %v434 = vld [vmem:[%s324 + $0x1a8] sm:$0xff]
        %v435 = vld [vmem:[%s324 + $0x1b0] sm:$0xff]
        %v436 = vld [vmem:[%s324 + $0x1b8] sm:$0xff]
        %v437 = vld [vmem:[%s324 + $0x1c0] sm:$0xff]
        %v438 = vld [vmem:[%s324 + $0x1c8] sm:$0xff]
        %v439 = vld [vmem:[%s324 + $0x1d0] sm:$0xff]
        %v440 = vld [vmem:[%s324 + $0x1d8] sm:$0xff]
        %v441 = vld [vmem:[%s324 + $0x1e0] sm:$0xff]
        %v442 = vld [vmem:[%s324 + $0x1e8] sm:$0xff]
        %v443 = vld [vmem:[%s324 + $0x1f0] sm:$0xff]
        %v444 = vld [vmem:[%s324 + $0x1f8] sm:$0xff]
        %v445 = vld [vmem:[%s324 + $0x200] sm:$0xff]
        %v446 = vld [vmem:[%s324 + $0x208] sm:$0xff]
        %v447 = vld [vmem:[%s324 + $0x210] sm:$0xff]
        %v448 = vld [vmem:[%s324 + $0x218] sm:$0xff]
        %v449 = vld [vmem:[%s324 + $0x220] sm:$0xff]
        %v450 = vld [vmem:[%s324 + $0x228] sm:$0xff]
        %v451 = vld [vmem:[%s324 + $0x230] sm:$0xff]
        %v452 = vld [vmem:[%s324 + $0x238] sm:$0xff]
        %v453 = vld [vmem:[%s324 + $0x240] sm:$0xff]
        %v454 = vld [vmem:[%s324 + $0x248] sm:$0xff]
        %v455 = vld [vmem:[%s324 + $0x250] sm:$0xff]
        %v456 = vld [vmem:[%s324 + $0x258] sm:$0xff]
        %v457 = vld [vmem:[%s324 + $0x260] sm:$0xff]
        %v458 = vld [vmem:[%s324 + $0x268] sm:$0xff]
        %v459 = vld [vmem:[%s324 + $0x270] sm:$0xff]
        %v460 = vld [vmem:[%s324 + $0x278] sm:$0xff]
        %v461 = vld [vmem:[%s324 + $0x280] sm:$0xff]
        %v462 = vld [vmem:[%s324 + $0x288] sm:$0xff]
        %v463 = vld [vmem:[%s324 + $0x290] sm:$0xff]
        %v464 = vld [vmem:[%s324 + $0x298] sm:$0xff]
        %v465 = vld [vmem:[%s324 + $0x2a0] sm:$0xff]
        %v466 = vld [vmem:[%s324 + $0x2a8] sm:$0xff]
        %v467 = vld [vmem:[%s324 + $0x2b0] sm:$0xff]
        %v468 = vld [vmem:[%s324 + $0x2b8] sm:$0xff]
        %v469 = vld [vmem:[%s324 + $0x2c0] sm:$0xff]
        %v470 = vld [vmem:[%s324 + $0x2c8] sm:$0xff]
        %v471 = vld [vmem:[%s324 + $0x2d0] sm:$0xff]
        %v472 = vld [vmem:[%s324 + $0x2d8] sm:$0xff]
        %v473 = vld [vmem:[%s324 + $0x2e0] sm:$0xff]
        %v474 = vld [vmem:[%s324 + $0x2e8] sm:$0xff]
        %v475 = vld [vmem:[%s324 + $0x2f0] sm:$0xff]
        %v476 = vld [vmem:[%s324 + $0x2f8] sm:$0xff]
        %v477 = vld [vmem:[%s324 + $0x300] sm:$0xff]
        %v478 = vld [vmem:[%s324 + $0x308] sm:$0xff]
        %v479 = vld [vmem:[%s324 + $0x310] sm:$0xff]
        %v480 = vld [vmem:[%s324 + $0x318] sm:$0xff]
        %v481 = vld [vmem:[%s324 + $0x320] sm:$0xff]
        %v482 = vld [vmem:[%s324 + $0x328] sm:$0xff]
        %v483 = vld [vmem:[%s324 + $0x330] sm:$0xff]
        %v484 = vld [vmem:[%s324 + $0x338] sm:$0xff]
        %v485 = vld [vmem:[%s324 + $0x340] sm:$0xff]
        %v486 = vld [vmem:[%s324 + $0x348] sm:$0xff]
        %v487 = vld [vmem:[%s324 + $0x350] sm:$0xff]
        %v488 = vld [vmem:[%s324 + $0x358] sm:$0xff]
        %v489 = vld [vmem:[%s324 + $0x360] sm:$0xff]
        %v490 = vld [vmem:[%s324 + $0x368] sm:$0xff]
        %v491 = vld [vmem:[%s324 + $0x370] sm:$0xff]
        %v492 = vld [vmem:[%s324 + $0x378] sm:$0xff]
        %v493 = vld [vmem:[%s324 + $0x380] sm:$0xff]
        %v494 = vld [vmem:[%s324 + $0x388] sm:$0xff]
        %v495 = vld [vmem:[%s324 + $0x390] sm:$0xff]
        %v496 = vld [vmem:[%s324 + $0x398] sm:$0xff]
        %v497 = vld [vmem:[%s324 + $0x3a0] sm:$0xff]
        %v498 = vld [vmem:[%s324 + $0x3a8] sm:$0xff]
        %v499 = vld [vmem:[%s324 + $0x3b0] sm:$0xff]
        %v500 = vld [vmem:[%s324 + $0x3b8] sm:$0xff]
        %v501 = vld [vmem:[%s324 + $0x3c0] sm:$0xff]
        %v502 = vld [vmem:[%s324 + $0x3c8] sm:$0xff]
        %v503 = vld [vmem:[%s324 + $0x3d0] sm:$0xff]
        %v504 = vld [vmem:[%s324 + $0x3d8] sm:$0xff]
        %v505 = vld [vmem:[%s324 + $0x3e0] sm:$0xff]
        %v506 = vld [vmem:[%s324 + $0x3e8] sm:$0xff]
        %v507 = vld [vmem:[%s324 + $0x3f0] sm:$0xff]
        %v508 = vld [vmem:[%s324 + $0x3f8] sm:$0xff]
        %v509 = vld [vmem:[%s324 + $0x400] sm:$0xff]
        %v510 = vld [vmem:[%s324 + $0x408] sm:$0xff]
        %v511 = vld [vmem:[%s324 + $0x410] sm:$0xff]
        %v512 = vld [vmem:[%s324 + $0x418] sm:$0xff]
        %v513 = vld [vmem:[%s324 + $0x420] sm:$0xff]
        %v514 = vld [vmem:[%s324 + $0x428] sm:$0xff]
        %v515 = vld [vmem:[%s324 + $0x430] sm:$0xff]
        %v516 = vld [vmem:[%s324 + $0x438] sm:$0xff]
        %v517 = vld [vmem:[%s324 + $0x440] sm:$0xff]
        %v518 = vld [vmem:[%s324 + $0x448] sm:$0xff]
        %v519 = vld [vmem:[%s324 + $0x450] sm:$0xff]
        %v520 = vld [vmem:[%s324 + $0x458] sm:$0xff]
        %v521 = vld [vmem:[%s324 + $0x460] sm:$0xff]
        %v522 = vld [vmem:[%s324 + $0x468] sm:$0xff]
        %v523 = vld [vmem:[%s324 + $0x470] sm:$0xff]
        %v524 = vld [vmem:[%s324 + $0x478] sm:$0xff]
        %v525 = vld [vmem:[%s324 + $0x480] sm:$0xff]
        %v526 = vld [vmem:[%s324 + $0x488] sm:$0xff]
        %v527 = vld [vmem:[%s324 + $0x490] sm:$0xff]
        %v528 = vld [vmem:[%s324 + $0x498] sm:$0xff]
        %v529 = vld [vmem:[%s324 + $0x4a0] sm:$0xff]
        %v530 = vld [vmem:[%s324 + $0x4a8] sm:$0xff]
        %v531 = vld [vmem:[%s324 + $0x4b0] sm:$0xff]
        %v532 = vld [vmem:[%s324 + $0x4b8] sm:$0xff]
        %v533 = vld [vmem:[%s324 + $0x4c0] sm:$0xff]
        %v534 = vld [vmem:[%s324 + $0x4c8] sm:$0xff]
        %v535 = vld [vmem:[%s324 + $0x4d0] sm:$0xff]
        %v536 = vld [vmem:[%s324 + $0x4d8] sm:$0xff]
        %v537 = vld [vmem:[%s324 + $0x4e0] sm:$0xff]
        %v538 = vld [vmem:[%s324 + $0x4e8] sm:$0xff]
        %v539 = vld [vmem:[%s324 + $0x4f0] sm:$0xff]
        %v540 = vld [vmem:[%s324 + $0x4f8] sm:$0xff]
        %v541 = vld [vmem:[%s324 + $0x500] sm:$0xff]
        %v542 = vld [vmem:[%s324 + $0x508] sm:$0xff]
        %v543 = vld [vmem:[%s324 + $0x510] sm:$0xff]
        %v544 = vld [vmem:[%s324 + $0x518] sm:$0xff]
        %v545 = vld [vmem:[%s324 + $0x520] sm:$0xff]
        %v546 = vld [vmem:[%s324 + $0x528] sm:$0xff]
        %v547 = vld [vmem:[%s324 + $0x530] sm:$0xff]
        %v548 = vld [vmem:[%s324 + $0x538] sm:$0xff]
        %v549 = vld [vmem:[%s324 + $0x540] sm:$0xff]
        %v550 = vld [vmem:[%s324 + $0x548] sm:$0xff]
        %v551 = vld [vmem:[%s324 + $0x550] sm:$0xff]
        %v552 = vld [vmem:[%s324 + $0x558] sm:$0xff]
        %v553 = vld [vmem:[%s324 + $0x560] sm:$0xff]
        %v554 = vld [vmem:[%s324 + $0x568] sm:$0xff]
        %v555 = vld [vmem:[%s324 + $0x570] sm:$0xff]
        %v556 = vld [vmem:[%s324 + $0x578] sm:$0xff]
        %v557 = vld [vmem:[%s324 + $0x580] sm:$0xff]
        %v558 = vld [vmem:[%s324 + $0x588] sm:$0xff]
        %v559 = vld [vmem:[%s324 + $0x590] sm:$0xff]
        %v560 = vld [vmem:[%s324 + $0x598] sm:$0xff]
        %v561 = vld [vmem:[%s324 + $0x5a0] sm:$0xff]
        %v562 = vld [vmem:[%s324 + $0x5a8] sm:$0xff]
        %v563 = vld [vmem:[%s324 + $0x5b0] sm:$0xff]
        %v564 = vld [vmem:[%s324 + $0x5b8] sm:$0xff]
        %v565 = vld [vmem:[%s324 + $0x5c0] sm:$0xff]
        %v566 = vld [vmem:[%s324 + $0x5c8] sm:$0xff]
        %v567 = vld [vmem:[%s324 + $0x5d0] sm:$0xff]
        %v568 = vld [vmem:[%s324 + $0x5d8] sm:$0xff]
        %v569 = vld [vmem:[%s324 + $0x5e0] sm:$0xff]
        %v570 = vld [vmem:[%s324 + $0x5e8] sm:$0xff]
        %v571 = vld [vmem:[%s324 + $0x5f0] sm:$0xff]
        %v572 = vld [vmem:[%s324 + $0x5f8] sm:$0xff]
        %v573 = vld [vmem:[%s324 + $0x600] sm:$0xff]
        %v574 = vld [vmem:[%s324 + $0x608] sm:$0xff]
        %v575 = vld [vmem:[%s324 + $0x610] sm:$0xff]
        %v576 = vld [vmem:[%s324 + $0x618] sm:$0xff]
        %v577 = vld [vmem:[%s324 + $0x620] sm:$0xff]
        %v578 = vld [vmem:[%s324 + $0x628] sm:$0xff]
        %v579 = vld [vmem:[%s324 + $0x630] sm:$0xff]
        %v580 = vld [vmem:[%s324 + $0x638] sm:$0xff]
        %v581 = vld [vmem:[%s324 + $0x640] sm:$0xff]
        %v582 = vld [vmem:[%s324 + $0x648] sm:$0xff]
        %v583 = vld [vmem:[%s324 + $0x650] sm:$0xff]
        %v584 = vld [vmem:[%s324 + $0x658] sm:$0xff]
        %v585 = vld [vmem:[%s324 + $0x660] sm:$0xff]
        %v586 = vld [vmem:[%s324 + $0x668] sm:$0xff]
        %v587 = vld [vmem:[%s324 + $0x670] sm:$0xff]
        %v588 = vld [vmem:[%s324 + $0x678] sm:$0xff]
        %v589 = vld [vmem:[%s324 + $0x680] sm:$0xff]
        %v590 = vld [vmem:[%s324 + $0x688] sm:$0xff]
        %v591 = vld [vmem:[%s324 + $0x690] sm:$0xff]
        %v592 = vld [vmem:[%s324 + $0x698] sm:$0xff]
        %v593 = vld [vmem:[%s324 + $0x6a0] sm:$0xff]
        %v594 = vld [vmem:[%s324 + $0x6a8] sm:$0xff]
        %v595 = vld [vmem:[%s324 + $0x6b0] sm:$0xff]
        %v596 = vld [vmem:[%s324 + $0x6b8] sm:$0xff]
        %v597 = vld [vmem:[%s324 + $0x6c0] sm:$0xff]
        %v598 = vld [vmem:[%s324 + $0x6c8] sm:$0xff]
        %v599 = vld [vmem:[%s324 + $0x6d0] sm:$0xff]
        %v600 = vld [vmem:[%s324 + $0x6d8] sm:$0xff]
        %v601 = vld [vmem:[%s324 + $0x6e0] sm:$0xff]
        %v602 = vld [vmem:[%s324 + $0x6e8] sm:$0xff]
        %v603 = vld [vmem:[%s324 + $0x6f0] sm:$0xff]
        %v604 = vld [vmem:[%s324 + $0x6f8] sm:$0xff]
        %v605 = vld [vmem:[%s324 + $0x700] sm:$0xff]
        %v606 = vld [vmem:[%s324 + $0x708] sm:$0xff]
        %v607 = vld [vmem:[%s324 + $0x710] sm:$0xff]
        %v608 = vld [vmem:[%s324 + $0x718] sm:$0xff]
        %v609 = vld [vmem:[%s324 + $0x720] sm:$0xff]
        %v610 = vld [vmem:[%s324 + $0x728] sm:$0xff]
        %v611 = vld [vmem:[%s324 + $0x730] sm:$0xff]
        %v612 = vld [vmem:[%s324 + $0x738] sm:$0xff]
        %v613 = vld [vmem:[%s324 + $0x740] sm:$0xff]
        %v614 = vld [vmem:[%s324 + $0x748] sm:$0xff]
        %v615 = vld [vmem:[%s324 + $0x750] sm:$0xff]
        %v616 = vld [vmem:[%s324 + $0x758] sm:$0xff]
        %v617 = vld [vmem:[%s324 + $0x760] sm:$0xff]
        %v618 = vld [vmem:[%s324 + $0x768] sm:$0xff]
        %v619 = vld [vmem:[%s324 + $0x770] sm:$0xff]
        %v620 = vld [vmem:[%s324 + $0x778] sm:$0xff]
        %v621 = vld [vmem:[%s324 + $0x780] sm:$0xff]
        %v622 = vld [vmem:[%s324 + $0x788] sm:$0xff]
        %v623 = vld [vmem:[%s324 + $0x790] sm:$0xff]
        %v624 = vld [vmem:[%s324 + $0x798] sm:$0xff]
        %v625 = vld [vmem:[%s324 + $0x7a0] sm:$0xff]
        %v626 = vld [vmem:[%s324 + $0x7a8] sm:$0xff]
        %v627 = vld [vmem:[%s324 + $0x7b0] sm:$0xff]
        %v628 = vld [vmem:[%s324 + $0x7b8] sm:$0xff]
        %v629 = vld [vmem:[%s324 + $0x7c0] sm:$0xff]
        %v630 = vld [vmem:[%s324 + $0x7c8] sm:$0xff]
        %v631 = vld [vmem:[%s324 + $0x7d0] sm:$0xff]
        %v632 = vld [vmem:[%s324 + $0x7d8] sm:$0xff]
        %v633 = vld [vmem:[%s324 + $0x7e0] sm:$0xff]
        %v634 = vld [vmem:[%s324 + $0x7e8] sm:$0xff]
        %v635 = vld [vmem:[%s324 + $0x7f0] sm:$0xff]
        %v636 = vld [vmem:[%s324 + $0x7f8] sm:$0xff]
        %v637 = vld [vmem:[%s324 + $0x800] sm:$0xff]
        %v638 = vld [vmem:[%s324 + $0x808] sm:$0xff]
        %v639 = vld [vmem:[%s324 + $0x810] sm:$0xff]
        %v640 = vld [vmem:[%s324 + $0x818] sm:$0xff]
        %v641 = vld [vmem:[%s324 + $0x820] sm:$0xff]
        %v642 = vld [vmem:[%s324 + $0x828] sm:$0xff]
        %v643 = vld [vmem:[%s324 + $0x830] sm:$0xff]
        %v644 = vld [vmem:[%s324 + $0x838] sm:$0xff]
        %v645 = vld [vmem:[%s324 + $0x840] sm:$0xff]
        %v646 = vld [vmem:[%s324 + $0x848] sm:$0xff]
        %v647 = vld [vmem:[%s324 + $0x850] sm:$0xff]
        %v648 = vld [vmem:[%s324 + $0x858] sm:$0xff]
        %v649 = vld [vmem:[%s324 + $0x860] sm:$0xff]
        %v650 = vld [vmem:[%s324 + $0x868] sm:$0xff]
        %v651 = vld [vmem:[%s324 + $0x870] sm:$0xff]
        %v652 = vld [vmem:[%s324 + $0x878] sm:$0xff]
        %v653 = vld [vmem:[%s324 + $0x880] sm:$0xff]
        %v654 = vld [vmem:[%s324 + $0x888] sm:$0xff]
        %v655 = vld [vmem:[%s324 + $0x890] sm:$0xff]
        %v656 = vld [vmem:[%s324 + $0x898] sm:$0xff]
        %v657 = vld [vmem:[%s324 + $0x8a0] sm:$0xff]
        %v658 = vld [vmem:[%s324 + $0x8a8] sm:$0xff]
        %v659 = vld [vmem:[%s324 + $0x8b0] sm:$0xff]
        %v660 = vld [vmem:[%s324 + $0x8b8] sm:$0xff]
        %v661 = vld [vmem:[%s324 + $0x8c0] sm:$0xff]
        %v662 = vld [vmem:[%s324 + $0x8c8] sm:$0xff]
        %v663 = vld [vmem:[%s324 + $0x8d0] sm:$0xff]
        %v664 = vld [vmem:[%s324 + $0x8d8] sm:$0xff]
        %v665 = vld [vmem:[%s324 + $0x8e0] sm:$0xff]
        %v666 = vld [vmem:[%s324 + $0x8e8] sm:$0xff]
        %v667 = vld [vmem:[%s324 + $0x8f0] sm:$0xff]
        %v668 = vld [vmem:[%s324 + $0x8f8] sm:$0xff]
        %v669 = vld [vmem:[%s324 + $0x900] sm:$0xff]
        %v670 = vld [vmem:[%s324 + $0x908] sm:$0xff]
        %v671 = vld [vmem:[%s324 + $0x910] sm:$0xff]
        %v672 = vld [vmem:[%s324 + $0x918] sm:$0xff]
        %v673 = vld [vmem:[%s324 + $0x920] sm:$0xff]
        %v674 = vld [vmem:[%s324 + $0x928] sm:$0xff]
        %v675 = vld [vmem:[%s324 + $0x930] sm:$0xff]
        %v676 = vld [vmem:[%s324 + $0x938] sm:$0xff]
        %v677 = vld [vmem:[%s324 + $0x940] sm:$0xff]
        %v678 = vld [vmem:[%s324 + $0x948] sm:$0xff]
        %v679 = vld [vmem:[%s324 + $0x950] sm:$0xff]
        %v680 = vld [vmem:[%s324 + $0x958] sm:$0xff]
        %v681 = vld [vmem:[%s324 + $0x960] sm:$0xff]
        %v682 = vld [vmem:[%s324 + $0x968] sm:$0xff]
        %v683 = vld [vmem:[%s324 + $0x970] sm:$0xff]
        %v684 = vld [vmem:[%s324 + $0x978] sm:$0xff]
        %v685 = vld [vmem:[%s324 + $0x980] sm:$0xff]
        %v686 = vld [vmem:[%s324 + $0x988] sm:$0xff]
        %v687 = vld [vmem:[%s324 + $0x990] sm:$0xff]
        %v688 = vld [vmem:[%s324 + $0x998] sm:$0xff]
        %v689 = vld [vmem:[%s324 + $0x9a0] sm:$0xff]
        %v690 = vld [vmem:[%s324 + $0x9a8] sm:$0xff]
        %v691 = vld [vmem:[%s324 + $0x9b0] sm:$0xff]
        %v692 = vld [vmem:[%s324 + $0x9b8] sm:$0xff]
        %v693 = vld [vmem:[%s324 + $0x9c0] sm:$0xff]
        %v694 = vld [vmem:[%s324 + $0x9c8] sm:$0xff]
        %v695 = vld [vmem:[%s324 + $0x9d0] sm:$0xff]
        %v696 = vld [vmem:[%s324 + $0x9d8] sm:$0xff]
        %v697 = vld [vmem:[%s324 + $0x9e0] sm:$0xff]
        %v698 = vld [vmem:[%s324 + $0x9e8] sm:$0xff]
        %v699 = vld [vmem:[%s324 + $0x9f0] sm:$0xff]
        %v700 = vld [vmem:[%s324 + $0x9f8] sm:$0xff]
        %v701 = vld [vmem:[%s324 + $0xa00] sm:$0xff]
        %v702 = vld [vmem:[%s324 + $0xa08] sm:$0xff]
        %v703 = vld [vmem:[%s324 + $0xa10] sm:$0xff]
        %v704 = vld [vmem:[%s324 + $0xa18] sm:$0xff]
        %v705 = vld [vmem:[%s324 + $0xa20] sm:$0xff]
        %v706 = vld [vmem:[%s324 + $0xa28] sm:$0xff]
        %v707 = vld [vmem:[%s324 + $0xa30] sm:$0xff]
        %v708 = vld [vmem:[%s324 + $0xa38] sm:$0xff]
        %v709 = vld [vmem:[%s324 + $0xa40] sm:$0xff]
        %v710 = vld [vmem:[%s324 + $0xa48] sm:$0xff]
        %v711 = vld [vmem:[%s324 + $0xa50] sm:$0xff]
        %v712 = vld [vmem:[%s324 + $0xa58] sm:$0xff]
        %v713 = vld [vmem:[%s324 + $0xa60] sm:$0xff]
        %v714 = vld [vmem:[%s324 + $0xa68] sm:$0xff]
        %v715 = vld [vmem:[%s324 + $0xa70] sm:$0xff]
        %v716 = vld [vmem:[%s324 + $0xa78] sm:$0xff]
        %v717 = vld [vmem:[%s324 + $0xa80] sm:$0xff]
        %v718 = vld [vmem:[%s324 + $0xa88] sm:$0xff]
        %v719 = vld [vmem:[%s324 + $0xa90] sm:$0xff]
        %v720 = vld [vmem:[%s324 + $0xa98] sm:$0xff]
        %v721 = vld [vmem:[%s324 + $0xaa0] sm:$0xff]
        %v722 = vld [vmem:[%s324 + $0xaa8] sm:$0xff]
        %v723 = vld [vmem:[%s324 + $0xab0] sm:$0xff]
        %v724 = vld [vmem:[%s324 + $0xab8] sm:$0xff]
        %v725 = vld [vmem:[%s324 + $0xac0] sm:$0xff]
        %v726 = vld [vmem:[%s324 + $0xac8] sm:$0xff]
        %v727 = vld [vmem:[%s324 + $0xad0] sm:$0xff]
        %v728 = vld [vmem:[%s324 + $0xad8] sm:$0xff]
        %v729 = vld [vmem:[%s324 + $0xae0] sm:$0xff]
        %v730 = vld [vmem:[%s324 + $0xae8] sm:$0xff]
        %v731 = vld [vmem:[%s324 + $0xaf0] sm:$0xff]
        %v732 = vld [vmem:[%s324 + $0xaf8] sm:$0xff]
        %v733 = vld [vmem:[%s324 + $0xb00] sm:$0xff]
        %v734 = vld [vmem:[%s324 + $0xb08] sm:$0xff]
        %v735 = vld [vmem:[%s324 + $0xb10] sm:$0xff]
        %v736 = vld [vmem:[%s324 + $0xb18] sm:$0xff]
        %v737 = vld [vmem:[%s324 + $0xb20] sm:$0xff]
        %v738 = vld [vmem:[%s324 + $0xb28] sm:$0xff]
        %v739 = vld [vmem:[%s324 + $0xb30] sm:$0xff]
        %v740 = vld [vmem:[%s324 + $0xb38] sm:$0xff]
        %v741 = vld [vmem:[%s324 + $0xb40] sm:$0xff]
        %v742 = vld [vmem:[%s324 + $0xb48] sm:$0xff]
        %v743 = vld [vmem:[%s324 + $0xb50] sm:$0xff]
        %v744 = vld [vmem:[%s324 + $0xb58] sm:$0xff]
        %v745 = vld [vmem:[%s324 + $0xb60] sm:$0xff]
        %v746 = vld [vmem:[%s324 + $0xb68] sm:$0xff]
        %v747 = vld [vmem:[%s324 + $0xb70] sm:$0xff]
        %v748 = vld [vmem:[%s324 + $0xb78] sm:$0xff]
        %v749 = vld [vmem:[%s324 + $0xb80] sm:$0xff]
        %v750 = vld [vmem:[%s324 + $0xb88] sm:$0xff]
        %v751 = vld [vmem:[%s324 + $0xb90] sm:$0xff]
        %v752 = vld [vmem:[%s324 + $0xb98] sm:$0xff]
        %v753 = vld [vmem:[%s324 + $0xba0] sm:$0xff]
        %v754 = vld [vmem:[%s324 + $0xba8] sm:$0xff]
        %v755 = vld [vmem:[%s324 + $0xbb0] sm:$0xff]
        %v756 = vld [vmem:[%s324 + $0xbb8] sm:$0xff]
        %v757 = vld [vmem:[%s324 + $0xbc0] sm:$0xff]
        %v758 = vld [vmem:[%s324 + $0xbc8] sm:$0xff]
        %v759 = vld [vmem:[%s324 + $0xbd0] sm:$0xff]
        %v760 = vld [vmem:[%s324 + $0xbd8] sm:$0xff]
        %v761 = vld [vmem:[%s324 + $0xbe0] sm:$0xff]
        %v762 = vld [vmem:[%s324 + $0xbe8] sm:$0xff]
        %v763 = vld [vmem:[%s324 + $0xbf0] sm:$0xff]
        %v764 = vld [vmem:[%s324 + $0xbf8] sm:$0xff]
        %v765 = vpack.c.bf16 %v384, %v381
        %v766 = vpack.c.bf16 %v385, %v382
        %v767 = vpack.c.bf16 %v386, %v383
        %v768 = vpack.c.bf16 %v390, %v387
        %v769 = vpack.c.bf16 %v391, %v388
        %v770 = vpack.c.bf16 %v392, %v389
        %v771 = vpack.c.bf16 %v396, %v393
        %v772 = vpack.c.bf16 %v397, %v394
        %v773 = vpack.c.bf16 %v398, %v395
        %v774 = vpack.c.bf16 %v402, %v399
        %v775 = vpack.c.bf16 %v403, %v400
        %v776 = vpack.c.bf16 %v404, %v401
        %v777 = vpack.c.bf16 %v408, %v405
        %v778 = vpack.c.bf16 %v409, %v406
        %v779 = vpack.c.bf16 %v410, %v407
        %v780 = vpack.c.bf16 %v414, %v411
        %v781 = vpack.c.bf16 %v415, %v412
        %v782 = vpack.c.bf16 %v416, %v413
        %v783 = vpack.c.bf16 %v420, %v417
        %v784 = vpack.c.bf16 %v421, %v418
        %v785 = vpack.c.bf16 %v422, %v419
        %v786 = vpack.c.bf16 %v426, %v423
        %v787 = vpack.c.bf16 %v427, %v424
        %v788 = vpack.c.bf16 %v428, %v425
        %v789 = vpack.c.bf16 %v432, %v429
        %v790 = vpack.c.bf16 %v433, %v430
        %v791 = vpack.c.bf16 %v434, %v431
        %v792 = vpack.c.bf16 %v438, %v435
        %v793 = vpack.c.bf16 %v439, %v436
        %v794 = vpack.c.bf16 %v440, %v437
        %v795 = vpack.c.bf16 %v444, %v441
        %v796 = vpack.c.bf16 %v445, %v442
        %v797 = vpack.c.bf16 %v446, %v443
        %v798 = vpack.c.bf16 %v450, %v447
        %v799 = vpack.c.bf16 %v451, %v448
        %v800 = vpack.c.bf16 %v452, %v449
        %v801 = vpack.c.bf16 %v456, %v453
        %v802 = vpack.c.bf16 %v457, %v454
        %v803 = vpack.c.bf16 %v458, %v455
        %v804 = vpack.c.bf16 %v462, %v459
        %v805 = vpack.c.bf16 %v463, %v460
        %v806 = vpack.c.bf16 %v464, %v461
        %v807 = vpack.c.bf16 %v468, %v465
        %v808 = vpack.c.bf16 %v469, %v466
        %v809 = vpack.c.bf16 %v470, %v467
        %v810 = vpack.c.bf16 %v474, %v471
        %v811 = vpack.c.bf16 %v475, %v472
        %v812 = vpack.c.bf16 %v476, %v473
        %v813 = vpack.c.bf16 %v480, %v477
        %v814 = vpack.c.bf16 %v481, %v478
        %v815 = vpack.c.bf16 %v482, %v479
        %v816 = vpack.c.bf16 %v486, %v483
        %v817 = vpack.c.bf16 %v487, %v484
        %v818 = vpack.c.bf16 %v488, %v485
        %v819 = vpack.c.bf16 %v492, %v489
        %v820 = vpack.c.bf16 %v493, %v490
        %v821 = vpack.c.bf16 %v494, %v491
        %v822 = vpack.c.bf16 %v498, %v495
        %v823 = vpack.c.bf16 %v499, %v496
        %v824 = vpack.c.bf16 %v500, %v497
        %v825 = vpack.c.bf16 %v504, %v501
        %v826 = vpack.c.bf16 %v505, %v502
        %v827 = vpack.c.bf16 %v506, %v503
        %v828 = vpack.c.bf16 %v510, %v507
        %v829 = vpack.c.bf16 %v511, %v508
        %v830 = vpack.c.bf16 %v512, %v509
        %v831 = vpack.c.bf16 %v516, %v513
        %v832 = vpack.c.bf16 %v517, %v514
        %v833 = vpack.c.bf16 %v518, %v515
        %v834 = vpack.c.bf16 %v522, %v519
        %v835 = vpack.c.bf16 %v523, %v520
        %v836 = vpack.c.bf16 %v524, %v521
        %v837 = vpack.c.bf16 %v528, %v525
        %v838 = vpack.c.bf16 %v529, %v526
        %v839 = vpack.c.bf16 %v530, %v527
        %v840 = vpack.c.bf16 %v534, %v531
        %v841 = vpack.c.bf16 %v535, %v532
        %v842 = vpack.c.bf16 %v536, %v533
        %v843 = vpack.c.bf16 %v540, %v537
        %v844 = vpack.c.bf16 %v541, %v538
        %v845 = vpack.c.bf16 %v542, %v539
        %v846 = vpack.c.bf16 %v546, %v543
        %v847 = vpack.c.bf16 %v547, %v544
        %v848 = vpack.c.bf16 %v548, %v545
        %v849 = vpack.c.bf16 %v552, %v549
        %v850 = vpack.c.bf16 %v553, %v550
        %v851 = vpack.c.bf16 %v554, %v551
        %v852 = vpack.c.bf16 %v558, %v555
        %v853 = vpack.c.bf16 %v559, %v556
        %v854 = vpack.c.bf16 %v560, %v557
        %v855 = vpack.c.bf16 %v564, %v561
        %v856 = vpack.c.bf16 %v565, %v562
        %v857 = vpack.c.bf16 %v566, %v563
        %v858 = vpack.c.bf16 %v570, %v567
        %v859 = vpack.c.bf16 %v571, %v568
        %v860 = vpack.c.bf16 %v572, %v569
        %v861 = vpack.c.bf16 %v576, %v573
        %v862 = vpack.c.bf16 %v577, %v574
        %v863 = vpack.c.bf16 %v578, %v575
        %v864 = vpack.c.bf16 %v582, %v579
        %v865 = vpack.c.bf16 %v583, %v580
        %v866 = vpack.c.bf16 %v584, %v581
        %v867 = vpack.c.bf16 %v588, %v585
        %v868 = vpack.c.bf16 %v589, %v586
        %v869 = vpack.c.bf16 %v590, %v587
        %v870 = vpack.c.bf16 %v594, %v591
        %v871 = vpack.c.bf16 %v595, %v592
        %v872 = vpack.c.bf16 %v596, %v593
        %v873 = vpack.c.bf16 %v600, %v597
        %v874 = vpack.c.bf16 %v601, %v598
        %v875 = vpack.c.bf16 %v602, %v599
        %v876 = vpack.c.bf16 %v606, %v603
        %v877 = vpack.c.bf16 %v607, %v604
        %v878 = vpack.c.bf16 %v608, %v605
        %v879 = vpack.c.bf16 %v612, %v609
        %v880 = vpack.c.bf16 %v613, %v610
        %v881 = vpack.c.bf16 %v614, %v611
        %v882 = vpack.c.bf16 %v618, %v615
        %v883 = vpack.c.bf16 %v619, %v616
        %v884 = vpack.c.bf16 %v620, %v617
        %v885 = vpack.c.bf16 %v624, %v621
        %v886 = vpack.c.bf16 %v625, %v622
        %v887 = vpack.c.bf16 %v626, %v623
        %v888 = vpack.c.bf16 %v630, %v627
        %v889 = vpack.c.bf16 %v631, %v628
        %v890 = vpack.c.bf16 %v632, %v629
        %v891 = vpack.c.bf16 %v636, %v633
        %v892 = vpack.c.bf16 %v637, %v634
        %v893 = vpack.c.bf16 %v638, %v635
        %v894 = vpack.c.bf16 %v642, %v639
        %v895 = vpack.c.bf16 %v643, %v640
        %v896 = vpack.c.bf16 %v644, %v641
        %v897 = vpack.c.bf16 %v648, %v645
        %v898 = vpack.c.bf16 %v649, %v646
        %v899 = vpack.c.bf16 %v650, %v647
        %v900 = vpack.c.bf16 %v654, %v651
        %v901 = vpack.c.bf16 %v655, %v652
        %v902 = vpack.c.bf16 %v656, %v653
        %v903 = vpack.c.bf16 %v660, %v657
        %v904 = vpack.c.bf16 %v661, %v658
        %v905 = vpack.c.bf16 %v662, %v659
        %v906 = vpack.c.bf16 %v666, %v663
        %v907 = vpack.c.bf16 %v667, %v664
        %v908 = vpack.c.bf16 %v668, %v665
        %v909 = vpack.c.bf16 %v672, %v669
        %v910 = vpack.c.bf16 %v673, %v670
        %v911 = vpack.c.bf16 %v674, %v671
        %v912 = vpack.c.bf16 %v678, %v675
        %v913 = vpack.c.bf16 %v679, %v676
        %v914 = vpack.c.bf16 %v680, %v677
        %v915 = vpack.c.bf16 %v684, %v681
        %v916 = vpack.c.bf16 %v685, %v682
        %v917 = vpack.c.bf16 %v686, %v683
        %v918 = vpack.c.bf16 %v690, %v687
        %v919 = vpack.c.bf16 %v691, %v688
        %v920 = vpack.c.bf16 %v692, %v689
        %v921 = vpack.c.bf16 %v696, %v693
        %v922 = vpack.c.bf16 %v697, %v694
        %v923 = vpack.c.bf16 %v698, %v695
        %v924 = vpack.c.bf16 %v702, %v699
        %v925 = vpack.c.bf16 %v703, %v700
        %v926 = vpack.c.bf16 %v704, %v701
        %v927 = vpack.c.bf16 %v708, %v705
        %v928 = vpack.c.bf16 %v709, %v706
        %v929 = vpack.c.bf16 %v710, %v707
        %v930 = vpack.c.bf16 %v714, %v711
        %v931 = vpack.c.bf16 %v715, %v712
        %v932 = vpack.c.bf16 %v716, %v713
        %v933 = vpack.c.bf16 %v720, %v717
        %v934 = vpack.c.bf16 %v721, %v718
        %v935 = vpack.c.bf16 %v722, %v719
        %v936 = vpack.c.bf16 %v726, %v723
        %v937 = vpack.c.bf16 %v727, %v724
        %v938 = vpack.c.bf16 %v728, %v725
        %v939 = vpack.c.bf16 %v732, %v729
        %v940 = vpack.c.bf16 %v733, %v730
        %v941 = vpack.c.bf16 %v734, %v731
        %v942 = vpack.c.bf16 %v738, %v735
        %v943 = vpack.c.bf16 %v739, %v736
        %v944 = vpack.c.bf16 %v740, %v737
        %v945 = vpack.c.bf16 %v744, %v741
        %v946 = vpack.c.bf16 %v745, %v742
        %v947 = vpack.c.bf16 %v746, %v743
        %v948 = vpack.c.bf16 %v750, %v747
        %v949 = vpack.c.bf16 %v751, %v748
        %v950 = vpack.c.bf16 %v752, %v749
        %v951 = vpack.c.bf16 %v756, %v753
        %v952 = vpack.c.bf16 %v757, %v754
        %v953 = vpack.c.bf16 %v758, %v755
        %v954 = vpack.c.bf16 %v762, %v759
        %v955 = vpack.c.bf16 %v763, %v760
        %v956 = vpack.c.bf16 %v764, %v761
        %v957 = vld [vmem:[#allocation5] sm:$0xff]
        %v958 = vld [vmem:[#allocation5 + $0x8] sm:$0xff]
        %v959 = vld [vmem:[#allocation5 + $0x10] sm:$0xff]
        %v960 = vld [vmem:[#allocation5 + $0x18] sm:$0xff]
        %v961 = vld [vmem:[#allocation5 + $0x20] sm:$0xff]
        %v962 = vld [vmem:[#allocation5 + $0x28] sm:$0xff]
        %v963 = vld [vmem:[#allocation5 + $0x30] sm:$0xff]
        %v964 = vld [vmem:[#allocation5 + $0x38] sm:$0xff]
        %v965 = vld [vmem:[#allocation5 + $0x40] sm:$0xff]
        %v966 = vld [vmem:[#allocation5 + $0x48] sm:$0xff]
        %v967 = vld [vmem:[#allocation5 + $0x50] sm:$0xff]
        %v968 = vld [vmem:[#allocation5 + $0x58] sm:$0xff]
        %v969 = vld [vmem:[#allocation5 + $0x60] sm:$0xff]
        %v970 = vld [vmem:[#allocation5 + $0x68] sm:$0xff]
        %v971 = vld [vmem:[#allocation5 + $0x70] sm:$0xff]
        %v972 = vld [vmem:[#allocation5 + $0x78] sm:$0xff]
        %v973 = vld [vmem:[#allocation5 + $0x80] sm:$0xff]
        %v974 = vld [vmem:[#allocation5 + $0x88] sm:$0xff]
        %v975 = vld [vmem:[#allocation5 + $0x90] sm:$0xff]
        %v976 = vld [vmem:[#allocation5 + $0x98] sm:$0xff]
        %v977 = vld [vmem:[#allocation5 + $0xa0] sm:$0xff]
        %v978 = vld [vmem:[#allocation5 + $0xa8] sm:$0xff]
        %v979 = vld [vmem:[#allocation5 + $0xb0] sm:$0xff]
        %v980 = vld [vmem:[#allocation5 + $0xb8] sm:$0xff]
        %v981 = vld [vmem:[#allocation5 + $0xc0] sm:$0xff]
        %v982 = vld [vmem:[#allocation5 + $0xc8] sm:$0xff]
        %v983 = vld [vmem:[#allocation5 + $0xd0] sm:$0xff]
        %v984 = vld [vmem:[#allocation5 + $0xd8] sm:$0xff]
        %v985 = vld [vmem:[#allocation5 + $0xe0] sm:$0xff]
        %v986 = vld [vmem:[#allocation5 + $0xe8] sm:$0xff]
        %v987 = vld [vmem:[#allocation5 + $0xf0] sm:$0xff]
        %v988 = vld [vmem:[#allocation5 + $0xf8] sm:$0xff]
        %v989 = vld [vmem:[#allocation5 + $0x100] sm:$0xff]
        %v990 = vld [vmem:[#allocation5 + $0x108] sm:$0xff]
        %v991 = vld [vmem:[#allocation5 + $0x110] sm:$0xff]
        %v992 = vld [vmem:[#allocation5 + $0x118] sm:$0xff]
        %v993 = vld [vmem:[#allocation5 + $0x120] sm:$0xff]
        %v994 = vld [vmem:[#allocation5 + $0x128] sm:$0xff]
        %v995 = vld [vmem:[#allocation5 + $0x130] sm:$0xff]
        %v996 = vld [vmem:[#allocation5 + $0x138] sm:$0xff]
        %v997 = vld [vmem:[#allocation5 + $0x140] sm:$0xff]
        %v998 = vld [vmem:[#allocation5 + $0x148] sm:$0xff]
        %v999 = vld [vmem:[#allocation5 + $0x150] sm:$0xff]
        %v1000 = vld [vmem:[#allocation5 + $0x158] sm:$0xff]
        %v1001 = vld [vmem:[#allocation5 + $0x160] sm:$0xff]
        %v1002 = vld [vmem:[#allocation5 + $0x168] sm:$0xff]
        %v1003 = vld [vmem:[#allocation5 + $0x170] sm:$0xff]
        %v1004 = vld [vmem:[#allocation5 + $0x178] sm:$0xff]
        %v1005 = vld [vmem:[#allocation7] sm:$0x3]
        %v1007 = vlaneseq
        %v1008 = vshrl.u32 %v1007, 7
        %v1009 = vsub.s32 0, %v1008
        %v1010 = vrot.slane %v1005, %v1009
        %v1011 = vlaneseq
        %v1012 = vshrl.u32 %v1011, 7
        %v1013 = vsub.s32 1, %v1012
        %v1014 = vrot.slane %v1005, %v1013
        %v1065 = vunpack.c.l.b16 %v957
        %v1066 = vunpack.c.h.b16 %v957
        %v1067 = vunpack.c.l.b16 %v958
        %v1068 = vunpack.c.h.b16 %v958
        %v1069 = vunpack.c.l.b16 %v959
        %v1070 = vunpack.c.h.b16 %v959
        %v1071 = vunpack.c.l.b16 %v960
        %v1072 = vunpack.c.h.b16 %v960
        %v1073 = vunpack.c.l.b16 %v961
        %v1074 = vunpack.c.h.b16 %v961
        %v1075 = vunpack.c.l.b16 %v962
        %v1076 = vunpack.c.h.b16 %v962
        %v1077 = vunpack.c.l.b16 %v963
        %v1078 = vunpack.c.h.b16 %v963
        %v1079 = vunpack.c.l.b16 %v964
        %v1080 = vunpack.c.h.b16 %v964
        %v1081 = vunpack.c.l.b16 %v965
        %v1082 = vunpack.c.h.b16 %v965
        %v1083 = vunpack.c.l.b16 %v966
        %v1084 = vunpack.c.h.b16 %v966
        %v1085 = vunpack.c.l.b16 %v967
        %v1086 = vunpack.c.h.b16 %v967
        %v1087 = vunpack.c.l.b16 %v968
        %v1088 = vunpack.c.h.b16 %v968
        %v1089 = vunpack.c.l.b16 %v969
        %v1090 = vunpack.c.h.b16 %v969
        %v1091 = vunpack.c.l.b16 %v970
        %v1092 = vunpack.c.h.b16 %v970
        %v1093 = vunpack.c.l.b16 %v971
        %v1094 = vunpack.c.h.b16 %v971
        %v1095 = vunpack.c.l.b16 %v972
        %v1096 = vunpack.c.h.b16 %v972
        %v1097 = vunpack.c.l.b16 %v973
        %v1098 = vunpack.c.h.b16 %v973
        %v1099 = vunpack.c.l.b16 %v974
        %v1100 = vunpack.c.h.b16 %v974
        %v1101 = vunpack.c.l.b16 %v975
        %v1102 = vunpack.c.h.b16 %v975
        %v1103 = vunpack.c.l.b16 %v976
        %v1104 = vunpack.c.h.b16 %v976
        %v1105 = vunpack.c.l.b16 %v977
        %v1106 = vunpack.c.h.b16 %v977
        %v1107 = vunpack.c.l.b16 %v978
        %v1108 = vunpack.c.h.b16 %v978
        %v1109 = vunpack.c.l.b16 %v979
        %v1110 = vunpack.c.h.b16 %v979
        %v1111 = vunpack.c.l.b16 %v980
        %v1112 = vunpack.c.h.b16 %v980
        %v1113 = vunpack.c.l.b16 %v981
        %v1114 = vunpack.c.h.b16 %v981
        %v1115 = vunpack.c.l.b16 %v982
        %v1116 = vunpack.c.h.b16 %v982
        %v1117 = vunpack.c.l.b16 %v983
        %v1118 = vunpack.c.h.b16 %v983
        %v1119 = vunpack.c.l.b16 %v984
        %v1120 = vunpack.c.h.b16 %v984
        %v1121 = vunpack.c.l.b16 %v985
        %v1122 = vunpack.c.h.b16 %v985
        %v1123 = vunpack.c.l.b16 %v986
        %v1124 = vunpack.c.h.b16 %v986
        %v1125 = vunpack.c.l.b16 %v987
        %v1126 = vunpack.c.h.b16 %v987
        %v1127 = vunpack.c.l.b16 %v988
        %v1128 = vunpack.c.h.b16 %v988
        %v1129 = vunpack.c.l.b16 %v989
        %v1130 = vunpack.c.h.b16 %v989
        %v1131 = vunpack.c.l.b16 %v990
        %v1132 = vunpack.c.h.b16 %v990
        %v1133 = vunpack.c.l.b16 %v991
        %v1134 = vunpack.c.h.b16 %v991
        %v1135 = vunpack.c.l.b16 %v992
        %v1136 = vunpack.c.h.b16 %v992
        %v1137 = vunpack.c.l.b16 %v993
        %v1138 = vunpack.c.h.b16 %v993
        %v1139 = vunpack.c.l.b16 %v994
        %v1140 = vunpack.c.h.b16 %v994
        %v1141 = vunpack.c.l.b16 %v995
        %v1142 = vunpack.c.h.b16 %v995
        %v1143 = vunpack.c.l.b16 %v996
        %v1144 = vunpack.c.h.b16 %v996
        %v1145 = vunpack.c.l.b16 %v997
        %v1146 = vunpack.c.h.b16 %v997
        %v1147 = vunpack.c.l.b16 %v998
        %v1148 = vunpack.c.h.b16 %v998
        %v1149 = vunpack.c.l.b16 %v999
        %v1150 = vunpack.c.h.b16 %v999
        %v1151 = vunpack.c.l.b16 %v1000
        %v1152 = vunpack.c.h.b16 %v1000
        %v1153 = vunpack.c.l.b16 %v1001
        %v1154 = vunpack.c.h.b16 %v1001
        %v1155 = vunpack.c.l.b16 %v1002
        %v1156 = vunpack.c.h.b16 %v1002
        %v1157 = vunpack.c.l.b16 %v1003
        %v1158 = vunpack.c.h.b16 %v1003
        %v1159 = vunpack.c.l.b16 %v1004
        %v1160 = vunpack.c.h.b16 %v1004
        %v1161 = vpack.c.b16 %v1067, %v1065
        %v1162 = vpack.c.b16 %v1068, %v1066
        %v1163 = vpack.c.b16 %v1071, %v1069
        %v1164 = vpack.c.b16 %v1072, %v1070
        %v1165 = vpack.c.b16 %v1075, %v1073
        %v1166 = vpack.c.b16 %v1076, %v1074
        %v1167 = vpack.c.b16 %v1079, %v1077
        %v1168 = vpack.c.b16 %v1080, %v1078
        %v1169 = vpack.c.b16 %v1083, %v1081
        %v1170 = vpack.c.b16 %v1084, %v1082
        %v1171 = vpack.c.b16 %v1087, %v1085
        %v1172 = vpack.c.b16 %v1088, %v1086
        %v1173 = vpack.c.b16 %v1091, %v1089
        %v1174 = vpack.c.b16 %v1092, %v1090
        %v1175 = vpack.c.b16 %v1095, %v1093
        %v1176 = vpack.c.b16 %v1096, %v1094
        %v1177 = vpack.c.b16 %v1099, %v1097
        %v1178 = vpack.c.b16 %v1100, %v1098
        %v1179 = vpack.c.b16 %v1103, %v1101
        %v1180 = vpack.c.b16 %v1104, %v1102
        %v1181 = vpack.c.b16 %v1107, %v1105
        %v1182 = vpack.c.b16 %v1108, %v1106
        %v1183 = vpack.c.b16 %v1111, %v1109
        %v1184 = vpack.c.b16 %v1112, %v1110
        %v1185 = vpack.c.b16 %v1115, %v1113
        %v1186 = vpack.c.b16 %v1116, %v1114
        %v1187 = vpack.c.b16 %v1119, %v1117
        %v1188 = vpack.c.b16 %v1120, %v1118
        %v1189 = vpack.c.b16 %v1123, %v1121
        %v1190 = vpack.c.b16 %v1124, %v1122
        %v1191 = vpack.c.b16 %v1127, %v1125
        %v1192 = vpack.c.b16 %v1128, %v1126
        %v1193 = vpack.c.b16 %v1131, %v1129
        %v1194 = vpack.c.b16 %v1132, %v1130
        %v1195 = vpack.c.b16 %v1135, %v1133
        %v1196 = vpack.c.b16 %v1136, %v1134
        %v1197 = vpack.c.b16 %v1139, %v1137
        %v1198 = vpack.c.b16 %v1140, %v1138
        %v1199 = vpack.c.b16 %v1143, %v1141
        %v1200 = vpack.c.b16 %v1144, %v1142
        %v1201 = vpack.c.b16 %v1147, %v1145
        %v1202 = vpack.c.b16 %v1148, %v1146
        %v1203 = vpack.c.b16 %v1151, %v1149
        %v1204 = vpack.c.b16 %v1152, %v1150
        %v1205 = vpack.c.b16 %v1155, %v1153
        %v1206 = vpack.c.b16 %v1156, %v1154
        %v1207 = vpack.c.b16 %v1159, %v1157
        %v1208 = vpack.c.b16 %v1160, %v1158
        %1257 = vmatprep.subr.bf16.mxu0 %v1176
        %1258 = vmatpush1.bf16.msra.mxu0 %v1175
        %1259 = vmatprep.subr.bf16.mxu0 %v1174
        %1260 = vmatpush1.bf16.msra.mxu0 %v1173
        %1261 = vmatprep.subr.bf16.mxu0 %v1172
        %1262 = vmatpush1.bf16.msra.mxu0 %v1171
        %1263 = vmatprep.subr.bf16.mxu0 %v1170
        %1264 = vmatpush1.bf16.msra.mxu0 %v1169
        %1265 = vmatprep.subr.bf16.mxu0 %v1168
        %1266 = vmatpush1.bf16.msra.mxu0 %v1167
        %1267 = vmatprep.subr.bf16.mxu0 %v1166
        %1268 = vmatpush1.bf16.msra.mxu0 %v1165
        %1269 = vmatprep.subr.bf16.mxu0 %v1164
        %1270 = vmatpush1.bf16.msra.mxu0 %v1163
        %1271 = vmatprep.subr.bf16.mxu0 %v1162
        %1272 = vmatpush1.bf16.msra.mxu0 %v1161
        %1273 = vmatprep.subr.bf16.mxu0 %v1192
        %1274 = vmatpush2.bf16.msra.mxu0 %v1191
        %1275 = vmatprep.subr.bf16.mxu0 %v1190
        %1276 = vmatpush2.bf16.msra.mxu0 %v1189
        %1277 = vmatprep.subr.bf16.mxu0 %v1188
        %1278 = vmatpush2.bf16.msra.mxu0 %v1187
        %1279 = vmatprep.subr.bf16.mxu0 %v1186
        %1280 = vmatpush2.bf16.msra.mxu0 %v1185
        %1281 = vmatprep.subr.bf16.mxu0 %v1184
        %1282 = vmatpush2.bf16.msra.mxu0 %v1183
        %1283 = vmatprep.subr.bf16.mxu0 %v1182
        %1284 = vmatpush2.bf16.msra.mxu0 %v1181
        %1285 = vmatprep.subr.bf16.mxu0 %v1180
        %1286 = vmatpush2.bf16.msra.mxu0 %v1179
        %1287 = vmatprep.subr.bf16.mxu0 %v1178
        %1288 = vmatpush2.bf16.msra.mxu0 %v1177
        %1289 = vmatprep.mubr.bf16.mxu0 %v766
        %1290 = vmatmul.mubr.bf16.gmra.mxu0 %v765
        %v1291 = vpop.f32.mrf.mxu0
        %v1292 = vadd.f32 %v1010, %v1291
        %v1293 = vpop.f32.mrf.mxu0
        %v1294 = vadd.f32 %v1014, %v1293
        %v1295 = vpop.f32.mrf.mxu0
        %v1296 = vadd.f32 %v1010, %v1295
        %v1297 = vpop.f32.mrf.mxu0
        %v1298 = vadd.f32 %v1014, %v1297
        %1299 = vmatprep.mubr.bf16.mxu0 %v769
        %1300 = vmatmul.mubr.bf16.gmra.mxu0 %v768
        %v1301 = vpop.f32.mrf.mxu0
        %v1302 = vadd.f32 %v1010, %v1301
        %v1303 = vpop.f32.mrf.mxu0
        %v1304 = vadd.f32 %v1014, %v1303
        %v1305 = vpop.f32.mrf.mxu0
        %v1306 = vadd.f32 %v1010, %v1305
        %v1307 = vpop.f32.mrf.mxu0
        %v1308 = vadd.f32 %v1014, %v1307
        %1309 = vmatprep.mubr.bf16.mxu0 %v772
        %1310 = vmatmul.mubr.bf16.gmra.mxu0 %v771
        %v1311 = vpop.f32.mrf.mxu0
        %v1312 = vadd.f32 %v1010, %v1311
        %v1313 = vpop.f32.mrf.mxu0
        %v1314 = vadd.f32 %v1014, %v1313
        %v1315 = vpop.f32.mrf.mxu0
        %v1316 = vadd.f32 %v1010, %v1315
        %v1317 = vpop.f32.mrf.mxu0
        %v1318 = vadd.f32 %v1014, %v1317
        %1319 = vmatprep.mubr.bf16.mxu0 %v775
        %1320 = vmatmul.mubr.bf16.gmra.mxu0 %v774
        %v1321 = vpop.f32.mrf.mxu0
        %v1322 = vadd.f32 %v1010, %v1321
        %v1323 = vpop.f32.mrf.mxu0
        %v1324 = vadd.f32 %v1014, %v1323
        %v1325 = vpop.f32.mrf.mxu0
        %v1326 = vadd.f32 %v1010, %v1325
        %v1327 = vpop.f32.mrf.mxu0
        %v1328 = vadd.f32 %v1014, %v1327
        %1329 = vmatprep.mubr.bf16.mxu0 %v778
        %1330 = vmatmul.mubr.bf16.gmra.mxu0 %v777
        %v1331 = vpop.f32.mrf.mxu0
        %v1332 = vadd.f32 %v1010, %v1331
        %v1333 = vpop.f32.mrf.mxu0
        %v1334 = vadd.f32 %v1014, %v1333
        %v1335 = vpop.f32.mrf.mxu0
        %v1336 = vadd.f32 %v1010, %v1335
        %v1337 = vpop.f32.mrf.mxu0
        %v1338 = vadd.f32 %v1014, %v1337
        %1339 = vmatprep.mubr.bf16.mxu0 %v781
        %1340 = vmatmul.mubr.bf16.gmra.mxu0 %v780
        %v1341 = vpop.f32.mrf.mxu0
        %v1342 = vadd.f32 %v1010, %v1341
        %v1343 = vpop.f32.mrf.mxu0
        %v1344 = vadd.f32 %v1014, %v1343
        %v1345 = vpop.f32.mrf.mxu0
        %v1346 = vadd.f32 %v1010, %v1345
        %v1347 = vpop.f32.mrf.mxu0
        %v1348 = vadd.f32 %v1014, %v1347
        %1349 = vmatprep.mubr.bf16.mxu0 %v784
        %1350 = vmatmul.mubr.bf16.gmra.mxu0 %v783
        %v1351 = vpop.f32.mrf.mxu0
        %v1352 = vadd.f32 %v1010, %v1351
        %v1353 = vpop.f32.mrf.mxu0
        %v1354 = vadd.f32 %v1014, %v1353
        %v1355 = vpop.f32.mrf.mxu0
        %v1356 = vadd.f32 %v1010, %v1355
        %v1357 = vpop.f32.mrf.mxu0
        %v1358 = vadd.f32 %v1014, %v1357
        %1359 = vmatprep.mubr.bf16.mxu0 %v787
        %1360 = vmatmul.mubr.bf16.gmra.mxu0 %v786
        %v1361 = vpop.f32.mrf.mxu0
        %v1362 = vadd.f32 %v1010, %v1361
        %v1363 = vpop.f32.mrf.mxu0
        %v1364 = vadd.f32 %v1014, %v1363
        %v1365 = vpop.f32.mrf.mxu0
        %v1366 = vadd.f32 %v1010, %v1365
        %v1367 = vpop.f32.mrf.mxu0
        %v1368 = vadd.f32 %v1014, %v1367
        %1369 = vmatprep.mubr.bf16.mxu0 %v790
        %1370 = vmatmul.mubr.bf16.gmra.mxu0 %v789
        %v1371 = vpop.f32.mrf.mxu0
        %v1372 = vadd.f32 %v1010, %v1371
        %v1373 = vpop.f32.mrf.mxu0
        %v1374 = vadd.f32 %v1014, %v1373
        %v1375 = vpop.f32.mrf.mxu0
        %v1376 = vadd.f32 %v1010, %v1375
        %v1377 = vpop.f32.mrf.mxu0
        %v1378 = vadd.f32 %v1014, %v1377
        %1379 = vmatprep.mubr.bf16.mxu0 %v793
        %1380 = vmatmul.mubr.bf16.gmra.mxu0 %v792
        %v1381 = vpop.f32.mrf.mxu0
        %v1382 = vadd.f32 %v1010, %v1381
        %v1383 = vpop.f32.mrf.mxu0
        %v1384 = vadd.f32 %v1014, %v1383
        %v1385 = vpop.f32.mrf.mxu0
        %v1386 = vadd.f32 %v1010, %v1385
        %v1387 = vpop.f32.mrf.mxu0
        %v1388 = vadd.f32 %v1014, %v1387
        %1389 = vmatprep.mubr.bf16.mxu0 %v796
        %1390 = vmatmul.mubr.bf16.gmra.mxu0 %v795
        %v1391 = vpop.f32.mrf.mxu0
        %v1392 = vadd.f32 %v1010, %v1391
        %v1393 = vpop.f32.mrf.mxu0
        %v1394 = vadd.f32 %v1014, %v1393
        %v1395 = vpop.f32.mrf.mxu0
        %v1396 = vadd.f32 %v1010, %v1395
        %v1397 = vpop.f32.mrf.mxu0
        %v1398 = vadd.f32 %v1014, %v1397
        %1399 = vmatprep.mubr.bf16.mxu0 %v799
        %1400 = vmatmul.mubr.bf16.gmra.mxu0 %v798
        %v1401 = vpop.f32.mrf.mxu0
        %v1402 = vadd.f32 %v1010, %v1401
        %v1403 = vpop.f32.mrf.mxu0
        %v1404 = vadd.f32 %v1014, %v1403
        %v1405 = vpop.f32.mrf.mxu0
        %v1406 = vadd.f32 %v1010, %v1405
        %v1407 = vpop.f32.mrf.mxu0
        %v1408 = vadd.f32 %v1014, %v1407
        %1409 = vmatprep.mubr.bf16.mxu0 %v802
        %1410 = vmatmul.mubr.bf16.gmra.mxu0 %v801
        %v1411 = vpop.f32.mrf.mxu0
        %v1412 = vadd.f32 %v1010, %v1411
        %v1413 = vpop.f32.mrf.mxu0
        %v1414 = vadd.f32 %v1014, %v1413
        %v1415 = vpop.f32.mrf.mxu0
        %v1416 = vadd.f32 %v1010, %v1415
        %v1417 = vpop.f32.mrf.mxu0
        %v1418 = vadd.f32 %v1014, %v1417
        %1419 = vmatprep.mubr.bf16.mxu0 %v805
        %1420 = vmatmul.mubr.bf16.gmra.mxu0 %v804
        %v1421 = vpop.f32.mrf.mxu0
        %v1422 = vadd.f32 %v1010, %v1421
        %v1423 = vpop.f32.mrf.mxu0
        %v1424 = vadd.f32 %v1014, %v1423
        %v1425 = vpop.f32.mrf.mxu0
        %v1426 = vadd.f32 %v1010, %v1425
        %v1427 = vpop.f32.mrf.mxu0
        %v1428 = vadd.f32 %v1014, %v1427
        %1429 = vmatprep.mubr.bf16.mxu0 %v808
        %1430 = vmatmul.mubr.bf16.gmra.mxu0 %v807
        %v1431 = vpop.f32.mrf.mxu0
        %v1432 = vadd.f32 %v1010, %v1431
        %v1433 = vpop.f32.mrf.mxu0
        %v1434 = vadd.f32 %v1014, %v1433
        %v1435 = vpop.f32.mrf.mxu0
        %v1436 = vadd.f32 %v1010, %v1435
        %v1437 = vpop.f32.mrf.mxu0
        %v1438 = vadd.f32 %v1014, %v1437
        %1439 = vmatprep.mubr.bf16.mxu0 %v811
        %1440 = vmatmul.mubr.bf16.gmra.mxu0 %v810
        %v1441 = vpop.f32.mrf.mxu0
        %v1442 = vadd.f32 %v1010, %v1441
        %v1443 = vpop.f32.mrf.mxu0
        %v1444 = vadd.f32 %v1014, %v1443
        %v1445 = vpop.f32.mrf.mxu0
        %v1446 = vadd.f32 %v1010, %v1445
        %v1447 = vpop.f32.mrf.mxu0
        %v1448 = vadd.f32 %v1014, %v1447
        %1449 = vmatprep.mubr.bf16.mxu0 %v814
        %1450 = vmatmul.mubr.bf16.gmra.mxu0 %v813
        %v1451 = vpop.f32.mrf.mxu0
        %v1452 = vadd.f32 %v1010, %v1451
        %v1453 = vpop.f32.mrf.mxu0
        %v1454 = vadd.f32 %v1014, %v1453
        %v1455 = vpop.f32.mrf.mxu0
        %v1456 = vadd.f32 %v1010, %v1455
        %v1457 = vpop.f32.mrf.mxu0
        %v1458 = vadd.f32 %v1014, %v1457
        %1459 = vmatprep.mubr.bf16.mxu0 %v817
        %1460 = vmatmul.mubr.bf16.gmra.mxu0 %v816
        %v1461 = vpop.f32.mrf.mxu0
        %v1462 = vadd.f32 %v1010, %v1461
        %v1463 = vpop.f32.mrf.mxu0
        %v1464 = vadd.f32 %v1014, %v1463
        %v1465 = vpop.f32.mrf.mxu0
        %v1466 = vadd.f32 %v1010, %v1465
        %v1467 = vpop.f32.mrf.mxu0
        %v1468 = vadd.f32 %v1014, %v1467
        %1469 = vmatprep.mubr.bf16.mxu0 %v820
        %1470 = vmatmul.mubr.bf16.gmra.mxu0 %v819
        %v1471 = vpop.f32.mrf.mxu0
        %v1472 = vadd.f32 %v1010, %v1471
        %v1473 = vpop.f32.mrf.mxu0
        %v1474 = vadd.f32 %v1014, %v1473
        %v1475 = vpop.f32.mrf.mxu0
        %v1476 = vadd.f32 %v1010, %v1475
        %v1477 = vpop.f32.mrf.mxu0
        %v1478 = vadd.f32 %v1014, %v1477
        %1479 = vmatprep.mubr.bf16.mxu0 %v823
        %1480 = vmatmul.mubr.bf16.gmra.mxu0 %v822
        %v1481 = vpop.f32.mrf.mxu0
        %v1482 = vadd.f32 %v1010, %v1481
        %v1483 = vpop.f32.mrf.mxu0
        %v1484 = vadd.f32 %v1014, %v1483
        %v1485 = vpop.f32.mrf.mxu0
        %v1486 = vadd.f32 %v1010, %v1485
        %v1487 = vpop.f32.mrf.mxu0
        %v1488 = vadd.f32 %v1014, %v1487
        %1489 = vmatprep.mubr.bf16.mxu0 %v826
        %1490 = vmatmul.mubr.bf16.gmra.mxu0 %v825
        %v1491 = vpop.f32.mrf.mxu0
        %v1492 = vadd.f32 %v1010, %v1491
        %v1493 = vpop.f32.mrf.mxu0
        %v1494 = vadd.f32 %v1014, %v1493
        %v1495 = vpop.f32.mrf.mxu0
        %v1496 = vadd.f32 %v1010, %v1495
        %v1497 = vpop.f32.mrf.mxu0
        %v1498 = vadd.f32 %v1014, %v1497
        %1499 = vmatprep.mubr.bf16.mxu0 %v829
        %1500 = vmatmul.mubr.bf16.gmra.mxu0 %v828
        %v1501 = vpop.f32.mrf.mxu0
        %v1502 = vadd.f32 %v1010, %v1501
        %v1503 = vpop.f32.mrf.mxu0
        %v1504 = vadd.f32 %v1014, %v1503
        %v1505 = vpop.f32.mrf.mxu0
        %v1506 = vadd.f32 %v1010, %v1505
        %v1507 = vpop.f32.mrf.mxu0
        %v1508 = vadd.f32 %v1014, %v1507
        %1509 = vmatprep.mubr.bf16.mxu0 %v832
        %1510 = vmatmul.mubr.bf16.gmra.mxu0 %v831
        %v1511 = vpop.f32.mrf.mxu0
        %v1512 = vadd.f32 %v1010, %v1511
        %v1513 = vpop.f32.mrf.mxu0
        %v1514 = vadd.f32 %v1014, %v1513
        %v1515 = vpop.f32.mrf.mxu0
        %v1516 = vadd.f32 %v1010, %v1515
        %v1517 = vpop.f32.mrf.mxu0
        %v1518 = vadd.f32 %v1014, %v1517
        %1519 = vmatprep.mubr.bf16.mxu0 %v835
        %1520 = vmatmul.mubr.bf16.gmra.mxu0 %v834
        %v1521 = vpop.f32.mrf.mxu0
        %v1522 = vadd.f32 %v1010, %v1521
        %v1523 = vpop.f32.mrf.mxu0
        %v1524 = vadd.f32 %v1014, %v1523
        %v1525 = vpop.f32.mrf.mxu0
        %v1526 = vadd.f32 %v1010, %v1525
        %v1527 = vpop.f32.mrf.mxu0
        %v1528 = vadd.f32 %v1014, %v1527
        %1529 = vmatprep.mubr.bf16.mxu0 %v838
        %1530 = vmatmul.mubr.bf16.gmra.mxu0 %v837
        %v1531 = vpop.f32.mrf.mxu0
        %v1532 = vadd.f32 %v1010, %v1531
        %v1533 = vpop.f32.mrf.mxu0
        %v1534 = vadd.f32 %v1014, %v1533
        %v1535 = vpop.f32.mrf.mxu0
        %v1536 = vadd.f32 %v1010, %v1535
        %v1537 = vpop.f32.mrf.mxu0
        %v1538 = vadd.f32 %v1014, %v1537
        %1539 = vmatprep.mubr.bf16.mxu0 %v841
        %1540 = vmatmul.mubr.bf16.gmra.mxu0 %v840
        %v1541 = vpop.f32.mrf.mxu0
        %v1542 = vadd.f32 %v1010, %v1541
        %v1543 = vpop.f32.mrf.mxu0
        %v1544 = vadd.f32 %v1014, %v1543
        %v1545 = vpop.f32.mrf.mxu0
        %v1546 = vadd.f32 %v1010, %v1545
        %v1547 = vpop.f32.mrf.mxu0
        %v1548 = vadd.f32 %v1014, %v1547
        %1549 = vmatprep.mubr.bf16.mxu0 %v844
        %1550 = vmatmul.mubr.bf16.gmra.mxu0 %v843
        %v1551 = vpop.f32.mrf.mxu0
        %v1552 = vadd.f32 %v1010, %v1551
        %v1553 = vpop.f32.mrf.mxu0
        %v1554 = vadd.f32 %v1014, %v1553
        %v1555 = vpop.f32.mrf.mxu0
        %v1556 = vadd.f32 %v1010, %v1555
        %v1557 = vpop.f32.mrf.mxu0
        %v1558 = vadd.f32 %v1014, %v1557
        %1559 = vmatprep.mubr.bf16.mxu0 %v847
        %1560 = vmatmul.mubr.bf16.gmra.mxu0 %v846
        %v1561 = vpop.f32.mrf.mxu0
        %v1562 = vadd.f32 %v1010, %v1561
        %v1563 = vpop.f32.mrf.mxu0
        %v1564 = vadd.f32 %v1014, %v1563
        %v1565 = vpop.f32.mrf.mxu0
        %v1566 = vadd.f32 %v1010, %v1565
        %v1567 = vpop.f32.mrf.mxu0
        %v1568 = vadd.f32 %v1014, %v1567
        %1569 = vmatprep.mubr.bf16.mxu0 %v850
        %1570 = vmatmul.mubr.bf16.gmra.mxu0 %v849
        %v1571 = vpop.f32.mrf.mxu0
        %v1572 = vadd.f32 %v1010, %v1571
        %v1573 = vpop.f32.mrf.mxu0
        %v1574 = vadd.f32 %v1014, %v1573
        %v1575 = vpop.f32.mrf.mxu0
        %v1576 = vadd.f32 %v1010, %v1575
        %v1577 = vpop.f32.mrf.mxu0
        %v1578 = vadd.f32 %v1014, %v1577
        %1579 = vmatprep.mubr.bf16.mxu0 %v853
        %1580 = vmatmul.mubr.bf16.gmra.mxu0 %v852
        %v1581 = vpop.f32.mrf.mxu0
        %v1582 = vadd.f32 %v1010, %v1581
        %v1583 = vpop.f32.mrf.mxu0
        %v1584 = vadd.f32 %v1014, %v1583
        %v1585 = vpop.f32.mrf.mxu0
        %v1586 = vadd.f32 %v1010, %v1585
        %v1587 = vpop.f32.mrf.mxu0
        %v1588 = vadd.f32 %v1014, %v1587
        %1589 = vmatprep.mubr.bf16.mxu0 %v856
        %1590 = vmatmul.mubr.bf16.gmra.mxu0 %v855
        %v1591 = vpop.f32.mrf.mxu0
        %v1592 = vadd.f32 %v1010, %v1591
        %v1593 = vpop.f32.mrf.mxu0
        %v1594 = vadd.f32 %v1014, %v1593
        %v1595 = vpop.f32.mrf.mxu0
        %v1596 = vadd.f32 %v1010, %v1595
        %v1597 = vpop.f32.mrf.mxu0
        %v1598 = vadd.f32 %v1014, %v1597
        %1599 = vmatprep.mubr.bf16.mxu0 %v859
        %1600 = vmatmul.mubr.bf16.gmra.mxu0 %v858
        %v1601 = vpop.f32.mrf.mxu0
        %v1602 = vadd.f32 %v1010, %v1601
        %v1603 = vpop.f32.mrf.mxu0
        %v1604 = vadd.f32 %v1014, %v1603
        %v1605 = vpop.f32.mrf.mxu0
        %v1606 = vadd.f32 %v1010, %v1605
        %v1607 = vpop.f32.mrf.mxu0
        %v1608 = vadd.f32 %v1014, %v1607
        %1609 = vmatprep.mubr.bf16.mxu0 %v862
        %1610 = vmatmul.mubr.bf16.gmra.mxu0 %v861
        %v1611 = vpop.f32.mrf.mxu0
        %v1612 = vadd.f32 %v1010, %v1611
        %v1613 = vpop.f32.mrf.mxu0
        %v1614 = vadd.f32 %v1014, %v1613
        %v1615 = vpop.f32.mrf.mxu0
        %v1616 = vadd.f32 %v1010, %v1615
        %v1617 = vpop.f32.mrf.mxu0
        %v1618 = vadd.f32 %v1014, %v1617
        %1619 = vmatprep.mubr.bf16.mxu0 %v865
        %1620 = vmatmul.mubr.bf16.gmra.mxu0 %v864
        %v1621 = vpop.f32.mrf.mxu0
        %v1622 = vadd.f32 %v1010, %v1621
        %v1623 = vpop.f32.mrf.mxu0
        %v1624 = vadd.f32 %v1014, %v1623
        %v1625 = vpop.f32.mrf.mxu0
        %v1626 = vadd.f32 %v1010, %v1625
        %v1627 = vpop.f32.mrf.mxu0
        %v1628 = vadd.f32 %v1014, %v1627
        %1629 = vmatprep.mubr.bf16.mxu0 %v868
        %1630 = vmatmul.mubr.bf16.gmra.mxu0 %v867
        %v1631 = vpop.f32.mrf.mxu0
        %v1632 = vadd.f32 %v1010, %v1631
        %v1633 = vpop.f32.mrf.mxu0
        %v1634 = vadd.f32 %v1014, %v1633
        %v1635 = vpop.f32.mrf.mxu0
        %v1636 = vadd.f32 %v1010, %v1635
        %v1637 = vpop.f32.mrf.mxu0
        %v1638 = vadd.f32 %v1014, %v1637
        %1639 = vmatprep.mubr.bf16.mxu0 %v871
        %1640 = vmatmul.mubr.bf16.gmra.mxu0 %v870
        %v1641 = vpop.f32.mrf.mxu0
        %v1642 = vadd.f32 %v1010, %v1641
        %v1643 = vpop.f32.mrf.mxu0
        %v1644 = vadd.f32 %v1014, %v1643
        %v1645 = vpop.f32.mrf.mxu0
        %v1646 = vadd.f32 %v1010, %v1645
        %v1647 = vpop.f32.mrf.mxu0
        %v1648 = vadd.f32 %v1014, %v1647
        %1649 = vmatprep.mubr.bf16.mxu0 %v874
        %1650 = vmatmul.mubr.bf16.gmra.mxu0 %v873
        %v1651 = vpop.f32.mrf.mxu0
        %v1652 = vadd.f32 %v1010, %v1651
        %v1653 = vpop.f32.mrf.mxu0
        %v1654 = vadd.f32 %v1014, %v1653
        %v1655 = vpop.f32.mrf.mxu0
        %v1656 = vadd.f32 %v1010, %v1655
        %v1657 = vpop.f32.mrf.mxu0
        %v1658 = vadd.f32 %v1014, %v1657
        %1659 = vmatprep.mubr.bf16.mxu0 %v877
        %1660 = vmatmul.mubr.bf16.gmra.mxu0 %v876
        %v1661 = vpop.f32.mrf.mxu0
        %v1662 = vadd.f32 %v1010, %v1661
        %v1663 = vpop.f32.mrf.mxu0
        %v1664 = vadd.f32 %v1014, %v1663
        %v1665 = vpop.f32.mrf.mxu0
        %v1666 = vadd.f32 %v1010, %v1665
        %v1667 = vpop.f32.mrf.mxu0
        %v1668 = vadd.f32 %v1014, %v1667
        %1669 = vmatprep.mubr.bf16.mxu0 %v880
        %1670 = vmatmul.mubr.bf16.gmra.mxu0 %v879
        %v1671 = vpop.f32.mrf.mxu0
        %v1672 = vadd.f32 %v1010, %v1671
        %v1673 = vpop.f32.mrf.mxu0
        %v1674 = vadd.f32 %v1014, %v1673
        %v1675 = vpop.f32.mrf.mxu0
        %v1676 = vadd.f32 %v1010, %v1675
        %v1677 = vpop.f32.mrf.mxu0
        %v1678 = vadd.f32 %v1014, %v1677
        %1679 = vmatprep.mubr.bf16.mxu0 %v883
        %1680 = vmatmul.mubr.bf16.gmra.mxu0 %v882
        %v1681 = vpop.f32.mrf.mxu0
        %v1682 = vadd.f32 %v1010, %v1681
        %v1683 = vpop.f32.mrf.mxu0
        %v1684 = vadd.f32 %v1014, %v1683
        %v1685 = vpop.f32.mrf.mxu0
        %v1686 = vadd.f32 %v1010, %v1685
        %v1687 = vpop.f32.mrf.mxu0
        %v1688 = vadd.f32 %v1014, %v1687
        %1689 = vmatprep.mubr.bf16.mxu0 %v886
        %1690 = vmatmul.mubr.bf16.gmra.mxu0 %v885
        %v1691 = vpop.f32.mrf.mxu0
        %v1692 = vadd.f32 %v1010, %v1691
        %v1693 = vpop.f32.mrf.mxu0
        %v1694 = vadd.f32 %v1014, %v1693
        %v1695 = vpop.f32.mrf.mxu0
        %v1696 = vadd.f32 %v1010, %v1695
        %v1697 = vpop.f32.mrf.mxu0
        %v1698 = vadd.f32 %v1014, %v1697
        %1699 = vmatprep.mubr.bf16.mxu0 %v889
        %1700 = vmatmul.mubr.bf16.gmra.mxu0 %v888
        %v1701 = vpop.f32.mrf.mxu0
        %v1702 = vadd.f32 %v1010, %v1701
        %v1703 = vpop.f32.mrf.mxu0
        %v1704 = vadd.f32 %v1014, %v1703
        %v1705 = vpop.f32.mrf.mxu0
        %v1706 = vadd.f32 %v1010, %v1705
        %v1707 = vpop.f32.mrf.mxu0
        %v1708 = vadd.f32 %v1014, %v1707
        %1709 = vmatprep.mubr.bf16.mxu0 %v892
        %1710 = vmatmul.mubr.bf16.gmra.mxu0 %v891
        %v1711 = vpop.f32.mrf.mxu0
        %v1712 = vadd.f32 %v1010, %v1711
        %v1713 = vpop.f32.mrf.mxu0
        %v1714 = vadd.f32 %v1014, %v1713
        %v1715 = vpop.f32.mrf.mxu0
        %v1716 = vadd.f32 %v1010, %v1715
        %v1717 = vpop.f32.mrf.mxu0
        %v1718 = vadd.f32 %v1014, %v1717
        %1719 = vmatprep.mubr.bf16.mxu0 %v895
        %1720 = vmatmul.mubr.bf16.gmra.mxu0 %v894
        %v1721 = vpop.f32.mrf.mxu0
        %v1722 = vadd.f32 %v1010, %v1721
        %v1723 = vpop.f32.mrf.mxu0
        %v1724 = vadd.f32 %v1014, %v1723
        %v1725 = vpop.f32.mrf.mxu0
        %v1726 = vadd.f32 %v1010, %v1725
        %v1727 = vpop.f32.mrf.mxu0
        %v1728 = vadd.f32 %v1014, %v1727
        %1729 = vmatprep.mubr.bf16.mxu0 %v898
        %1730 = vmatmul.mubr.bf16.gmra.mxu0 %v897
        %v1731 = vpop.f32.mrf.mxu0
        %v1732 = vadd.f32 %v1010, %v1731
        %v1733 = vpop.f32.mrf.mxu0
        %v1734 = vadd.f32 %v1014, %v1733
        %v1735 = vpop.f32.mrf.mxu0
        %v1736 = vadd.f32 %v1010, %v1735
        %v1737 = vpop.f32.mrf.mxu0
        %v1738 = vadd.f32 %v1014, %v1737
        %1739 = vmatprep.mubr.bf16.mxu0 %v901
        %1740 = vmatmul.mubr.bf16.gmra.mxu0 %v900
        %v1741 = vpop.f32.mrf.mxu0
        %v1742 = vadd.f32 %v1010, %v1741
        %v1743 = vpop.f32.mrf.mxu0
        %v1744 = vadd.f32 %v1014, %v1743
        %v1745 = vpop.f32.mrf.mxu0
        %v1746 = vadd.f32 %v1010, %v1745
        %v1747 = vpop.f32.mrf.mxu0
        %v1748 = vadd.f32 %v1014, %v1747
        %1749 = vmatprep.mubr.bf16.mxu0 %v904
        %1750 = vmatmul.mubr.bf16.gmra.mxu0 %v903
        %v1751 = vpop.f32.mrf.mxu0
        %v1752 = vadd.f32 %v1010, %v1751
        %v1753 = vpop.f32.mrf.mxu0
        %v1754 = vadd.f32 %v1014, %v1753
        %v1755 = vpop.f32.mrf.mxu0
        %v1756 = vadd.f32 %v1010, %v1755
        %v1757 = vpop.f32.mrf.mxu0
        %v1758 = vadd.f32 %v1014, %v1757
        %1759 = vmatprep.mubr.bf16.mxu0 %v907
        %1760 = vmatmul.mubr.bf16.gmra.mxu0 %v906
        %v1761 = vpop.f32.mrf.mxu0
        %v1762 = vadd.f32 %v1010, %v1761
        %v1763 = vpop.f32.mrf.mxu0
        %v1764 = vadd.f32 %v1014, %v1763
        %v1765 = vpop.f32.mrf.mxu0
        %v1766 = vadd.f32 %v1010, %v1765
        %v1767 = vpop.f32.mrf.mxu0
        %v1768 = vadd.f32 %v1014, %v1767
        %1769 = vmatprep.mubr.bf16.mxu0 %v910
        %1770 = vmatmul.mubr.bf16.gmra.mxu0 %v909
        %v1771 = vpop.f32.mrf.mxu0
        %v1772 = vadd.f32 %v1010, %v1771
        %v1773 = vpop.f32.mrf.mxu0
        %v1774 = vadd.f32 %v1014, %v1773
        %v1775 = vpop.f32.mrf.mxu0
        %v1776 = vadd.f32 %v1010, %v1775
        %v1777 = vpop.f32.mrf.mxu0
        %v1778 = vadd.f32 %v1014, %v1777
        %1779 = vmatprep.mubr.bf16.mxu0 %v913
        %1780 = vmatmul.mubr.bf16.gmra.mxu0 %v912
        %v1781 = vpop.f32.mrf.mxu0
        %v1782 = vadd.f32 %v1010, %v1781
        %v1783 = vpop.f32.mrf.mxu0
        %v1784 = vadd.f32 %v1014, %v1783
        %v1785 = vpop.f32.mrf.mxu0
        %v1786 = vadd.f32 %v1010, %v1785
        %v1787 = vpop.f32.mrf.mxu0
        %v1788 = vadd.f32 %v1014, %v1787
        %1789 = vmatprep.mubr.bf16.mxu0 %v916
        %1790 = vmatmul.mubr.bf16.gmra.mxu0 %v915
        %v1791 = vpop.f32.mrf.mxu0
        %v1792 = vadd.f32 %v1010, %v1791
        %v1793 = vpop.f32.mrf.mxu0
        %v1794 = vadd.f32 %v1014, %v1793
        %v1795 = vpop.f32.mrf.mxu0
        %v1796 = vadd.f32 %v1010, %v1795
        %v1797 = vpop.f32.mrf.mxu0
        %v1798 = vadd.f32 %v1014, %v1797
        %1799 = vmatprep.mubr.bf16.mxu0 %v919
        %1800 = vmatmul.mubr.bf16.gmra.mxu0 %v918
        %v1801 = vpop.f32.mrf.mxu0
        %v1802 = vadd.f32 %v1010, %v1801
        %v1803 = vpop.f32.mrf.mxu0
        %v1804 = vadd.f32 %v1014, %v1803
        %v1805 = vpop.f32.mrf.mxu0
        %v1806 = vadd.f32 %v1010, %v1805
        %v1807 = vpop.f32.mrf.mxu0
        %v1808 = vadd.f32 %v1014, %v1807
        %1809 = vmatprep.mubr.bf16.mxu0 %v922
        %1810 = vmatmul.mubr.bf16.gmra.mxu0 %v921
        %v1811 = vpop.f32.mrf.mxu0
        %v1812 = vadd.f32 %v1010, %v1811
        %v1813 = vpop.f32.mrf.mxu0
        %v1814 = vadd.f32 %v1014, %v1813
        %v1815 = vpop.f32.mrf.mxu0
        %v1816 = vadd.f32 %v1010, %v1815
        %v1817 = vpop.f32.mrf.mxu0
        %v1818 = vadd.f32 %v1014, %v1817
        %1819 = vmatprep.mubr.bf16.mxu0 %v925
        %1820 = vmatmul.mubr.bf16.gmra.mxu0 %v924
        %v1821 = vpop.f32.mrf.mxu0
        %v1822 = vadd.f32 %v1010, %v1821
        %v1823 = vpop.f32.mrf.mxu0
        %v1824 = vadd.f32 %v1014, %v1823
        %v1825 = vpop.f32.mrf.mxu0
        %v1826 = vadd.f32 %v1010, %v1825
        %v1827 = vpop.f32.mrf.mxu0
        %v1828 = vadd.f32 %v1014, %v1827
        %1829 = vmatprep.mubr.bf16.mxu0 %v928
        %1830 = vmatmul.mubr.bf16.gmra.mxu0 %v927
        %v1831 = vpop.f32.mrf.mxu0
        %v1832 = vadd.f32 %v1010, %v1831
        %v1833 = vpop.f32.mrf.mxu0
        %v1834 = vadd.f32 %v1014, %v1833
        %v1835 = vpop.f32.mrf.mxu0
        %v1836 = vadd.f32 %v1010, %v1835
        %v1837 = vpop.f32.mrf.mxu0
        %v1838 = vadd.f32 %v1014, %v1837
        %1839 = vmatprep.mubr.bf16.mxu0 %v931
        %1840 = vmatmul.mubr.bf16.gmra.mxu0 %v930
        %v1841 = vpop.f32.mrf.mxu0
        %v1842 = vadd.f32 %v1010, %v1841
        %v1843 = vpop.f32.mrf.mxu0
        %v1844 = vadd.f32 %v1014, %v1843
        %v1845 = vpop.f32.mrf.mxu0
        %v1846 = vadd.f32 %v1010, %v1845
        %v1847 = vpop.f32.mrf.mxu0
        %v1848 = vadd.f32 %v1014, %v1847
        %1849 = vmatprep.mubr.bf16.mxu0 %v934
        %1850 = vmatmul.mubr.bf16.gmra.mxu0 %v933
        %v1851 = vpop.f32.mrf.mxu0
        %v1852 = vadd.f32 %v1010, %v1851
        %v1853 = vpop.f32.mrf.mxu0
        %v1854 = vadd.f32 %v1014, %v1853
        %v1855 = vpop.f32.mrf.mxu0
        %v1856 = vadd.f32 %v1010, %v1855
        %v1857 = vpop.f32.mrf.mxu0
        %v1858 = vadd.f32 %v1014, %v1857
        %1859 = vmatprep.mubr.bf16.mxu0 %v937
        %1860 = vmatmul.mubr.bf16.gmra.mxu0 %v936
        %v1861 = vpop.f32.mrf.mxu0
        %v1862 = vadd.f32 %v1010, %v1861
        %v1863 = vpop.f32.mrf.mxu0
        %v1864 = vadd.f32 %v1014, %v1863
        %v1865 = vpop.f32.mrf.mxu0
        %v1866 = vadd.f32 %v1010, %v1865
        %v1867 = vpop.f32.mrf.mxu0
        %v1868 = vadd.f32 %v1014, %v1867
        %1869 = vmatprep.mubr.bf16.mxu0 %v940
        %1870 = vmatmul.mubr.bf16.gmra.mxu0 %v939
        %v1871 = vpop.f32.mrf.mxu0
        %v1872 = vadd.f32 %v1010, %v1871
        %v1873 = vpop.f32.mrf.mxu0
        %v1874 = vadd.f32 %v1014, %v1873
        %v1875 = vpop.f32.mrf.mxu0
        %v1876 = vadd.f32 %v1010, %v1875
        %v1877 = vpop.f32.mrf.mxu0
        %v1878 = vadd.f32 %v1014, %v1877
        %1879 = vmatprep.mubr.bf16.mxu0 %v943
        %1880 = vmatmul.mubr.bf16.gmra.mxu0 %v942
        %v1881 = vpop.f32.mrf.mxu0
        %v1882 = vadd.f32 %v1010, %v1881
        %v1883 = vpop.f32.mrf.mxu0
        %v1884 = vadd.f32 %v1014, %v1883
        %v1885 = vpop.f32.mrf.mxu0
        %v1886 = vadd.f32 %v1010, %v1885
        %v1887 = vpop.f32.mrf.mxu0
        %v1888 = vadd.f32 %v1014, %v1887
        %1889 = vmatprep.mubr.bf16.mxu0 %v946
        %1890 = vmatmul.mubr.bf16.gmra.mxu0 %v945
        %v1891 = vpop.f32.mrf.mxu0
        %v1892 = vadd.f32 %v1010, %v1891
        %v1893 = vpop.f32.mrf.mxu0
        %v1894 = vadd.f32 %v1014, %v1893
        %v1895 = vpop.f32.mrf.mxu0
        %v1896 = vadd.f32 %v1010, %v1895
        %v1897 = vpop.f32.mrf.mxu0
        %v1898 = vadd.f32 %v1014, %v1897
        %1899 = vmatprep.mubr.bf16.mxu0 %v949
        %1900 = vmatmul.mubr.bf16.gmra.mxu0 %v948
        %v1901 = vpop.f32.mrf.mxu0
        %v1902 = vadd.f32 %v1010, %v1901
        %v1903 = vpop.f32.mrf.mxu0
        %v1904 = vadd.f32 %v1014, %v1903
        %v1905 = vpop.f32.mrf.mxu0
        %v1906 = vadd.f32 %v1010, %v1905
        %v1907 = vpop.f32.mrf.mxu0
        %v1908 = vadd.f32 %v1014, %v1907
        %1909 = vmatprep.mubr.bf16.mxu0 %v952
        %1910 = vmatmul.mubr.bf16.gmra.mxu0 %v951
        %v1911 = vpop.f32.mrf.mxu0
        %v1912 = vadd.f32 %v1010, %v1911
        %v1913 = vpop.f32.mrf.mxu0
        %v1914 = vadd.f32 %v1014, %v1913
        %v1915 = vpop.f32.mrf.mxu0
        %v1916 = vadd.f32 %v1010, %v1915
        %v1917 = vpop.f32.mrf.mxu0
        %v1918 = vadd.f32 %v1014, %v1917
        %1919 = vmatprep.mubr.bf16.mxu0 %v955
        %1920 = vmatmul.mubr.bf16.gmra.mxu0 %v954
        %v1921 = vpop.f32.mrf.mxu0
        %v1922 = vadd.f32 %v1010, %v1921
        %v1923 = vpop.f32.mrf.mxu0
        %v1924 = vadd.f32 %v1014, %v1923
        %v1925 = vpop.f32.mrf.mxu0
        %v1926 = vadd.f32 %v1010, %v1925
        %v1927 = vpop.f32.mrf.mxu0
        %v1928 = vadd.f32 %v1014, %v1927
        %1929 = vdwg.mxu0
        %1930 = vmatprep.subr.bf16.mxu0 %v1208
        %1931 = vmatpush1.bf16.msra.mxu0 %v1207
        %1932 = vmatprep.subr.bf16.mxu0 %v1206
        %1933 = vmatpush1.bf16.msra.mxu0 %v1205
        %1934 = vmatprep.subr.bf16.mxu0 %v1204
        %1935 = vmatpush1.bf16.msra.mxu0 %v1203
        %1936 = vmatprep.subr.bf16.mxu0 %v1202
        %1937 = vmatpush1.bf16.msra.mxu0 %v1201
        %1938 = vmatprep.subr.bf16.mxu0 %v1200
        %1939 = vmatpush1.bf16.msra.mxu0 %v1199
        %1940 = vmatprep.subr.bf16.mxu0 %v1198
        %1941 = vmatpush1.bf16.msra.mxu0 %v1197
        %1942 = vmatprep.subr.bf16.mxu0 %v1196
        %1943 = vmatpush1.bf16.msra.mxu0 %v1195
        %1944 = vmatprep.subr.bf16.mxu0 %v1194
        %1945 = vmatpush1.bf16.msra.mxu0 %v1193
        %1946 = vmatprep.subr.bf16.mxu0 0
        %1947 = vmatpush2.bf16.msra.mxu0 0
        %1948 = vmatprep.subr.bf16.mxu0 0
        %1949 = vmatpush2.bf16.msra.mxu0 0
        %1950 = vmatprep.subr.bf16.mxu0 0
        %1951 = vmatpush2.bf16.msra.mxu0 0
        %1952 = vmatprep.subr.bf16.mxu0 0
        %1953 = vmatpush2.bf16.msra.mxu0 0
        %1954 = vmatprep.subr.bf16.mxu0 0
        %1955 = vmatpush2.bf16.msra.mxu0 0
        %1956 = vmatprep.subr.bf16.mxu0 0
        %1957 = vmatpush2.bf16.msra.mxu0 0
        %1958 = vmatprep.subr.bf16.mxu0 0
        %1959 = vmatpush2.bf16.msra.mxu0 0
        %1960 = vmatprep.subr.bf16.mxu0 0
        %1961 = vmatpush2.bf16.msra.mxu0 0
        %1962 = vmatprep.mubr.bf16.mxu0 0
        %1963 = vmatmul.mubr.bf16.gmra.mxu0 %v767
        %v1964 = vpop.f32.mrf.mxu0
        %v1965 = vadd.f32 %v1292, %v1964
        %v1966 = vpop.f32.mrf.mxu0
        %v1967 = vadd.f32 %v1294, %v1966
        %v1968 = vpop.f32.mrf.mxu0
        %v1969 = vadd.f32 %v1296, %v1968
        %v1970 = vpop.f32.mrf.mxu0
        %v1971 = vadd.f32 %v1298, %v1970
        %1972 = vmatprep.mubr.bf16.mxu0 0
        %1973 = vmatmul.mubr.bf16.gmra.mxu0 %v770
        %v1974 = vpop.f32.mrf.mxu0
        %v1975 = vadd.f32 %v1302, %v1974
        %v1976 = vpop.f32.mrf.mxu0
        %v1977 = vadd.f32 %v1304, %v1976
        %v1978 = vpop.f32.mrf.mxu0
        %v1979 = vadd.f32 %v1306, %v1978
        %v1980 = vpop.f32.mrf.mxu0
        %v1981 = vadd.f32 %v1308, %v1980
        %1982 = vmatprep.mubr.bf16.mxu0 0
        %1983 = vmatmul.mubr.bf16.gmra.mxu0 %v773
        %v1984 = vpop.f32.mrf.mxu0
        %v1985 = vadd.f32 %v1312, %v1984
        %v1986 = vpop.f32.mrf.mxu0
        %v1987 = vadd.f32 %v1314, %v1986
        %v1988 = vpop.f32.mrf.mxu0
        %v1989 = vadd.f32 %v1316, %v1988
        %v1990 = vpop.f32.mrf.mxu0
        %v1991 = vadd.f32 %v1318, %v1990
        %1992 = vmatprep.mubr.bf16.mxu0 0
        %1993 = vmatmul.mubr.bf16.gmra.mxu0 %v776
        %v1994 = vpop.f32.mrf.mxu0
        %v1995 = vadd.f32 %v1322, %v1994
        %v1996 = vpop.f32.mrf.mxu0
        %v1997 = vadd.f32 %v1324, %v1996
        %v1998 = vpop.f32.mrf.mxu0
        %v1999 = vadd.f32 %v1326, %v1998
        %v2000 = vpop.f32.mrf.mxu0
        %v2001 = vadd.f32 %v1328, %v2000
        %2002 = vmatprep.mubr.bf16.mxu0 0
        %2003 = vmatmul.mubr.bf16.gmra.mxu0 %v779
        %v2004 = vpop.f32.mrf.mxu0
        %v2005 = vadd.f32 %v1332, %v2004
        %v2006 = vpop.f32.mrf.mxu0
        %v2007 = vadd.f32 %v1334, %v2006
        %v2008 = vpop.f32.mrf.mxu0
        %v2009 = vadd.f32 %v1336, %v2008
        %v2010 = vpop.f32.mrf.mxu0
        %v2011 = vadd.f32 %v1338, %v2010
        %2012 = vmatprep.mubr.bf16.mxu0 0
        %2013 = vmatmul.mubr.bf16.gmra.mxu0 %v782
        %v2014 = vpop.f32.mrf.mxu0
        %v2015 = vadd.f32 %v1342, %v2014
        %v2016 = vpop.f32.mrf.mxu0
        %v2017 = vadd.f32 %v1344, %v2016
        %v2018 = vpop.f32.mrf.mxu0
        %v2019 = vadd.f32 %v1346, %v2018
        %v2020 = vpop.f32.mrf.mxu0
        %v2021 = vadd.f32 %v1348, %v2020
        %2022 = vmatprep.mubr.bf16.mxu0 0
        %2023 = vmatmul.mubr.bf16.gmra.mxu0 %v785
        %v2024 = vpop.f32.mrf.mxu0
        %v2025 = vadd.f32 %v1352, %v2024
        %v2026 = vpop.f32.mrf.mxu0
        %v2027 = vadd.f32 %v1354, %v2026
        %v2028 = vpop.f32.mrf.mxu0
        %v2029 = vadd.f32 %v1356, %v2028
        %v2030 = vpop.f32.mrf.mxu0
        %v2031 = vadd.f32 %v1358, %v2030
        %2032 = vmatprep.mubr.bf16.mxu0 0
        %2033 = vmatmul.mubr.bf16.gmra.mxu0 %v788
        %v2034 = vpop.f32.mrf.mxu0
        %v2035 = vadd.f32 %v1362, %v2034
        %v2036 = vpop.f32.mrf.mxu0
        %v2037 = vadd.f32 %v1364, %v2036
        %v2038 = vpop.f32.mrf.mxu0
        %v2039 = vadd.f32 %v1366, %v2038
        %v2040 = vpop.f32.mrf.mxu0
        %v2041 = vadd.f32 %v1368, %v2040
        %2042 = vmatprep.mubr.bf16.mxu0 0
        %2043 = vmatmul.mubr.bf16.gmra.mxu0 %v791
        %v2044 = vpop.f32.mrf.mxu0
        %v2045 = vadd.f32 %v1372, %v2044
        %v2046 = vpop.f32.mrf.mxu0
        %v2047 = vadd.f32 %v1374, %v2046
        %v2048 = vpop.f32.mrf.mxu0
        %v2049 = vadd.f32 %v1376, %v2048
        %v2050 = vpop.f32.mrf.mxu0
        %v2051 = vadd.f32 %v1378, %v2050
        %2052 = vmatprep.mubr.bf16.mxu0 0
        %2053 = vmatmul.mubr.bf16.gmra.mxu0 %v794
        %v2054 = vpop.f32.mrf.mxu0
        %v2055 = vadd.f32 %v1382, %v2054
        %v2056 = vpop.f32.mrf.mxu0
        %v2057 = vadd.f32 %v1384, %v2056
        %v2058 = vpop.f32.mrf.mxu0
        %v2059 = vadd.f32 %v1386, %v2058
        %v2060 = vpop.f32.mrf.mxu0
        %v2061 = vadd.f32 %v1388, %v2060
        %2062 = vmatprep.mubr.bf16.mxu0 0
        %2063 = vmatmul.mubr.bf16.gmra.mxu0 %v797
        %v2064 = vpop.f32.mrf.mxu0
        %v2065 = vadd.f32 %v1392, %v2064
        %v2066 = vpop.f32.mrf.mxu0
        %v2067 = vadd.f32 %v1394, %v2066
        %v2068 = vpop.f32.mrf.mxu0
        %v2069 = vadd.f32 %v1396, %v2068
        %v2070 = vpop.f32.mrf.mxu0
        %v2071 = vadd.f32 %v1398, %v2070
        %2072 = vmatprep.mubr.bf16.mxu0 0
        %2073 = vmatmul.mubr.bf16.gmra.mxu0 %v800
        %v2074 = vpop.f32.mrf.mxu0
        %v2075 = vadd.f32 %v1402, %v2074
        %v2076 = vpop.f32.mrf.mxu0
        %v2077 = vadd.f32 %v1404, %v2076
        %v2078 = vpop.f32.mrf.mxu0
        %v2079 = vadd.f32 %v1406, %v2078
        %v2080 = vpop.f32.mrf.mxu0
        %v2081 = vadd.f32 %v1408, %v2080
        %2082 = vmatprep.mubr.bf16.mxu0 0
        %2083 = vmatmul.mubr.bf16.gmra.mxu0 %v803
        %v2084 = vpop.f32.mrf.mxu0
        %v2085 = vadd.f32 %v1412, %v2084
        %v2086 = vpop.f32.mrf.mxu0
        %v2087 = vadd.f32 %v1414, %v2086
        %v2088 = vpop.f32.mrf.mxu0
        %v2089 = vadd.f32 %v1416, %v2088
        %v2090 = vpop.f32.mrf.mxu0
        %v2091 = vadd.f32 %v1418, %v2090
        %2092 = vmatprep.mubr.bf16.mxu0 0
        %2093 = vmatmul.mubr.bf16.gmra.mxu0 %v806
        %v2094 = vpop.f32.mrf.mxu0
        %v2095 = vadd.f32 %v1422, %v2094
        %v2096 = vpop.f32.mrf.mxu0
        %v2097 = vadd.f32 %v1424, %v2096
        %v2098 = vpop.f32.mrf.mxu0
        %v2099 = vadd.f32 %v1426, %v2098
        %v2100 = vpop.f32.mrf.mxu0
        %v2101 = vadd.f32 %v1428, %v2100
        %2102 = vmatprep.mubr.bf16.mxu0 0
        %2103 = vmatmul.mubr.bf16.gmra.mxu0 %v809
        %v2104 = vpop.f32.mrf.mxu0
        %v2105 = vadd.f32 %v1432, %v2104
        %v2106 = vpop.f32.mrf.mxu0
        %v2107 = vadd.f32 %v1434, %v2106
        %v2108 = vpop.f32.mrf.mxu0
        %v2109 = vadd.f32 %v1436, %v2108
        %v2110 = vpop.f32.mrf.mxu0
        %v2111 = vadd.f32 %v1438, %v2110
        %2112 = vmatprep.mubr.bf16.mxu0 0
        %2113 = vmatmul.mubr.bf16.gmra.mxu0 %v812
        %v2114 = vpop.f32.mrf.mxu0
        %v2115 = vadd.f32 %v1442, %v2114
        %v2116 = vpop.f32.mrf.mxu0
        %v2117 = vadd.f32 %v1444, %v2116
        %v2118 = vpop.f32.mrf.mxu0
        %v2119 = vadd.f32 %v1446, %v2118
        %v2120 = vpop.f32.mrf.mxu0
        %v2121 = vadd.f32 %v1448, %v2120
        %2122 = vmatprep.mubr.bf16.mxu0 0
        %2123 = vmatmul.mubr.bf16.gmra.mxu0 %v815
        %v2124 = vpop.f32.mrf.mxu0
        %v2125 = vadd.f32 %v1452, %v2124
        %v2126 = vpop.f32.mrf.mxu0
        %v2127 = vadd.f32 %v1454, %v2126
        %v2128 = vpop.f32.mrf.mxu0
        %v2129 = vadd.f32 %v1456, %v2128
        %v2130 = vpop.f32.mrf.mxu0
        %v2131 = vadd.f32 %v1458, %v2130
        %2132 = vmatprep.mubr.bf16.mxu0 0
        %2133 = vmatmul.mubr.bf16.gmra.mxu0 %v818
        %v2134 = vpop.f32.mrf.mxu0
        %v2135 = vadd.f32 %v1462, %v2134
        %v2136 = vpop.f32.mrf.mxu0
        %v2137 = vadd.f32 %v1464, %v2136
        %v2138 = vpop.f32.mrf.mxu0
        %v2139 = vadd.f32 %v1466, %v2138
        %v2140 = vpop.f32.mrf.mxu0
        %v2141 = vadd.f32 %v1468, %v2140
        %2142 = vmatprep.mubr.bf16.mxu0 0
        %2143 = vmatmul.mubr.bf16.gmra.mxu0 %v821
        %v2144 = vpop.f32.mrf.mxu0
        %v2145 = vadd.f32 %v1472, %v2144
        %v2146 = vpop.f32.mrf.mxu0
        %v2147 = vadd.f32 %v1474, %v2146
        %v2148 = vpop.f32.mrf.mxu0
        %v2149 = vadd.f32 %v1476, %v2148
        %v2150 = vpop.f32.mrf.mxu0
        %v2151 = vadd.f32 %v1478, %v2150
        %2152 = vmatprep.mubr.bf16.mxu0 0
        %2153 = vmatmul.mubr.bf16.gmra.mxu0 %v824
        %v2154 = vpop.f32.mrf.mxu0
        %v2155 = vadd.f32 %v1482, %v2154
        %v2156 = vpop.f32.mrf.mxu0
        %v2157 = vadd.f32 %v1484, %v2156
        %v2158 = vpop.f32.mrf.mxu0
        %v2159 = vadd.f32 %v1486, %v2158
        %v2160 = vpop.f32.mrf.mxu0
        %v2161 = vadd.f32 %v1488, %v2160
        %2162 = vmatprep.mubr.bf16.mxu0 0
        %2163 = vmatmul.mubr.bf16.gmra.mxu0 %v827
        %v2164 = vpop.f32.mrf.mxu0
        %v2165 = vadd.f32 %v1492, %v2164
        %v2166 = vpop.f32.mrf.mxu0
        %v2167 = vadd.f32 %v1494, %v2166
        %v2168 = vpop.f32.mrf.mxu0
        %v2169 = vadd.f32 %v1496, %v2168
        %v2170 = vpop.f32.mrf.mxu0
        %v2171 = vadd.f32 %v1498, %v2170
        %2172 = vmatprep.mubr.bf16.mxu0 0
        %2173 = vmatmul.mubr.bf16.gmra.mxu0 %v830
        %v2174 = vpop.f32.mrf.mxu0
        %v2175 = vadd.f32 %v1502, %v2174
        %v2176 = vpop.f32.mrf.mxu0
        %v2177 = vadd.f32 %v1504, %v2176
        %v2178 = vpop.f32.mrf.mxu0
        %v2179 = vadd.f32 %v1506, %v2178
        %v2180 = vpop.f32.mrf.mxu0
        %v2181 = vadd.f32 %v1508, %v2180
        %2182 = vmatprep.mubr.bf16.mxu0 0
        %2183 = vmatmul.mubr.bf16.gmra.mxu0 %v833
        %v2184 = vpop.f32.mrf.mxu0
        %v2185 = vadd.f32 %v1512, %v2184
        %v2186 = vpop.f32.mrf.mxu0
        %v2187 = vadd.f32 %v1514, %v2186
        %v2188 = vpop.f32.mrf.mxu0
        %v2189 = vadd.f32 %v1516, %v2188
        %v2190 = vpop.f32.mrf.mxu0
        %v2191 = vadd.f32 %v1518, %v2190
        %2192 = vmatprep.mubr.bf16.mxu0 0
        %2193 = vmatmul.mubr.bf16.gmra.mxu0 %v836
        %v2194 = vpop.f32.mrf.mxu0
        %v2195 = vadd.f32 %v1522, %v2194
        %v2196 = vpop.f32.mrf.mxu0
        %v2197 = vadd.f32 %v1524, %v2196
        %v2198 = vpop.f32.mrf.mxu0
        %v2199 = vadd.f32 %v1526, %v2198
        %v2200 = vpop.f32.mrf.mxu0
        %v2201 = vadd.f32 %v1528, %v2200
        %2202 = vmatprep.mubr.bf16.mxu0 0
        %2203 = vmatmul.mubr.bf16.gmra.mxu0 %v839
        %v2204 = vpop.f32.mrf.mxu0
        %v2205 = vadd.f32 %v1532, %v2204
        %v2206 = vpop.f32.mrf.mxu0
        %v2207 = vadd.f32 %v1534, %v2206
        %v2208 = vpop.f32.mrf.mxu0
        %v2209 = vadd.f32 %v1536, %v2208
        %v2210 = vpop.f32.mrf.mxu0
        %v2211 = vadd.f32 %v1538, %v2210
        %2212 = vmatprep.mubr.bf16.mxu0 0
        %2213 = vmatmul.mubr.bf16.gmra.mxu0 %v842
        %v2214 = vpop.f32.mrf.mxu0
        %v2215 = vadd.f32 %v1542, %v2214
        %v2216 = vpop.f32.mrf.mxu0
        %v2217 = vadd.f32 %v1544, %v2216
        %v2218 = vpop.f32.mrf.mxu0
        %v2219 = vadd.f32 %v1546, %v2218
        %v2220 = vpop.f32.mrf.mxu0
        %v2221 = vadd.f32 %v1548, %v2220
        %2222 = vmatprep.mubr.bf16.mxu0 0
        %2223 = vmatmul.mubr.bf16.gmra.mxu0 %v845
        %v2224 = vpop.f32.mrf.mxu0
        %v2225 = vadd.f32 %v1552, %v2224
        %v2226 = vpop.f32.mrf.mxu0
        %v2227 = vadd.f32 %v1554, %v2226
        %v2228 = vpop.f32.mrf.mxu0
        %v2229 = vadd.f32 %v1556, %v2228
        %v2230 = vpop.f32.mrf.mxu0
        %v2231 = vadd.f32 %v1558, %v2230
        %2232 = vmatprep.mubr.bf16.mxu0 0
        %2233 = vmatmul.mubr.bf16.gmra.mxu0 %v848
        %v2234 = vpop.f32.mrf.mxu0
        %v2235 = vadd.f32 %v1562, %v2234
        %v2236 = vpop.f32.mrf.mxu0
        %v2237 = vadd.f32 %v1564, %v2236
        %v2238 = vpop.f32.mrf.mxu0
        %v2239 = vadd.f32 %v1566, %v2238
        %v2240 = vpop.f32.mrf.mxu0
        %v2241 = vadd.f32 %v1568, %v2240
        %2242 = vmatprep.mubr.bf16.mxu0 0
        %2243 = vmatmul.mubr.bf16.gmra.mxu0 %v851
        %v2244 = vpop.f32.mrf.mxu0
        %v2245 = vadd.f32 %v1572, %v2244
        %v2246 = vpop.f32.mrf.mxu0
        %v2247 = vadd.f32 %v1574, %v2246
        %v2248 = vpop.f32.mrf.mxu0
        %v2249 = vadd.f32 %v1576, %v2248
        %v2250 = vpop.f32.mrf.mxu0
        %v2251 = vadd.f32 %v1578, %v2250
        %2252 = vmatprep.mubr.bf16.mxu0 0
        %2253 = vmatmul.mubr.bf16.gmra.mxu0 %v854
        %v2254 = vpop.f32.mrf.mxu0
        %v2255 = vadd.f32 %v1582, %v2254
        %v2256 = vpop.f32.mrf.mxu0
        %v2257 = vadd.f32 %v1584, %v2256
        %v2258 = vpop.f32.mrf.mxu0
        %v2259 = vadd.f32 %v1586, %v2258
        %v2260 = vpop.f32.mrf.mxu0
        %v2261 = vadd.f32 %v1588, %v2260
        %2262 = vmatprep.mubr.bf16.mxu0 0
        %2263 = vmatmul.mubr.bf16.gmra.mxu0 %v857
        %v2264 = vpop.f32.mrf.mxu0
        %v2265 = vadd.f32 %v1592, %v2264
        %v2266 = vpop.f32.mrf.mxu0
        %v2267 = vadd.f32 %v1594, %v2266
        %v2268 = vpop.f32.mrf.mxu0
        %v2269 = vadd.f32 %v1596, %v2268
        %v2270 = vpop.f32.mrf.mxu0
        %v2271 = vadd.f32 %v1598, %v2270
        %2272 = vmatprep.mubr.bf16.mxu0 0
        %2273 = vmatmul.mubr.bf16.gmra.mxu0 %v860
        %v2274 = vpop.f32.mrf.mxu0
        %v2275 = vadd.f32 %v1602, %v2274
        %v2276 = vpop.f32.mrf.mxu0
        %v2277 = vadd.f32 %v1604, %v2276
        %v2278 = vpop.f32.mrf.mxu0
        %v2279 = vadd.f32 %v1606, %v2278
        %v2280 = vpop.f32.mrf.mxu0
        %v2281 = vadd.f32 %v1608, %v2280
        %2282 = vmatprep.mubr.bf16.mxu0 0
        %2283 = vmatmul.mubr.bf16.gmra.mxu0 %v863
        %v2284 = vpop.f32.mrf.mxu0
        %v2285 = vadd.f32 %v1612, %v2284
        %v2286 = vpop.f32.mrf.mxu0
        %v2287 = vadd.f32 %v1614, %v2286
        %v2288 = vpop.f32.mrf.mxu0
        %v2289 = vadd.f32 %v1616, %v2288
        %v2290 = vpop.f32.mrf.mxu0
        %v2291 = vadd.f32 %v1618, %v2290
        %2292 = vmatprep.mubr.bf16.mxu0 0
        %2293 = vmatmul.mubr.bf16.gmra.mxu0 %v866
        %v2294 = vpop.f32.mrf.mxu0
        %v2295 = vadd.f32 %v1622, %v2294
        %v2296 = vpop.f32.mrf.mxu0
        %v2297 = vadd.f32 %v1624, %v2296
        %v2298 = vpop.f32.mrf.mxu0
        %v2299 = vadd.f32 %v1626, %v2298
        %v2300 = vpop.f32.mrf.mxu0
        %v2301 = vadd.f32 %v1628, %v2300
        %2302 = vmatprep.mubr.bf16.mxu0 0
        %2303 = vmatmul.mubr.bf16.gmra.mxu0 %v869
        %v2304 = vpop.f32.mrf.mxu0
        %v2305 = vadd.f32 %v1632, %v2304
        %v2306 = vpop.f32.mrf.mxu0
        %v2307 = vadd.f32 %v1634, %v2306
        %v2308 = vpop.f32.mrf.mxu0
        %v2309 = vadd.f32 %v1636, %v2308
        %v2310 = vpop.f32.mrf.mxu0
        %v2311 = vadd.f32 %v1638, %v2310
        %2312 = vmatprep.mubr.bf16.mxu0 0
        %2313 = vmatmul.mubr.bf16.gmra.mxu0 %v872
        %v2314 = vpop.f32.mrf.mxu0
        %v2315 = vadd.f32 %v1642, %v2314
        %v2316 = vpop.f32.mrf.mxu0
        %v2317 = vadd.f32 %v1644, %v2316
        %v2318 = vpop.f32.mrf.mxu0
        %v2319 = vadd.f32 %v1646, %v2318
        %v2320 = vpop.f32.mrf.mxu0
        %v2321 = vadd.f32 %v1648, %v2320
        %2322 = vmatprep.mubr.bf16.mxu0 0
        %2323 = vmatmul.mubr.bf16.gmra.mxu0 %v875
        %v2324 = vpop.f32.mrf.mxu0
        %v2325 = vadd.f32 %v1652, %v2324
        %v2326 = vpop.f32.mrf.mxu0
        %v2327 = vadd.f32 %v1654, %v2326
        %v2328 = vpop.f32.mrf.mxu0
        %v2329 = vadd.f32 %v1656, %v2328
        %v2330 = vpop.f32.mrf.mxu0
        %v2331 = vadd.f32 %v1658, %v2330
        %2332 = vmatprep.mubr.bf16.mxu0 0
        %2333 = vmatmul.mubr.bf16.gmra.mxu0 %v878
        %v2334 = vpop.f32.mrf.mxu0
        %v2335 = vadd.f32 %v1662, %v2334
        %v2336 = vpop.f32.mrf.mxu0
        %v2337 = vadd.f32 %v1664, %v2336
        %v2338 = vpop.f32.mrf.mxu0
        %v2339 = vadd.f32 %v1666, %v2338
        %v2340 = vpop.f32.mrf.mxu0
        %v2341 = vadd.f32 %v1668, %v2340
        %2342 = vmatprep.mubr.bf16.mxu0 0
        %2343 = vmatmul.mubr.bf16.gmra.mxu0 %v881
        %v2344 = vpop.f32.mrf.mxu0
        %v2345 = vadd.f32 %v1672, %v2344
        %v2346 = vpop.f32.mrf.mxu0
        %v2347 = vadd.f32 %v1674, %v2346
        %v2348 = vpop.f32.mrf.mxu0
        %v2349 = vadd.f32 %v1676, %v2348
        %v2350 = vpop.f32.mrf.mxu0
        %v2351 = vadd.f32 %v1678, %v2350
        %2352 = vmatprep.mubr.bf16.mxu0 0
        %2353 = vmatmul.mubr.bf16.gmra.mxu0 %v884
        %v2354 = vpop.f32.mrf.mxu0
        %v2355 = vadd.f32 %v1682, %v2354
        %v2356 = vpop.f32.mrf.mxu0
        %v2357 = vadd.f32 %v1684, %v2356
        %v2358 = vpop.f32.mrf.mxu0
        %v2359 = vadd.f32 %v1686, %v2358
        %v2360 = vpop.f32.mrf.mxu0
        %v2361 = vadd.f32 %v1688, %v2360
        %2362 = vmatprep.mubr.bf16.mxu0 0
        %2363 = vmatmul.mubr.bf16.gmra.mxu0 %v887
        %v2364 = vpop.f32.mrf.mxu0
        %v2365 = vadd.f32 %v1692, %v2364
        %v2366 = vpop.f32.mrf.mxu0
        %v2367 = vadd.f32 %v1694, %v2366
        %v2368 = vpop.f32.mrf.mxu0
        %v2369 = vadd.f32 %v1696, %v2368
        %v2370 = vpop.f32.mrf.mxu0
        %v2371 = vadd.f32 %v1698, %v2370
        %2372 = vmatprep.mubr.bf16.mxu0 0
        %2373 = vmatmul.mubr.bf16.gmra.mxu0 %v890
        %v2374 = vpop.f32.mrf.mxu0
        %v2375 = vadd.f32 %v1702, %v2374
        %v2376 = vpop.f32.mrf.mxu0
        %v2377 = vadd.f32 %v1704, %v2376
        %v2378 = vpop.f32.mrf.mxu0
        %v2379 = vadd.f32 %v1706, %v2378
        %v2380 = vpop.f32.mrf.mxu0
        %v2381 = vadd.f32 %v1708, %v2380
        %2382 = vmatprep.mubr.bf16.mxu0 0
        %2383 = vmatmul.mubr.bf16.gmra.mxu0 %v893
        %v2384 = vpop.f32.mrf.mxu0
        %v2385 = vadd.f32 %v1712, %v2384
        %v2386 = vpop.f32.mrf.mxu0
        %v2387 = vadd.f32 %v1714, %v2386
        %v2388 = vpop.f32.mrf.mxu0
        %v2389 = vadd.f32 %v1716, %v2388
        %v2390 = vpop.f32.mrf.mxu0
        %v2391 = vadd.f32 %v1718, %v2390
        %2392 = vmatprep.mubr.bf16.mxu0 0
        %2393 = vmatmul.mubr.bf16.gmra.mxu0 %v896
        %v2394 = vpop.f32.mrf.mxu0
        %v2395 = vadd.f32 %v1722, %v2394
        %v2396 = vpop.f32.mrf.mxu0
        %v2397 = vadd.f32 %v1724, %v2396
        %v2398 = vpop.f32.mrf.mxu0
        %v2399 = vadd.f32 %v1726, %v2398
        %v2400 = vpop.f32.mrf.mxu0
        %v2401 = vadd.f32 %v1728, %v2400
        %2402 = vmatprep.mubr.bf16.mxu0 0
        %2403 = vmatmul.mubr.bf16.gmra.mxu0 %v899
        %v2404 = vpop.f32.mrf.mxu0
        %v2405 = vadd.f32 %v1732, %v2404
        %v2406 = vpop.f32.mrf.mxu0
        %v2407 = vadd.f32 %v1734, %v2406
        %v2408 = vpop.f32.mrf.mxu0
        %v2409 = vadd.f32 %v1736, %v2408
        %v2410 = vpop.f32.mrf.mxu0
        %v2411 = vadd.f32 %v1738, %v2410
        %2412 = vmatprep.mubr.bf16.mxu0 0
        %2413 = vmatmul.mubr.bf16.gmra.mxu0 %v902
        %v2414 = vpop.f32.mrf.mxu0
        %v2415 = vadd.f32 %v1742, %v2414
        %v2416 = vpop.f32.mrf.mxu0
        %v2417 = vadd.f32 %v1744, %v2416
        %v2418 = vpop.f32.mrf.mxu0
        %v2419 = vadd.f32 %v1746, %v2418
        %v2420 = vpop.f32.mrf.mxu0
        %v2421 = vadd.f32 %v1748, %v2420
        %2422 = vmatprep.mubr.bf16.mxu0 0
        %2423 = vmatmul.mubr.bf16.gmra.mxu0 %v905
        %v2424 = vpop.f32.mrf.mxu0
        %v2425 = vadd.f32 %v1752, %v2424
        %v2426 = vpop.f32.mrf.mxu0
        %v2427 = vadd.f32 %v1754, %v2426
        %v2428 = vpop.f32.mrf.mxu0
        %v2429 = vadd.f32 %v1756, %v2428
        %v2430 = vpop.f32.mrf.mxu0
        %v2431 = vadd.f32 %v1758, %v2430
        %2432 = vmatprep.mubr.bf16.mxu0 0
        %2433 = vmatmul.mubr.bf16.gmra.mxu0 %v908
        %v2434 = vpop.f32.mrf.mxu0
        %v2435 = vadd.f32 %v1762, %v2434
        %v2436 = vpop.f32.mrf.mxu0
        %v2437 = vadd.f32 %v1764, %v2436
        %v2438 = vpop.f32.mrf.mxu0
        %v2439 = vadd.f32 %v1766, %v2438
        %v2440 = vpop.f32.mrf.mxu0
        %v2441 = vadd.f32 %v1768, %v2440
        %2442 = vmatprep.mubr.bf16.mxu0 0
        %2443 = vmatmul.mubr.bf16.gmra.mxu0 %v911
        %v2444 = vpop.f32.mrf.mxu0
        %v2445 = vadd.f32 %v1772, %v2444
        %v2446 = vpop.f32.mrf.mxu0
        %v2447 = vadd.f32 %v1774, %v2446
        %v2448 = vpop.f32.mrf.mxu0
        %v2449 = vadd.f32 %v1776, %v2448
        %v2450 = vpop.f32.mrf.mxu0
        %v2451 = vadd.f32 %v1778, %v2450
        %2452 = vmatprep.mubr.bf16.mxu0 0
        %2453 = vmatmul.mubr.bf16.gmra.mxu0 %v914
        %v2454 = vpop.f32.mrf.mxu0
        %v2455 = vadd.f32 %v1782, %v2454
        %v2456 = vpop.f32.mrf.mxu0
        %v2457 = vadd.f32 %v1784, %v2456
        %v2458 = vpop.f32.mrf.mxu0
        %v2459 = vadd.f32 %v1786, %v2458
        %v2460 = vpop.f32.mrf.mxu0
        %v2461 = vadd.f32 %v1788, %v2460
        %2462 = vmatprep.mubr.bf16.mxu0 0
        %2463 = vmatmul.mubr.bf16.gmra.mxu0 %v917
        %v2464 = vpop.f32.mrf.mxu0
        %v2465 = vadd.f32 %v1792, %v2464
        %v2466 = vpop.f32.mrf.mxu0
        %v2467 = vadd.f32 %v1794, %v2466
        %v2468 = vpop.f32.mrf.mxu0
        %v2469 = vadd.f32 %v1796, %v2468
        %v2470 = vpop.f32.mrf.mxu0
        %v2471 = vadd.f32 %v1798, %v2470
        %2472 = vmatprep.mubr.bf16.mxu0 0
        %2473 = vmatmul.mubr.bf16.gmra.mxu0 %v920
        %v2474 = vpop.f32.mrf.mxu0
        %v2475 = vadd.f32 %v1802, %v2474
        %v2476 = vpop.f32.mrf.mxu0
        %v2477 = vadd.f32 %v1804, %v2476
        %v2478 = vpop.f32.mrf.mxu0
        %v2479 = vadd.f32 %v1806, %v2478
        %v2480 = vpop.f32.mrf.mxu0
        %v2481 = vadd.f32 %v1808, %v2480
        %2482 = vmatprep.mubr.bf16.mxu0 0
        %2483 = vmatmul.mubr.bf16.gmra.mxu0 %v923
        %v2484 = vpop.f32.mrf.mxu0
        %v2485 = vadd.f32 %v1812, %v2484
        %v2486 = vpop.f32.mrf.mxu0
        %v2487 = vadd.f32 %v1814, %v2486
        %v2488 = vpop.f32.mrf.mxu0
        %v2489 = vadd.f32 %v1816, %v2488
        %v2490 = vpop.f32.mrf.mxu0
        %v2491 = vadd.f32 %v1818, %v2490
        %2492 = vmatprep.mubr.bf16.mxu0 0
        %2493 = vmatmul.mubr.bf16.gmra.mxu0 %v926
        %v2494 = vpop.f32.mrf.mxu0
        %v2495 = vadd.f32 %v1822, %v2494
        %v2496 = vpop.f32.mrf.mxu0
        %v2497 = vadd.f32 %v1824, %v2496
        %v2498 = vpop.f32.mrf.mxu0
        %v2499 = vadd.f32 %v1826, %v2498
        %v2500 = vpop.f32.mrf.mxu0
        %v2501 = vadd.f32 %v1828, %v2500
        %2502 = vmatprep.mubr.bf16.mxu0 0
        %2503 = vmatmul.mubr.bf16.gmra.mxu0 %v929
        %v2504 = vpop.f32.mrf.mxu0
        %v2505 = vadd.f32 %v1832, %v2504
        %v2506 = vpop.f32.mrf.mxu0
        %v2507 = vadd.f32 %v1834, %v2506
        %v2508 = vpop.f32.mrf.mxu0
        %v2509 = vadd.f32 %v1836, %v2508
        %v2510 = vpop.f32.mrf.mxu0
        %v2511 = vadd.f32 %v1838, %v2510
        %2512 = vmatprep.mubr.bf16.mxu0 0
        %2513 = vmatmul.mubr.bf16.gmra.mxu0 %v932
        %v2514 = vpop.f32.mrf.mxu0
        %v2515 = vadd.f32 %v1842, %v2514
        %v2516 = vpop.f32.mrf.mxu0
        %v2517 = vadd.f32 %v1844, %v2516
        %v2518 = vpop.f32.mrf.mxu0
        %v2519 = vadd.f32 %v1846, %v2518
        %v2520 = vpop.f32.mrf.mxu0
        %v2521 = vadd.f32 %v1848, %v2520
        %2522 = vmatprep.mubr.bf16.mxu0 0
        %2523 = vmatmul.mubr.bf16.gmra.mxu0 %v935
        %v2524 = vpop.f32.mrf.mxu0
        %v2525 = vadd.f32 %v1852, %v2524
        %v2526 = vpop.f32.mrf.mxu0
        %v2527 = vadd.f32 %v1854, %v2526
        %v2528 = vpop.f32.mrf.mxu0
        %v2529 = vadd.f32 %v1856, %v2528
        %v2530 = vpop.f32.mrf.mxu0
        %v2531 = vadd.f32 %v1858, %v2530
        %2532 = vmatprep.mubr.bf16.mxu0 0
        %2533 = vmatmul.mubr.bf16.gmra.mxu0 %v938
        %v2534 = vpop.f32.mrf.mxu0
        %v2535 = vadd.f32 %v1862, %v2534
        %v2536 = vpop.f32.mrf.mxu0
        %v2537 = vadd.f32 %v1864, %v2536
        %v2538 = vpop.f32.mrf.mxu0
        %v2539 = vadd.f32 %v1866, %v2538
        %v2540 = vpop.f32.mrf.mxu0
        %v2541 = vadd.f32 %v1868, %v2540
        %2542 = vmatprep.mubr.bf16.mxu0 0
        %2543 = vmatmul.mubr.bf16.gmra.mxu0 %v941
        %v2544 = vpop.f32.mrf.mxu0
        %v2545 = vadd.f32 %v1872, %v2544
        %v2546 = vpop.f32.mrf.mxu0
        %v2547 = vadd.f32 %v1874, %v2546
        %v2548 = vpop.f32.mrf.mxu0
        %v2549 = vadd.f32 %v1876, %v2548
        %v2550 = vpop.f32.mrf.mxu0
        %v2551 = vadd.f32 %v1878, %v2550
        %2552 = vmatprep.mubr.bf16.mxu0 0
        %2553 = vmatmul.mubr.bf16.gmra.mxu0 %v944
        %v2554 = vpop.f32.mrf.mxu0
        %v2555 = vadd.f32 %v1882, %v2554
        %v2556 = vpop.f32.mrf.mxu0
        %v2557 = vadd.f32 %v1884, %v2556
        %v2558 = vpop.f32.mrf.mxu0
        %v2559 = vadd.f32 %v1886, %v2558
        %v2560 = vpop.f32.mrf.mxu0
        %v2561 = vadd.f32 %v1888, %v2560
        %2562 = vmatprep.mubr.bf16.mxu0 0
        %2563 = vmatmul.mubr.bf16.gmra.mxu0 %v947
        %v2564 = vpop.f32.mrf.mxu0
        %v2565 = vadd.f32 %v1892, %v2564
        %v2566 = vpop.f32.mrf.mxu0
        %v2567 = vadd.f32 %v1894, %v2566
        %v2568 = vpop.f32.mrf.mxu0
        %v2569 = vadd.f32 %v1896, %v2568
        %v2570 = vpop.f32.mrf.mxu0
        %v2571 = vadd.f32 %v1898, %v2570
        %2572 = vmatprep.mubr.bf16.mxu0 0
        %2573 = vmatmul.mubr.bf16.gmra.mxu0 %v950
        %v2574 = vpop.f32.mrf.mxu0
        %v2575 = vadd.f32 %v1902, %v2574
        %v2576 = vpop.f32.mrf.mxu0
        %v2577 = vadd.f32 %v1904, %v2576
        %v2578 = vpop.f32.mrf.mxu0
        %v2579 = vadd.f32 %v1906, %v2578
        %v2580 = vpop.f32.mrf.mxu0
        %v2581 = vadd.f32 %v1908, %v2580
        %2582 = vmatprep.mubr.bf16.mxu0 0
        %2583 = vmatmul.mubr.bf16.gmra.mxu0 %v953
        %v2584 = vpop.f32.mrf.mxu0
        %v2585 = vadd.f32 %v1912, %v2584
        %v2586 = vpop.f32.mrf.mxu0
        %v2587 = vadd.f32 %v1914, %v2586
        %v2588 = vpop.f32.mrf.mxu0
        %v2589 = vadd.f32 %v1916, %v2588
        %v2590 = vpop.f32.mrf.mxu0
        %v2591 = vadd.f32 %v1918, %v2590
        %2592 = vmatprep.mubr.bf16.mxu0 0
        %2593 = vmatmul.mubr.bf16.gmra.mxu0 %v956
        %v2594 = vpop.f32.mrf.mxu0
        %v2595 = vadd.f32 %v1922, %v2594
        %v2596 = vpop.f32.mrf.mxu0
        %v2597 = vadd.f32 %v1924, %v2596
        %v2598 = vpop.f32.mrf.mxu0
        %v2599 = vadd.f32 %v1926, %v2598
        %v2600 = vpop.f32.mrf.mxu0
        %v2601 = vadd.f32 %v1928, %v2600
        %2602 = vdwg.mxu0
        %v2603 = vmin.f32 %v1965, 0.0
        %v2604 = vmin.f32 %v1967, 0.0
        %v2605 = vmin.f32 %v1969, 0.0
        %v2606 = vmin.f32 %v1971, 0.0
        %v2607 = vmin.f32 %v1975, 0.0
        %v2608 = vmin.f32 %v1977, 0.0
        %v2609 = vmin.f32 %v1979, 0.0
        %v2610 = vmin.f32 %v1981, 0.0
        %v2611 = vmin.f32 %v1985, 0.0
        %v2612 = vmin.f32 %v1987, 0.0
        %v2613 = vmin.f32 %v1989, 0.0
        %v2614 = vmin.f32 %v1991, 0.0
        %v2615 = vmin.f32 %v1995, 0.0
        %v2616 = vmin.f32 %v1997, 0.0
        %v2617 = vmin.f32 %v1999, 0.0
        %v2618 = vmin.f32 %v2001, 0.0
        %v2619 = vmin.f32 %v2005, 0.0
        %v2620 = vmin.f32 %v2007, 0.0
        %v2621 = vmin.f32 %v2009, 0.0
        %v2622 = vmin.f32 %v2011, 0.0
        %v2623 = vmin.f32 %v2015, 0.0
        %v2624 = vmin.f32 %v2017, 0.0
        %v2625 = vmin.f32 %v2019, 0.0
        %v2626 = vmin.f32 %v2021, 0.0
        %v2627 = vmin.f32 %v2025, 0.0
        %v2628 = vmin.f32 %v2027, 0.0
        %v2629 = vmin.f32 %v2029, 0.0
        %v2630 = vmin.f32 %v2031, 0.0
        %v2631 = vmin.f32 %v2035, 0.0
        %v2632 = vmin.f32 %v2037, 0.0
        %v2633 = vmin.f32 %v2039, 0.0
        %v2634 = vmin.f32 %v2041, 0.0
        %v2635 = vmin.f32 %v2045, 0.0
        %v2636 = vmin.f32 %v2047, 0.0
        %v2637 = vmin.f32 %v2049, 0.0
        %v2638 = vmin.f32 %v2051, 0.0
        %v2639 = vmin.f32 %v2055, 0.0
        %v2640 = vmin.f32 %v2057, 0.0
        %v2641 = vmin.f32 %v2059, 0.0
        %v2642 = vmin.f32 %v2061, 0.0
        %v2643 = vmin.f32 %v2065, 0.0
        %v2644 = vmin.f32 %v2067, 0.0
        %v2645 = vmin.f32 %v2069, 0.0
        %v2646 = vmin.f32 %v2071, 0.0
        %v2647 = vmin.f32 %v2075, 0.0
        %v2648 = vmin.f32 %v2077, 0.0
        %v2649 = vmin.f32 %v2079, 0.0
        %v2650 = vmin.f32 %v2081, 0.0
        %v2651 = vmin.f32 %v2085, 0.0
        %v2652 = vmin.f32 %v2087, 0.0
        %v2653 = vmin.f32 %v2089, 0.0
        %v2654 = vmin.f32 %v2091, 0.0
        %v2655 = vmin.f32 %v2095, 0.0
        %v2656 = vmin.f32 %v2097, 0.0
        %v2657 = vmin.f32 %v2099, 0.0
        %v2658 = vmin.f32 %v2101, 0.0
        %v2659 = vmin.f32 %v2105, 0.0
        %v2660 = vmin.f32 %v2107, 0.0
        %v2661 = vmin.f32 %v2109, 0.0
        %v2662 = vmin.f32 %v2111, 0.0
        %v2663 = vmin.f32 %v2115, 0.0
        %v2664 = vmin.f32 %v2117, 0.0
        %v2665 = vmin.f32 %v2119, 0.0
        %v2666 = vmin.f32 %v2121, 0.0
        %v2667 = vmin.f32 %v2125, 0.0
        %v2668 = vmin.f32 %v2127, 0.0
        %v2669 = vmin.f32 %v2129, 0.0
        %v2670 = vmin.f32 %v2131, 0.0
        %v2671 = vmin.f32 %v2135, 0.0
        %v2672 = vmin.f32 %v2137, 0.0
        %v2673 = vmin.f32 %v2139, 0.0
        %v2674 = vmin.f32 %v2141, 0.0
        %v2675 = vmin.f32 %v2145, 0.0
        %v2676 = vmin.f32 %v2147, 0.0
        %v2677 = vmin.f32 %v2149, 0.0
        %v2678 = vmin.f32 %v2151, 0.0
        %v2679 = vmin.f32 %v2155, 0.0
        %v2680 = vmin.f32 %v2157, 0.0
        %v2681 = vmin.f32 %v2159, 0.0
        %v2682 = vmin.f32 %v2161, 0.0
        %v2683 = vmin.f32 %v2165, 0.0
        %v2684 = vmin.f32 %v2167, 0.0
        %v2685 = vmin.f32 %v2169, 0.0
        %v2686 = vmin.f32 %v2171, 0.0
        %v2687 = vmin.f32 %v2175, 0.0
        %v2688 = vmin.f32 %v2177, 0.0
        %v2689 = vmin.f32 %v2179, 0.0
        %v2690 = vmin.f32 %v2181, 0.0
        %v2691 = vmin.f32 %v2185, 0.0
        %v2692 = vmin.f32 %v2187, 0.0
        %v2693 = vmin.f32 %v2189, 0.0
        %v2694 = vmin.f32 %v2191, 0.0
        %v2695 = vmin.f32 %v2195, 0.0
        %v2696 = vmin.f32 %v2197, 0.0
        %v2697 = vmin.f32 %v2199, 0.0
        %v2698 = vmin.f32 %v2201, 0.0
        %v2699 = vmin.f32 %v2205, 0.0
        %v2700 = vmin.f32 %v2207, 0.0
        %v2701 = vmin.f32 %v2209, 0.0
        %v2702 = vmin.f32 %v2211, 0.0
        %v2703 = vmin.f32 %v2215, 0.0
        %v2704 = vmin.f32 %v2217, 0.0
        %v2705 = vmin.f32 %v2219, 0.0
        %v2706 = vmin.f32 %v2221, 0.0
        %v2707 = vmin.f32 %v2225, 0.0
        %v2708 = vmin.f32 %v2227, 0.0
        %v2709 = vmin.f32 %v2229, 0.0
        %v2710 = vmin.f32 %v2231, 0.0
        %v2711 = vmin.f32 %v2235, 0.0
        %v2712 = vmin.f32 %v2237, 0.0
        %v2713 = vmin.f32 %v2239, 0.0
        %v2714 = vmin.f32 %v2241, 0.0
        %v2715 = vmin.f32 %v2245, 0.0
        %v2716 = vmin.f32 %v2247, 0.0
        %v2717 = vmin.f32 %v2249, 0.0
        %v2718 = vmin.f32 %v2251, 0.0
        %v2719 = vmin.f32 %v2255, 0.0
        %v2720 = vmin.f32 %v2257, 0.0
        %v2721 = vmin.f32 %v2259, 0.0
        %v2722 = vmin.f32 %v2261, 0.0
        %v2723 = vmin.f32 %v2265, 0.0
        %v2724 = vmin.f32 %v2267, 0.0
        %v2725 = vmin.f32 %v2269, 0.0
        %v2726 = vmin.f32 %v2271, 0.0
        %v2727 = vmin.f32 %v2275, 0.0
        %v2728 = vmin.f32 %v2277, 0.0
        %v2729 = vmin.f32 %v2279, 0.0
        %v2730 = vmin.f32 %v2281, 0.0
        %v2731 = vmin.f32 %v2285, 0.0
        %v2732 = vmin.f32 %v2287, 0.0
        %v2733 = vmin.f32 %v2289, 0.0
        %v2734 = vmin.f32 %v2291, 0.0
        %v2735 = vmin.f32 %v2295, 0.0
        %v2736 = vmin.f32 %v2297, 0.0
        %v2737 = vmin.f32 %v2299, 0.0
        %v2738 = vmin.f32 %v2301, 0.0
        %v2739 = vmin.f32 %v2305, 0.0
        %v2740 = vmin.f32 %v2307, 0.0
        %v2741 = vmin.f32 %v2309, 0.0
        %v2742 = vmin.f32 %v2311, 0.0
        %v2743 = vmin.f32 %v2315, 0.0
        %v2744 = vmin.f32 %v2317, 0.0
        %v2745 = vmin.f32 %v2319, 0.0
        %v2746 = vmin.f32 %v2321, 0.0
        %v2747 = vmin.f32 %v2325, 0.0
        %v2748 = vmin.f32 %v2327, 0.0
        %v2749 = vmin.f32 %v2329, 0.0
        %v2750 = vmin.f32 %v2331, 0.0
        %v2751 = vmin.f32 %v2335, 0.0
        %v2752 = vmin.f32 %v2337, 0.0
        %v2753 = vmin.f32 %v2339, 0.0
        %v2754 = vmin.f32 %v2341, 0.0
        %v2755 = vmin.f32 %v2345, 0.0
        %v2756 = vmin.f32 %v2347, 0.0
        %v2757 = vmin.f32 %v2349, 0.0
        %v2758 = vmin.f32 %v2351, 0.0
        %v2759 = vmin.f32 %v2355, 0.0
        %v2760 = vmin.f32 %v2357, 0.0
        %v2761 = vmin.f32 %v2359, 0.0
        %v2762 = vmin.f32 %v2361, 0.0
        %v2763 = vmin.f32 %v2365, 0.0
        %v2764 = vmin.f32 %v2367, 0.0
        %v2765 = vmin.f32 %v2369, 0.0
        %v2766 = vmin.f32 %v2371, 0.0
        %v2767 = vmin.f32 %v2375, 0.0
        %v2768 = vmin.f32 %v2377, 0.0
        %v2769 = vmin.f32 %v2379, 0.0
        %v2770 = vmin.f32 %v2381, 0.0
        %v2771 = vmin.f32 %v2385, 0.0
        %v2772 = vmin.f32 %v2387, 0.0
        %v2773 = vmin.f32 %v2389, 0.0
        %v2774 = vmin.f32 %v2391, 0.0
        %v2775 = vmin.f32 %v2395, 0.0
        %v2776 = vmin.f32 %v2397, 0.0
        %v2777 = vmin.f32 %v2399, 0.0
        %v2778 = vmin.f32 %v2401, 0.0
        %v2779 = vmin.f32 %v2405, 0.0
        %v2780 = vmin.f32 %v2407, 0.0
        %v2781 = vmin.f32 %v2409, 0.0
        %v2782 = vmin.f32 %v2411, 0.0
        %v2783 = vmin.f32 %v2415, 0.0
        %v2784 = vmin.f32 %v2417, 0.0
        %v2785 = vmin.f32 %v2419, 0.0
        %v2786 = vmin.f32 %v2421, 0.0
        %v2787 = vmin.f32 %v2425, 0.0
        %v2788 = vmin.f32 %v2427, 0.0
        %v2789 = vmin.f32 %v2429, 0.0
        %v2790 = vmin.f32 %v2431, 0.0
        %v2791 = vmin.f32 %v2435, 0.0
        %v2792 = vmin.f32 %v2437, 0.0
        %v2793 = vmin.f32 %v2439, 0.0
        %v2794 = vmin.f32 %v2441, 0.0
        %v2795 = vmin.f32 %v2445, 0.0
        %v2796 = vmin.f32 %v2447, 0.0
        %v2797 = vmin.f32 %v2449, 0.0
        %v2798 = vmin.f32 %v2451, 0.0
        %v2799 = vmin.f32 %v2455, 0.0
        %v2800 = vmin.f32 %v2457, 0.0
        %v2801 = vmin.f32 %v2459, 0.0
        %v2802 = vmin.f32 %v2461, 0.0
        %v2803 = vmin.f32 %v2465, 0.0
        %v2804 = vmin.f32 %v2467, 0.0
        %v2805 = vmin.f32 %v2469, 0.0
        %v2806 = vmin.f32 %v2471, 0.0
        %v2807 = vmin.f32 %v2475, 0.0
        %v2808 = vmin.f32 %v2477, 0.0
        %v2809 = vmin.f32 %v2479, 0.0
        %v2810 = vmin.f32 %v2481, 0.0
        %v2811 = vmin.f32 %v2485, 0.0
        %v2812 = vmin.f32 %v2487, 0.0
        %v2813 = vmin.f32 %v2489, 0.0
        %v2814 = vmin.f32 %v2491, 0.0
        %v2815 = vmin.f32 %v2495, 0.0
        %v2816 = vmin.f32 %v2497, 0.0
        %v2817 = vmin.f32 %v2499, 0.0
        %v2818 = vmin.f32 %v2501, 0.0
        %v2819 = vmin.f32 %v2505, 0.0
        %v2820 = vmin.f32 %v2507, 0.0
        %v2821 = vmin.f32 %v2509, 0.0
        %v2822 = vmin.f32 %v2511, 0.0
        %v2823 = vmin.f32 %v2515, 0.0
        %v2824 = vmin.f32 %v2517, 0.0
        %v2825 = vmin.f32 %v2519, 0.0
        %v2826 = vmin.f32 %v2521, 0.0
        %v2827 = vmin.f32 %v2525, 0.0
        %v2828 = vmin.f32 %v2527, 0.0
        %v2829 = vmin.f32 %v2529, 0.0
        %v2830 = vmin.f32 %v2531, 0.0
        %v2831 = vmin.f32 %v2535, 0.0
        %v2832 = vmin.f32 %v2537, 0.0
        %v2833 = vmin.f32 %v2539, 0.0
        %v2834 = vmin.f32 %v2541, 0.0
        %v2835 = vmin.f32 %v2545, 0.0
        %v2836 = vmin.f32 %v2547, 0.0
        %v2837 = vmin.f32 %v2549, 0.0
        %v2838 = vmin.f32 %v2551, 0.0
        %v2839 = vmin.f32 %v2555, 0.0
        %v2840 = vmin.f32 %v2557, 0.0
        %v2841 = vmin.f32 %v2559, 0.0
        %v2842 = vmin.f32 %v2561, 0.0
        %v2843 = vmin.f32 %v2565, 0.0
        %v2844 = vmin.f32 %v2567, 0.0
        %v2845 = vmin.f32 %v2569, 0.0
        %v2846 = vmin.f32 %v2571, 0.0
        %v2847 = vmin.f32 %v2575, 0.0
        %v2848 = vmin.f32 %v2577, 0.0
        %v2849 = vmin.f32 %v2579, 0.0
        %v2850 = vmin.f32 %v2581, 0.0
        %v2851 = vmin.f32 %v2585, 0.0
        %v2852 = vmin.f32 %v2587, 0.0
        %v2853 = vmin.f32 %v2589, 0.0
        %v2854 = vmin.f32 %v2591, 0.0
        %v2855 = vmin.f32 %v2595, 0.0
        %v2856 = vmin.f32 %v2597, 0.0
        %v2857 = vmin.f32 %v2599, 0.0
        %v2858 = vmin.f32 %v2601, 0.0
        %v2859 = vmul.f32 %v2603, 1.442695
        %v2860 = vpow.pop %v2859
        %v2861 = vmul.f32 %v2604, 1.442695
        %v2862 = vpow.pop %v2861
        %v2863 = vmul.f32 %v2605, 1.442695
        %v2864 = vpow.pop %v2863
        %v2865 = vmul.f32 %v2606, 1.442695
        %v2866 = vpow.pop %v2865
        %v2867 = vmul.f32 %v2607, 1.442695
        %v2868 = vpow.pop %v2867
        %v2869 = vmul.f32 %v2608, 1.442695
        %v2870 = vpow.pop %v2869
        %v2871 = vmul.f32 %v2609, 1.442695
        %v2872 = vpow.pop %v2871
        %v2873 = vmul.f32 %v2610, 1.442695
        %v2874 = vpow.pop %v2873
        %v2875 = vmul.f32 %v2611, 1.442695
        %v2876 = vpow.pop %v2875
        %v2877 = vmul.f32 %v2612, 1.442695
        %v2878 = vpow.pop %v2877
        %v2879 = vmul.f32 %v2613, 1.442695
        %v2880 = vpow.pop %v2879
        %v2881 = vmul.f32 %v2614, 1.442695
        %v2882 = vpow.pop %v2881
        %v2883 = vmul.f32 %v2615, 1.442695
        %v2884 = vpow.pop %v2883
        %v2885 = vmul.f32 %v2616, 1.442695
        %v2886 = vpow.pop %v2885
        %v2887 = vmul.f32 %v2617, 1.442695
        %v2888 = vpow.pop %v2887
        %v2889 = vmul.f32 %v2618, 1.442695
        %v2890 = vpow.pop %v2889
        %v2891 = vmul.f32 %v2619, 1.442695
        %v2892 = vpow.pop %v2891
        %v2893 = vmul.f32 %v2620, 1.442695
        %v2894 = vpow.pop %v2893
        %v2895 = vmul.f32 %v2621, 1.442695
        %v2896 = vpow.pop %v2895
        %v2897 = vmul.f32 %v2622, 1.442695
        %v2898 = vpow.pop %v2897
        %v2899 = vmul.f32 %v2623, 1.442695
        %v2900 = vpow.pop %v2899
        %v2901 = vmul.f32 %v2624, 1.442695
        %v2902 = vpow.pop %v2901
        %v2903 = vmul.f32 %v2625, 1.442695
        %v2904 = vpow.pop %v2903
        %v2905 = vmul.f32 %v2626, 1.442695
        %v2906 = vpow.pop %v2905
        %v2907 = vmul.f32 %v2627, 1.442695
        %v2908 = vpow.pop %v2907
        %v2909 = vmul.f32 %v2628, 1.442695
        %v2910 = vpow.pop %v2909
        %v2911 = vmul.f32 %v2629, 1.442695
        %v2912 = vpow.pop %v2911
        %v2913 = vmul.f32 %v2630, 1.442695
        %v2914 = vpow.pop %v2913
        %v2915 = vmul.f32 %v2631, 1.442695
        %v2916 = vpow.pop %v2915
        %v2917 = vmul.f32 %v2632, 1.442695
        %v2918 = vpow.pop %v2917
        %v2919 = vmul.f32 %v2633, 1.442695
        %v2920 = vpow.pop %v2919
        %v2921 = vmul.f32 %v2634, 1.442695
        %v2922 = vpow.pop %v2921
        %v2923 = vmul.f32 %v2635, 1.442695
        %v2924 = vpow.pop %v2923
        %v2925 = vmul.f32 %v2636, 1.442695
        %v2926 = vpow.pop %v2925
        %v2927 = vmul.f32 %v2637, 1.442695
        %v2928 = vpow.pop %v2927
        %v2929 = vmul.f32 %v2638, 1.442695
        %v2930 = vpow.pop %v2929
        %v2931 = vmul.f32 %v2639, 1.442695
        %v2932 = vpow.pop %v2931
        %v2933 = vmul.f32 %v2640, 1.442695
        %v2934 = vpow.pop %v2933
        %v2935 = vmul.f32 %v2641, 1.442695
        %v2936 = vpow.pop %v2935
        %v2937 = vmul.f32 %v2642, 1.442695
        %v2938 = vpow.pop %v2937
        %v2939 = vmul.f32 %v2643, 1.442695
        %v2940 = vpow.pop %v2939
        %v2941 = vmul.f32 %v2644, 1.442695
        %v2942 = vpow.pop %v2941
        %v2943 = vmul.f32 %v2645, 1.442695
        %v2944 = vpow.pop %v2943
        %v2945 = vmul.f32 %v2646, 1.442695
        %v2946 = vpow.pop %v2945
        %v2947 = vmul.f32 %v2647, 1.442695
        %v2948 = vpow.pop %v2947
        %v2949 = vmul.f32 %v2648, 1.442695
        %v2950 = vpow.pop %v2949
        %v2951 = vmul.f32 %v2649, 1.442695
        %v2952 = vpow.pop %v2951
        %v2953 = vmul.f32 %v2650, 1.442695
        %v2954 = vpow.pop %v2953
        %v2955 = vmul.f32 %v2651, 1.442695
        %v2956 = vpow.pop %v2955
        %v2957 = vmul.f32 %v2652, 1.442695
        %v2958 = vpow.pop %v2957
        %v2959 = vmul.f32 %v2653, 1.442695
        %v2960 = vpow.pop %v2959
        %v2961 = vmul.f32 %v2654, 1.442695
        %v2962 = vpow.pop %v2961
        %v2963 = vmul.f32 %v2655, 1.442695
        %v2964 = vpow.pop %v2963
        %v2965 = vmul.f32 %v2656, 1.442695
        %v2966 = vpow.pop %v2965
        %v2967 = vmul.f32 %v2657, 1.442695
        %v2968 = vpow.pop %v2967
        %v2969 = vmul.f32 %v2658, 1.442695
        %v2970 = vpow.pop %v2969
        %v2971 = vmul.f32 %v2659, 1.442695
        %v2972 = vpow.pop %v2971
        %v2973 = vmul.f32 %v2660, 1.442695
        %v2974 = vpow.pop %v2973
        %v2975 = vmul.f32 %v2661, 1.442695
        %v2976 = vpow.pop %v2975
        %v2977 = vmul.f32 %v2662, 1.442695
        %v2978 = vpow.pop %v2977
        %v2979 = vmul.f32 %v2663, 1.442695
        %v2980 = vpow.pop %v2979
        %v2981 = vmul.f32 %v2664, 1.442695
        %v2982 = vpow.pop %v2981
        %v2983 = vmul.f32 %v2665, 1.442695
        %v2984 = vpow.pop %v2983
        %v2985 = vmul.f32 %v2666, 1.442695
        %v2986 = vpow.pop %v2985
        %v2987 = vmul.f32 %v2667, 1.442695
        %v2988 = vpow.pop %v2987
        %v2989 = vmul.f32 %v2668, 1.442695
        %v2990 = vpow.pop %v2989
        %v2991 = vmul.f32 %v2669, 1.442695
        %v2992 = vpow.pop %v2991
        %v2993 = vmul.f32 %v2670, 1.442695
        %v2994 = vpow.pop %v2993
        %v2995 = vmul.f32 %v2671, 1.442695
        %v2996 = vpow.pop %v2995
        %v2997 = vmul.f32 %v2672, 1.442695
        %v2998 = vpow.pop %v2997
        %v2999 = vmul.f32 %v2673, 1.442695
        %v3000 = vpow.pop %v2999
        %v3001 = vmul.f32 %v2674, 1.442695
        %v3002 = vpow.pop %v3001
        %v3003 = vmul.f32 %v2675, 1.442695
        %v3004 = vpow.pop %v3003
        %v3005 = vmul.f32 %v2676, 1.442695
        %v3006 = vpow.pop %v3005
        %v3007 = vmul.f32 %v2677, 1.442695
        %v3008 = vpow.pop %v3007
        %v3009 = vmul.f32 %v2678, 1.442695
        %v3010 = vpow.pop %v3009
        %v3011 = vmul.f32 %v2679, 1.442695
        %v3012 = vpow.pop %v3011
        %v3013 = vmul.f32 %v2680, 1.442695
        %v3014 = vpow.pop %v3013
        %v3015 = vmul.f32 %v2681, 1.442695
        %v3016 = vpow.pop %v3015
        %v3017 = vmul.f32 %v2682, 1.442695
        %v3018 = vpow.pop %v3017
        %v3019 = vmul.f32 %v2683, 1.442695
        %v3020 = vpow.pop %v3019
        %v3021 = vmul.f32 %v2684, 1.442695
        %v3022 = vpow.pop %v3021
        %v3023 = vmul.f32 %v2685, 1.442695
        %v3024 = vpow.pop %v3023
        %v3025 = vmul.f32 %v2686, 1.442695
        %v3026 = vpow.pop %v3025
        %v3027 = vmul.f32 %v2687, 1.442695
        %v3028 = vpow.pop %v3027
        %v3029 = vmul.f32 %v2688, 1.442695
        %v3030 = vpow.pop %v3029
        %v3031 = vmul.f32 %v2689, 1.442695
        %v3032 = vpow.pop %v3031
        %v3033 = vmul.f32 %v2690, 1.442695
        %v3034 = vpow.pop %v3033
        %v3035 = vmul.f32 %v2691, 1.442695
        %v3036 = vpow.pop %v3035
        %v3037 = vmul.f32 %v2692, 1.442695
        %v3038 = vpow.pop %v3037
        %v3039 = vmul.f32 %v2693, 1.442695
        %v3040 = vpow.pop %v3039
        %v3041 = vmul.f32 %v2694, 1.442695
        %v3042 = vpow.pop %v3041
        %v3043 = vmul.f32 %v2695, 1.442695
        %v3044 = vpow.pop %v3043
        %v3045 = vmul.f32 %v2696, 1.442695
        %v3046 = vpow.pop %v3045
        %v3047 = vmul.f32 %v2697, 1.442695
        %v3048 = vpow.pop %v3047
        %v3049 = vmul.f32 %v2698, 1.442695
        %v3050 = vpow.pop %v3049
        %v3051 = vmul.f32 %v2699, 1.442695
        %v3052 = vpow.pop %v3051
        %v3053 = vmul.f32 %v2700, 1.442695
        %v3054 = vpow.pop %v3053
        %v3055 = vmul.f32 %v2701, 1.442695
        %v3056 = vpow.pop %v3055
        %v3057 = vmul.f32 %v2702, 1.442695
        %v3058 = vpow.pop %v3057
        %v3059 = vmul.f32 %v2703, 1.442695
        %v3060 = vpow.pop %v3059
        %v3061 = vmul.f32 %v2704, 1.442695
        %v3062 = vpow.pop %v3061
        %v3063 = vmul.f32 %v2705, 1.442695
        %v3064 = vpow.pop %v3063
        %v3065 = vmul.f32 %v2706, 1.442695
        %v3066 = vpow.pop %v3065
        %v3067 = vmul.f32 %v2707, 1.442695
        %v3068 = vpow.pop %v3067
        %v3069 = vmul.f32 %v2708, 1.442695
        %v3070 = vpow.pop %v3069
        %v3071 = vmul.f32 %v2709, 1.442695
        %v3072 = vpow.pop %v3071
        %v3073 = vmul.f32 %v2710, 1.442695
        %v3074 = vpow.pop %v3073
        %v3075 = vmul.f32 %v2711, 1.442695
        %v3076 = vpow.pop %v3075
        %v3077 = vmul.f32 %v2712, 1.442695
        %v3078 = vpow.pop %v3077
        %v3079 = vmul.f32 %v2713, 1.442695
        %v3080 = vpow.pop %v3079
        %v3081 = vmul.f32 %v2714, 1.442695
        %v3082 = vpow.pop %v3081
        %v3083 = vmul.f32 %v2715, 1.442695
        %v3084 = vpow.pop %v3083
        %v3085 = vmul.f32 %v2716, 1.442695
        %v3086 = vpow.pop %v3085
        %v3087 = vmul.f32 %v2717, 1.442695
        %v3088 = vpow.pop %v3087
        %v3089 = vmul.f32 %v2718, 1.442695
        %v3090 = vpow.pop %v3089
        %v3091 = vmul.f32 %v2719, 1.442695
        %v3092 = vpow.pop %v3091
        %v3093 = vmul.f32 %v2720, 1.442695
        %v3094 = vpow.pop %v3093
        %v3095 = vmul.f32 %v2721, 1.442695
        %v3096 = vpow.pop %v3095
        %v3097 = vmul.f32 %v2722, 1.442695
        %v3098 = vpow.pop %v3097
        %v3099 = vmul.f32 %v2723, 1.442695
        %v3100 = vpow.pop %v3099
        %v3101 = vmul.f32 %v2724, 1.442695
        %v3102 = vpow.pop %v3101
        %v3103 = vmul.f32 %v2725, 1.442695
        %v3104 = vpow.pop %v3103
        %v3105 = vmul.f32 %v2726, 1.442695
        %v3106 = vpow.pop %v3105
        %v3107 = vmul.f32 %v2727, 1.442695
        %v3108 = vpow.pop %v3107
        %v3109 = vmul.f32 %v2728, 1.442695
        %v3110 = vpow.pop %v3109
        %v3111 = vmul.f32 %v2729, 1.442695
        %v3112 = vpow.pop %v3111
        %v3113 = vmul.f32 %v2730, 1.442695
        %v3114 = vpow.pop %v3113
        %v3115 = vmul.f32 %v2731, 1.442695
        %v3116 = vpow.pop %v3115
        %v3117 = vmul.f32 %v2732, 1.442695
        %v3118 = vpow.pop %v3117
        %v3119 = vmul.f32 %v2733, 1.442695
        %v3120 = vpow.pop %v3119
        %v3121 = vmul.f32 %v2734, 1.442695
        %v3122 = vpow.pop %v3121
        %v3123 = vmul.f32 %v2735, 1.442695
        %v3124 = vpow.pop %v3123
        %v3125 = vmul.f32 %v2736, 1.442695
        %v3126 = vpow.pop %v3125
        %v3127 = vmul.f32 %v2737, 1.442695
        %v3128 = vpow.pop %v3127
        %v3129 = vmul.f32 %v2738, 1.442695
        %v3130 = vpow.pop %v3129
        %v3131 = vmul.f32 %v2739, 1.442695
        %v3132 = vpow.pop %v3131
        %v3133 = vmul.f32 %v2740, 1.442695
        %v3134 = vpow.pop %v3133
        %v3135 = vmul.f32 %v2741, 1.442695
        %v3136 = vpow.pop %v3135
        %v3137 = vmul.f32 %v2742, 1.442695
        %v3138 = vpow.pop %v3137
        %v3139 = vmul.f32 %v2743, 1.442695
        %v3140 = vpow.pop %v3139
        %v3141 = vmul.f32 %v2744, 1.442695
        %v3142 = vpow.pop %v3141
        %v3143 = vmul.f32 %v2745, 1.442695
        %v3144 = vpow.pop %v3143
        %v3145 = vmul.f32 %v2746, 1.442695
        %v3146 = vpow.pop %v3145
        %v3147 = vmul.f32 %v2747, 1.442695
        %v3148 = vpow.pop %v3147
        %v3149 = vmul.f32 %v2748, 1.442695
        %v3150 = vpow.pop %v3149
        %v3151 = vmul.f32 %v2749, 1.442695
        %v3152 = vpow.pop %v3151
        %v3153 = vmul.f32 %v2750, 1.442695
        %v3154 = vpow.pop %v3153
        %v3155 = vmul.f32 %v2751, 1.442695
        %v3156 = vpow.pop %v3155
        %v3157 = vmul.f32 %v2752, 1.442695
        %v3158 = vpow.pop %v3157
        %v3159 = vmul.f32 %v2753, 1.442695
        %v3160 = vpow.pop %v3159
        %v3161 = vmul.f32 %v2754, 1.442695
        %v3162 = vpow.pop %v3161
        %v3163 = vmul.f32 %v2755, 1.442695
        %v3164 = vpow.pop %v3163
        %v3165 = vmul.f32 %v2756, 1.442695
        %v3166 = vpow.pop %v3165
        %v3167 = vmul.f32 %v2757, 1.442695
        %v3168 = vpow.pop %v3167
        %v3169 = vmul.f32 %v2758, 1.442695
        %v3170 = vpow.pop %v3169
        %v3171 = vmul.f32 %v2759, 1.442695
        %v3172 = vpow.pop %v3171
        %v3173 = vmul.f32 %v2760, 1.442695
        %v3174 = vpow.pop %v3173
        %v3175 = vmul.f32 %v2761, 1.442695
        %v3176 = vpow.pop %v3175
        %v3177 = vmul.f32 %v2762, 1.442695
        %v3178 = vpow.pop %v3177
        %v3179 = vmul.f32 %v2763, 1.442695
        %v3180 = vpow.pop %v3179
        %v3181 = vmul.f32 %v2764, 1.442695
        %v3182 = vpow.pop %v3181
        %v3183 = vmul.f32 %v2765, 1.442695
        %v3184 = vpow.pop %v3183
        %v3185 = vmul.f32 %v2766, 1.442695
        %v3186 = vpow.pop %v3185
        %v3187 = vmul.f32 %v2767, 1.442695
        %v3188 = vpow.pop %v3187
        %v3189 = vmul.f32 %v2768, 1.442695
        %v3190 = vpow.pop %v3189
        %v3191 = vmul.f32 %v2769, 1.442695
        %v3192 = vpow.pop %v3191
        %v3193 = vmul.f32 %v2770, 1.442695
        %v3194 = vpow.pop %v3193
        %v3195 = vmul.f32 %v2771, 1.442695
        %v3196 = vpow.pop %v3195
        %v3197 = vmul.f32 %v2772, 1.442695
        %v3198 = vpow.pop %v3197
        %v3199 = vmul.f32 %v2773, 1.442695
        %v3200 = vpow.pop %v3199
        %v3201 = vmul.f32 %v2774, 1.442695
        %v3202 = vpow.pop %v3201
        %v3203 = vmul.f32 %v2775, 1.442695
        %v3204 = vpow.pop %v3203
        %v3205 = vmul.f32 %v2776, 1.442695
        %v3206 = vpow.pop %v3205
        %v3207 = vmul.f32 %v2777, 1.442695
        %v3208 = vpow.pop %v3207
        %v3209 = vmul.f32 %v2778, 1.442695
        %v3210 = vpow.pop %v3209
        %v3211 = vmul.f32 %v2779, 1.442695
        %v3212 = vpow.pop %v3211
        %v3213 = vmul.f32 %v2780, 1.442695
        %v3214 = vpow.pop %v3213
        %v3215 = vmul.f32 %v2781, 1.442695
        %v3216 = vpow.pop %v3215
        %v3217 = vmul.f32 %v2782, 1.442695
        %v3218 = vpow.pop %v3217
        %v3219 = vmul.f32 %v2783, 1.442695
        %v3220 = vpow.pop %v3219
        %v3221 = vmul.f32 %v2784, 1.442695
        %v3222 = vpow.pop %v3221
        %v3223 = vmul.f32 %v2785, 1.442695
        %v3224 = vpow.pop %v3223
        %v3225 = vmul.f32 %v2786, 1.442695
        %v3226 = vpow.pop %v3225
        %v3227 = vmul.f32 %v2787, 1.442695
        %v3228 = vpow.pop %v3227
        %v3229 = vmul.f32 %v2788, 1.442695
        %v3230 = vpow.pop %v3229
        %v3231 = vmul.f32 %v2789, 1.442695
        %v3232 = vpow.pop %v3231
        %v3233 = vmul.f32 %v2790, 1.442695
        %v3234 = vpow.pop %v3233
        %v3235 = vmul.f32 %v2791, 1.442695
        %v3236 = vpow.pop %v3235
        %v3237 = vmul.f32 %v2792, 1.442695
        %v3238 = vpow.pop %v3237
        %v3239 = vmul.f32 %v2793, 1.442695
        %v3240 = vpow.pop %v3239
        %v3241 = vmul.f32 %v2794, 1.442695
        %v3242 = vpow.pop %v3241
        %v3243 = vmul.f32 %v2795, 1.442695
        %v3244 = vpow.pop %v3243
        %v3245 = vmul.f32 %v2796, 1.442695
        %v3246 = vpow.pop %v3245
        %v3247 = vmul.f32 %v2797, 1.442695
        %v3248 = vpow.pop %v3247
        %v3249 = vmul.f32 %v2798, 1.442695
        %v3250 = vpow.pop %v3249
        %v3251 = vmul.f32 %v2799, 1.442695
        %v3252 = vpow.pop %v3251
        %v3253 = vmul.f32 %v2800, 1.442695
        %v3254 = vpow.pop %v3253
        %v3255 = vmul.f32 %v2801, 1.442695
        %v3256 = vpow.pop %v3255
        %v3257 = vmul.f32 %v2802, 1.442695
        %v3258 = vpow.pop %v3257
        %v3259 = vmul.f32 %v2803, 1.442695
        %v3260 = vpow.pop %v3259
        %v3261 = vmul.f32 %v2804, 1.442695
        %v3262 = vpow.pop %v3261
        %v3263 = vmul.f32 %v2805, 1.442695
        %v3264 = vpow.pop %v3263
        %v3265 = vmul.f32 %v2806, 1.442695
        %v3266 = vpow.pop %v3265
        %v3267 = vmul.f32 %v2807, 1.442695
        %v3268 = vpow.pop %v3267
        %v3269 = vmul.f32 %v2808, 1.442695
        %v3270 = vpow.pop %v3269
        %v3271 = vmul.f32 %v2809, 1.442695
        %v3272 = vpow.pop %v3271
        %v3273 = vmul.f32 %v2810, 1.442695
        %v3274 = vpow.pop %v3273
        %v3275 = vmul.f32 %v2811, 1.442695
        %v3276 = vpow.pop %v3275
        %v3277 = vmul.f32 %v2812, 1.442695
        %v3278 = vpow.pop %v3277
        %v3279 = vmul.f32 %v2813, 1.442695
        %v3280 = vpow.pop %v3279
        %v3281 = vmul.f32 %v2814, 1.442695
        %v3282 = vpow.pop %v3281
        %v3283 = vmul.f32 %v2815, 1.442695
        %v3284 = vpow.pop %v3283
        %v3285 = vmul.f32 %v2816, 1.442695
        %v3286 = vpow.pop %v3285
        %v3287 = vmul.f32 %v2817, 1.442695
        %v3288 = vpow.pop %v3287
        %v3289 = vmul.f32 %v2818, 1.442695
        %v3290 = vpow.pop %v3289
        %v3291 = vmul.f32 %v2819, 1.442695
        %v3292 = vpow.pop %v3291
        %v3293 = vmul.f32 %v2820, 1.442695
        %v3294 = vpow.pop %v3293
        %v3295 = vmul.f32 %v2821, 1.442695
        %v3296 = vpow.pop %v3295
        %v3297 = vmul.f32 %v2822, 1.442695
        %v3298 = vpow.pop %v3297
        %v3299 = vmul.f32 %v2823, 1.442695
        %v3300 = vpow.pop %v3299
        %v3301 = vmul.f32 %v2824, 1.442695
        %v3302 = vpow.pop %v3301
        %v3303 = vmul.f32 %v2825, 1.442695
        %v3304 = vpow.pop %v3303
        %v3305 = vmul.f32 %v2826, 1.442695
        %v3306 = vpow.pop %v3305
        %v3307 = vmul.f32 %v2827, 1.442695
        %v3308 = vpow.pop %v3307
        %v3309 = vmul.f32 %v2828, 1.442695
        %v3310 = vpow.pop %v3309
        %v3311 = vmul.f32 %v2829, 1.442695
        %v3312 = vpow.pop %v3311
        %v3313 = vmul.f32 %v2830, 1.442695
        %v3314 = vpow.pop %v3313
        %v3315 = vmul.f32 %v2831, 1.442695
        %v3316 = vpow.pop %v3315
        %v3317 = vmul.f32 %v2832, 1.442695
        %v3318 = vpow.pop %v3317
        %v3319 = vmul.f32 %v2833, 1.442695
        %v3320 = vpow.pop %v3319
        %v3321 = vmul.f32 %v2834, 1.442695
        %v3322 = vpow.pop %v3321
        %v3323 = vmul.f32 %v2835, 1.442695
        %v3324 = vpow.pop %v3323
        %v3325 = vmul.f32 %v2836, 1.442695
        %v3326 = vpow.pop %v3325
        %v3327 = vmul.f32 %v2837, 1.442695
        %v3328 = vpow.pop %v3327
        %v3329 = vmul.f32 %v2838, 1.442695
        %v3330 = vpow.pop %v3329
        %v3331 = vmul.f32 %v2839, 1.442695
        %v3332 = vpow.pop %v3331
        %v3333 = vmul.f32 %v2840, 1.442695
        %v3334 = vpow.pop %v3333
        %v3335 = vmul.f32 %v2841, 1.442695
        %v3336 = vpow.pop %v3335
        %v3337 = vmul.f32 %v2842, 1.442695
        %v3338 = vpow.pop %v3337
        %v3339 = vmul.f32 %v2843, 1.442695
        %v3340 = vpow.pop %v3339
        %v3341 = vmul.f32 %v2844, 1.442695
        %v3342 = vpow.pop %v3341
        %v3343 = vmul.f32 %v2845, 1.442695
        %v3344 = vpow.pop %v3343
        %v3345 = vmul.f32 %v2846, 1.442695
        %v3346 = vpow.pop %v3345
        %v3347 = vmul.f32 %v2847, 1.442695
        %v3348 = vpow.pop %v3347
        %v3349 = vmul.f32 %v2848, 1.442695
        %v3350 = vpow.pop %v3349
        %v3351 = vmul.f32 %v2849, 1.442695
        %v3352 = vpow.pop %v3351
        %v3353 = vmul.f32 %v2850, 1.442695
        %v3354 = vpow.pop %v3353
        %v3355 = vmul.f32 %v2851, 1.442695
        %v3356 = vpow.pop %v3355
        %v3357 = vmul.f32 %v2852, 1.442695
        %v3358 = vpow.pop %v3357
        %v3359 = vmul.f32 %v2853, 1.442695
        %v3360 = vpow.pop %v3359
        %v3361 = vmul.f32 %v2854, 1.442695
        %v3362 = vpow.pop %v3361
        %v3363 = vmul.f32 %v2855, 1.442695
        %v3364 = vpow.pop %v3363
        %v3365 = vmul.f32 %v2856, 1.442695
        %v3366 = vpow.pop %v3365
        %v3367 = vmul.f32 %v2857, 1.442695
        %v3368 = vpow.pop %v3367
        %v3369 = vmul.f32 %v2858, 1.442695
        %v3370 = vpow.pop %v3369
        %v3371 = vsub.f32 %v2860, 1.0
        %v3372 = vsub.f32 %v2862, 1.0
        %v3373 = vsub.f32 %v2864, 1.0
        %v3374 = vsub.f32 %v2866, 1.0
        %v3375 = vsub.f32 %v2868, 1.0
        %v3376 = vsub.f32 %v2870, 1.0
        %v3377 = vsub.f32 %v2872, 1.0
        %v3378 = vsub.f32 %v2874, 1.0
        %v3379 = vsub.f32 %v2876, 1.0
        %v3380 = vsub.f32 %v2878, 1.0
        %v3381 = vsub.f32 %v2880, 1.0
        %v3382 = vsub.f32 %v2882, 1.0
        %v3383 = vsub.f32 %v2884, 1.0
        %v3384 = vsub.f32 %v2886, 1.0
        %v3385 = vsub.f32 %v2888, 1.0
        %v3386 = vsub.f32 %v2890, 1.0
        %v3387 = vsub.f32 %v2892, 1.0
        %v3388 = vsub.f32 %v2894, 1.0
        %v3389 = vsub.f32 %v2896, 1.0
        %v3390 = vsub.f32 %v2898, 1.0
        %v3391 = vsub.f32 %v2900, 1.0
        %v3392 = vsub.f32 %v2902, 1.0
        %v3393 = vsub.f32 %v2904, 1.0
        %v3394 = vsub.f32 %v2906, 1.0
        %v3395 = vsub.f32 %v2908, 1.0
        %v3396 = vsub.f32 %v2910, 1.0
        %v3397 = vsub.f32 %v2912, 1.0
        %v3398 = vsub.f32 %v2914, 1.0
        %v3399 = vsub.f32 %v2916, 1.0
        %v3400 = vsub.f32 %v2918, 1.0
        %v3401 = vsub.f32 %v2920, 1.0
        %v3402 = vsub.f32 %v2922, 1.0
        %v3403 = vsub.f32 %v2924, 1.0
        %v3404 = vsub.f32 %v2926, 1.0
        %v3405 = vsub.f32 %v2928, 1.0
        %v3406 = vsub.f32 %v2930, 1.0
        %v3407 = vsub.f32 %v2932, 1.0
        %v3408 = vsub.f32 %v2934, 1.0
        %v3409 = vsub.f32 %v2936, 1.0
        %v3410 = vsub.f32 %v2938, 1.0
        %v3411 = vsub.f32 %v2940, 1.0
        %v3412 = vsub.f32 %v2942, 1.0
        %v3413 = vsub.f32 %v2944, 1.0
        %v3414 = vsub.f32 %v2946, 1.0
        %v3415 = vsub.f32 %v2948, 1.0
        %v3416 = vsub.f32 %v2950, 1.0
        %v3417 = vsub.f32 %v2952, 1.0
        %v3418 = vsub.f32 %v2954, 1.0
        %v3419 = vsub.f32 %v2956, 1.0
        %v3420 = vsub.f32 %v2958, 1.0
        %v3421 = vsub.f32 %v2960, 1.0
        %v3422 = vsub.f32 %v2962, 1.0
        %v3423 = vsub.f32 %v2964, 1.0
        %v3424 = vsub.f32 %v2966, 1.0
        %v3425 = vsub.f32 %v2968, 1.0
        %v3426 = vsub.f32 %v2970, 1.0
        %v3427 = vsub.f32 %v2972, 1.0
        %v3428 = vsub.f32 %v2974, 1.0
        %v3429 = vsub.f32 %v2976, 1.0
        %v3430 = vsub.f32 %v2978, 1.0
        %v3431 = vsub.f32 %v2980, 1.0
        %v3432 = vsub.f32 %v2982, 1.0
        %v3433 = vsub.f32 %v2984, 1.0
        %v3434 = vsub.f32 %v2986, 1.0
        %v3435 = vsub.f32 %v2988, 1.0
        %v3436 = vsub.f32 %v2990, 1.0
        %v3437 = vsub.f32 %v2992, 1.0
        %v3438 = vsub.f32 %v2994, 1.0
        %v3439 = vsub.f32 %v2996, 1.0
        %v3440 = vsub.f32 %v2998, 1.0
        %v3441 = vsub.f32 %v3000, 1.0
        %v3442 = vsub.f32 %v3002, 1.0
        %v3443 = vsub.f32 %v3004, 1.0
        %v3444 = vsub.f32 %v3006, 1.0
        %v3445 = vsub.f32 %v3008, 1.0
        %v3446 = vsub.f32 %v3010, 1.0
        %v3447 = vsub.f32 %v3012, 1.0
        %v3448 = vsub.f32 %v3014, 1.0
        %v3449 = vsub.f32 %v3016, 1.0
        %v3450 = vsub.f32 %v3018, 1.0
        %v3451 = vsub.f32 %v3020, 1.0
        %v3452 = vsub.f32 %v3022, 1.0
        %v3453 = vsub.f32 %v3024, 1.0
        %v3454 = vsub.f32 %v3026, 1.0
        %v3455 = vsub.f32 %v3028, 1.0
        %v3456 = vsub.f32 %v3030, 1.0
        %v3457 = vsub.f32 %v3032, 1.0
        %v3458 = vsub.f32 %v3034, 1.0
        %v3459 = vsub.f32 %v3036, 1.0
        %v3460 = vsub.f32 %v3038, 1.0
        %v3461 = vsub.f32 %v3040, 1.0
        %v3462 = vsub.f32 %v3042, 1.0
        %v3463 = vsub.f32 %v3044, 1.0
        %v3464 = vsub.f32 %v3046, 1.0
        %v3465 = vsub.f32 %v3048, 1.0
        %v3466 = vsub.f32 %v3050, 1.0
        %v3467 = vsub.f32 %v3052, 1.0
        %v3468 = vsub.f32 %v3054, 1.0
        %v3469 = vsub.f32 %v3056, 1.0
        %v3470 = vsub.f32 %v3058, 1.0
        %v3471 = vsub.f32 %v3060, 1.0
        %v3472 = vsub.f32 %v3062, 1.0
        %v3473 = vsub.f32 %v3064, 1.0
        %v3474 = vsub.f32 %v3066, 1.0
        %v3475 = vsub.f32 %v3068, 1.0
        %v3476 = vsub.f32 %v3070, 1.0
        %v3477 = vsub.f32 %v3072, 1.0
        %v3478 = vsub.f32 %v3074, 1.0
        %v3479 = vsub.f32 %v3076, 1.0
        %v3480 = vsub.f32 %v3078, 1.0
        %v3481 = vsub.f32 %v3080, 1.0
        %v3482 = vsub.f32 %v3082, 1.0
        %v3483 = vsub.f32 %v3084, 1.0
        %v3484 = vsub.f32 %v3086, 1.0
        %v3485 = vsub.f32 %v3088, 1.0
        %v3486 = vsub.f32 %v3090, 1.0
        %v3487 = vsub.f32 %v3092, 1.0
        %v3488 = vsub.f32 %v3094, 1.0
        %v3489 = vsub.f32 %v3096, 1.0
        %v3490 = vsub.f32 %v3098, 1.0
        %v3491 = vsub.f32 %v3100, 1.0
        %v3492 = vsub.f32 %v3102, 1.0
        %v3493 = vsub.f32 %v3104, 1.0
        %v3494 = vsub.f32 %v3106, 1.0
        %v3495 = vsub.f32 %v3108, 1.0
        %v3496 = vsub.f32 %v3110, 1.0
        %v3497 = vsub.f32 %v3112, 1.0
        %v3498 = vsub.f32 %v3114, 1.0
        %v3499 = vsub.f32 %v3116, 1.0
        %v3500 = vsub.f32 %v3118, 1.0
        %v3501 = vsub.f32 %v3120, 1.0
        %v3502 = vsub.f32 %v3122, 1.0
        %v3503 = vsub.f32 %v3124, 1.0
        %v3504 = vsub.f32 %v3126, 1.0
        %v3505 = vsub.f32 %v3128, 1.0
        %v3506 = vsub.f32 %v3130, 1.0
        %v3507 = vsub.f32 %v3132, 1.0
        %v3508 = vsub.f32 %v3134, 1.0
        %v3509 = vsub.f32 %v3136, 1.0
        %v3510 = vsub.f32 %v3138, 1.0
        %v3511 = vsub.f32 %v3140, 1.0
        %v3512 = vsub.f32 %v3142, 1.0
        %v3513 = vsub.f32 %v3144, 1.0
        %v3514 = vsub.f32 %v3146, 1.0
        %v3515 = vsub.f32 %v3148, 1.0
        %v3516 = vsub.f32 %v3150, 1.0
        %v3517 = vsub.f32 %v3152, 1.0
        %v3518 = vsub.f32 %v3154, 1.0
        %v3519 = vsub.f32 %v3156, 1.0
        %v3520 = vsub.f32 %v3158, 1.0
        %v3521 = vsub.f32 %v3160, 1.0
        %v3522 = vsub.f32 %v3162, 1.0
        %v3523 = vsub.f32 %v3164, 1.0
        %v3524 = vsub.f32 %v3166, 1.0
        %v3525 = vsub.f32 %v3168, 1.0
        %v3526 = vsub.f32 %v3170, 1.0
        %v3527 = vsub.f32 %v3172, 1.0
        %v3528 = vsub.f32 %v3174, 1.0
        %v3529 = vsub.f32 %v3176, 1.0
        %v3530 = vsub.f32 %v3178, 1.0
        %v3531 = vsub.f32 %v3180, 1.0
        %v3532 = vsub.f32 %v3182, 1.0
        %v3533 = vsub.f32 %v3184, 1.0
        %v3534 = vsub.f32 %v3186, 1.0
        %v3535 = vsub.f32 %v3188, 1.0
        %v3536 = vsub.f32 %v3190, 1.0
        %v3537 = vsub.f32 %v3192, 1.0
        %v3538 = vsub.f32 %v3194, 1.0
        %v3539 = vsub.f32 %v3196, 1.0
        %v3540 = vsub.f32 %v3198, 1.0
        %v3541 = vsub.f32 %v3200, 1.0
        %v3542 = vsub.f32 %v3202, 1.0
        %v3543 = vsub.f32 %v3204, 1.0
        %v3544 = vsub.f32 %v3206, 1.0
        %v3545 = vsub.f32 %v3208, 1.0
        %v3546 = vsub.f32 %v3210, 1.0
        %v3547 = vsub.f32 %v3212, 1.0
        %v3548 = vsub.f32 %v3214, 1.0
        %v3549 = vsub.f32 %v3216, 1.0
        %v3550 = vsub.f32 %v3218, 1.0
        %v3551 = vsub.f32 %v3220, 1.0
        %v3552 = vsub.f32 %v3222, 1.0
        %v3553 = vsub.f32 %v3224, 1.0
        %v3554 = vsub.f32 %v3226, 1.0
        %v3555 = vsub.f32 %v3228, 1.0
        %v3556 = vsub.f32 %v3230, 1.0
        %v3557 = vsub.f32 %v3232, 1.0
        %v3558 = vsub.f32 %v3234, 1.0
        %v3559 = vsub.f32 %v3236, 1.0
        %v3560 = vsub.f32 %v3238, 1.0
        %v3561 = vsub.f32 %v3240, 1.0
        %v3562 = vsub.f32 %v3242, 1.0
        %v3563 = vsub.f32 %v3244, 1.0
        %v3564 = vsub.f32 %v3246, 1.0
        %v3565 = vsub.f32 %v3248, 1.0
        %v3566 = vsub.f32 %v3250, 1.0
        %v3567 = vsub.f32 %v3252, 1.0
        %v3568 = vsub.f32 %v3254, 1.0
        %v3569 = vsub.f32 %v3256, 1.0
        %v3570 = vsub.f32 %v3258, 1.0
        %v3571 = vsub.f32 %v3260, 1.0
        %v3572 = vsub.f32 %v3262, 1.0
        %v3573 = vsub.f32 %v3264, 1.0
        %v3574 = vsub.f32 %v3266, 1.0
        %v3575 = vsub.f32 %v3268, 1.0
        %v3576 = vsub.f32 %v3270, 1.0
        %v3577 = vsub.f32 %v3272, 1.0
        %v3578 = vsub.f32 %v3274, 1.0
        %v3579 = vsub.f32 %v3276, 1.0
        %v3580 = vsub.f32 %v3278, 1.0
        %v3581 = vsub.f32 %v3280, 1.0
        %v3582 = vsub.f32 %v3282, 1.0
        %v3583 = vsub.f32 %v3284, 1.0
        %v3584 = vsub.f32 %v3286, 1.0
        %v3585 = vsub.f32 %v3288, 1.0
        %v3586 = vsub.f32 %v3290, 1.0
        %v3587 = vsub.f32 %v3292, 1.0
        %v3588 = vsub.f32 %v3294, 1.0
        %v3589 = vsub.f32 %v3296, 1.0
        %v3590 = vsub.f32 %v3298, 1.0
        %v3591 = vsub.f32 %v3300, 1.0
        %v3592 = vsub.f32 %v3302, 1.0
        %v3593 = vsub.f32 %v3304, 1.0
        %v3594 = vsub.f32 %v3306, 1.0
        %v3595 = vsub.f32 %v3308, 1.0
        %v3596 = vsub.f32 %v3310, 1.0
        %v3597 = vsub.f32 %v3312, 1.0
        %v3598 = vsub.f32 %v3314, 1.0
        %v3599 = vsub.f32 %v3316, 1.0
        %v3600 = vsub.f32 %v3318, 1.0
        %v3601 = vsub.f32 %v3320, 1.0
        %v3602 = vsub.f32 %v3322, 1.0
        %v3603 = vsub.f32 %v3324, 1.0
        %v3604 = vsub.f32 %v3326, 1.0
        %v3605 = vsub.f32 %v3328, 1.0
        %v3606 = vsub.f32 %v3330, 1.0
        %v3607 = vsub.f32 %v3332, 1.0
        %v3608 = vsub.f32 %v3334, 1.0
        %v3609 = vsub.f32 %v3336, 1.0
        %v3610 = vsub.f32 %v3338, 1.0
        %v3611 = vsub.f32 %v3340, 1.0
        %v3612 = vsub.f32 %v3342, 1.0
        %v3613 = vsub.f32 %v3344, 1.0
        %v3614 = vsub.f32 %v3346, 1.0
        %v3615 = vsub.f32 %v3348, 1.0
        %v3616 = vsub.f32 %v3350, 1.0
        %v3617 = vsub.f32 %v3352, 1.0
        %v3618 = vsub.f32 %v3354, 1.0
        %v3619 = vsub.f32 %v3356, 1.0
        %v3620 = vsub.f32 %v3358, 1.0
        %v3621 = vsub.f32 %v3360, 1.0
        %v3622 = vsub.f32 %v3362, 1.0
        %v3623 = vsub.f32 %v3364, 1.0
        %v3624 = vsub.f32 %v3366, 1.0
        %v3625 = vsub.f32 %v3368, 1.0
        %v3626 = vsub.f32 %v3370, 1.0
        %vm3627 = vcmp.gt.f32.partialorder %v1965, 0.0
        %vm3628 = vcmp.gt.f32.partialorder %v1967, 0.0
        %vm3629 = vcmp.gt.f32.partialorder %v1969, 0.0
        %vm3630 = vcmp.gt.f32.partialorder %v1971, 0.0
        %vm3631 = vcmp.gt.f32.partialorder %v1975, 0.0
        %vm3632 = vcmp.gt.f32.partialorder %v1977, 0.0
        %vm3633 = vcmp.gt.f32.partialorder %v1979, 0.0
        %vm3634 = vcmp.gt.f32.partialorder %v1981, 0.0
        %vm3635 = vcmp.gt.f32.partialorder %v1985, 0.0
        %vm3636 = vcmp.gt.f32.partialorder %v1987, 0.0
        %vm3637 = vcmp.gt.f32.partialorder %v1989, 0.0
        %vm3638 = vcmp.gt.f32.partialorder %v1991, 0.0
        %vm3639 = vcmp.gt.f32.partialorder %v1995, 0.0
        %vm3640 = vcmp.gt.f32.partialorder %v1997, 0.0
        %vm3641 = vcmp.gt.f32.partialorder %v1999, 0.0
        %vm3642 = vcmp.gt.f32.partialorder %v2001, 0.0
        %vm3643 = vcmp.gt.f32.partialorder %v2005, 0.0
        %vm3644 = vcmp.gt.f32.partialorder %v2007, 0.0
        %vm3645 = vcmp.gt.f32.partialorder %v2009, 0.0
        %vm3646 = vcmp.gt.f32.partialorder %v2011, 0.0
        %vm3647 = vcmp.gt.f32.partialorder %v2015, 0.0
        %vm3648 = vcmp.gt.f32.partialorder %v2017, 0.0
        %vm3649 = vcmp.gt.f32.partialorder %v2019, 0.0
        %vm3650 = vcmp.gt.f32.partialorder %v2021, 0.0
        %vm3651 = vcmp.gt.f32.partialorder %v2025, 0.0
        %vm3652 = vcmp.gt.f32.partialorder %v2027, 0.0
        %vm3653 = vcmp.gt.f32.partialorder %v2029, 0.0
        %vm3654 = vcmp.gt.f32.partialorder %v2031, 0.0
        %vm3655 = vcmp.gt.f32.partialorder %v2035, 0.0
        %vm3656 = vcmp.gt.f32.partialorder %v2037, 0.0
        %vm3657 = vcmp.gt.f32.partialorder %v2039, 0.0
        %vm3658 = vcmp.gt.f32.partialorder %v2041, 0.0
        %vm3659 = vcmp.gt.f32.partialorder %v2045, 0.0
        %vm3660 = vcmp.gt.f32.partialorder %v2047, 0.0
        %vm3661 = vcmp.gt.f32.partialorder %v2049, 0.0
        %vm3662 = vcmp.gt.f32.partialorder %v2051, 0.0
        %vm3663 = vcmp.gt.f32.partialorder %v2055, 0.0
        %vm3664 = vcmp.gt.f32.partialorder %v2057, 0.0
        %vm3665 = vcmp.gt.f32.partialorder %v2059, 0.0
        %vm3666 = vcmp.gt.f32.partialorder %v2061, 0.0
        %vm3667 = vcmp.gt.f32.partialorder %v2065, 0.0
        %vm3668 = vcmp.gt.f32.partialorder %v2067, 0.0
        %vm3669 = vcmp.gt.f32.partialorder %v2069, 0.0
        %vm3670 = vcmp.gt.f32.partialorder %v2071, 0.0
        %vm3671 = vcmp.gt.f32.partialorder %v2075, 0.0
        %vm3672 = vcmp.gt.f32.partialorder %v2077, 0.0
        %vm3673 = vcmp.gt.f32.partialorder %v2079, 0.0
        %vm3674 = vcmp.gt.f32.partialorder %v2081, 0.0
        %vm3675 = vcmp.gt.f32.partialorder %v2085, 0.0
        %vm3676 = vcmp.gt.f32.partialorder %v2087, 0.0
        %vm3677 = vcmp.gt.f32.partialorder %v2089, 0.0
        %vm3678 = vcmp.gt.f32.partialorder %v2091, 0.0
        %vm3679 = vcmp.gt.f32.partialorder %v2095, 0.0
        %vm3680 = vcmp.gt.f32.partialorder %v2097, 0.0
        %vm3681 = vcmp.gt.f32.partialorder %v2099, 0.0
        %vm3682 = vcmp.gt.f32.partialorder %v2101, 0.0
        %vm3683 = vcmp.gt.f32.partialorder %v2105, 0.0
        %vm3684 = vcmp.gt.f32.partialorder %v2107, 0.0
        %vm3685 = vcmp.gt.f32.partialorder %v2109, 0.0
        %vm3686 = vcmp.gt.f32.partialorder %v2111, 0.0
        %vm3687 = vcmp.gt.f32.partialorder %v2115, 0.0
        %vm3688 = vcmp.gt.f32.partialorder %v2117, 0.0
        %vm3689 = vcmp.gt.f32.partialorder %v2119, 0.0
        %vm3690 = vcmp.gt.f32.partialorder %v2121, 0.0
        %vm3691 = vcmp.gt.f32.partialorder %v2125, 0.0
        %vm3692 = vcmp.gt.f32.partialorder %v2127, 0.0
        %vm3693 = vcmp.gt.f32.partialorder %v2129, 0.0
        %vm3694 = vcmp.gt.f32.partialorder %v2131, 0.0
        %vm3695 = vcmp.gt.f32.partialorder %v2135, 0.0
        %vm3696 = vcmp.gt.f32.partialorder %v2137, 0.0
        %vm3697 = vcmp.gt.f32.partialorder %v2139, 0.0
        %vm3698 = vcmp.gt.f32.partialorder %v2141, 0.0
        %vm3699 = vcmp.gt.f32.partialorder %v2145, 0.0
        %vm3700 = vcmp.gt.f32.partialorder %v2147, 0.0
        %vm3701 = vcmp.gt.f32.partialorder %v2149, 0.0
        %vm3702 = vcmp.gt.f32.partialorder %v2151, 0.0
        %vm3703 = vcmp.gt.f32.partialorder %v2155, 0.0
        %vm3704 = vcmp.gt.f32.partialorder %v2157, 0.0
        %vm3705 = vcmp.gt.f32.partialorder %v2159, 0.0
        %vm3706 = vcmp.gt.f32.partialorder %v2161, 0.0
        %vm3707 = vcmp.gt.f32.partialorder %v2165, 0.0
        %vm3708 = vcmp.gt.f32.partialorder %v2167, 0.0
        %vm3709 = vcmp.gt.f32.partialorder %v2169, 0.0
        %vm3710 = vcmp.gt.f32.partialorder %v2171, 0.0
        %vm3711 = vcmp.gt.f32.partialorder %v2175, 0.0
        %vm3712 = vcmp.gt.f32.partialorder %v2177, 0.0
        %vm3713 = vcmp.gt.f32.partialorder %v2179, 0.0
        %vm3714 = vcmp.gt.f32.partialorder %v2181, 0.0
        %vm3715 = vcmp.gt.f32.partialorder %v2185, 0.0
        %vm3716 = vcmp.gt.f32.partialorder %v2187, 0.0
        %vm3717 = vcmp.gt.f32.partialorder %v2189, 0.0
        %vm3718 = vcmp.gt.f32.partialorder %v2191, 0.0
        %vm3719 = vcmp.gt.f32.partialorder %v2195, 0.0
        %vm3720 = vcmp.gt.f32.partialorder %v2197, 0.0
        %vm3721 = vcmp.gt.f32.partialorder %v2199, 0.0
        %vm3722 = vcmp.gt.f32.partialorder %v2201, 0.0
        %vm3723 = vcmp.gt.f32.partialorder %v2205, 0.0
        %vm3724 = vcmp.gt.f32.partialorder %v2207, 0.0
        %vm3725 = vcmp.gt.f32.partialorder %v2209, 0.0
        %vm3726 = vcmp.gt.f32.partialorder %v2211, 0.0
        %vm3727 = vcmp.gt.f32.partialorder %v2215, 0.0
        %vm3728 = vcmp.gt.f32.partialorder %v2217, 0.0
        %vm3729 = vcmp.gt.f32.partialorder %v2219, 0.0
        %vm3730 = vcmp.gt.f32.partialorder %v2221, 0.0
        %vm3731 = vcmp.gt.f32.partialorder %v2225, 0.0
        %vm3732 = vcmp.gt.f32.partialorder %v2227, 0.0
        %vm3733 = vcmp.gt.f32.partialorder %v2229, 0.0
        %vm3734 = vcmp.gt.f32.partialorder %v2231, 0.0
        %vm3735 = vcmp.gt.f32.partialorder %v2235, 0.0
        %vm3736 = vcmp.gt.f32.partialorder %v2237, 0.0
        %vm3737 = vcmp.gt.f32.partialorder %v2239, 0.0
        %vm3738 = vcmp.gt.f32.partialorder %v2241, 0.0
        %vm3739 = vcmp.gt.f32.partialorder %v2245, 0.0
        %vm3740 = vcmp.gt.f32.partialorder %v2247, 0.0
        %vm3741 = vcmp.gt.f32.partialorder %v2249, 0.0
        %vm3742 = vcmp.gt.f32.partialorder %v2251, 0.0
        %vm3743 = vcmp.gt.f32.partialorder %v2255, 0.0
        %vm3744 = vcmp.gt.f32.partialorder %v2257, 0.0
        %vm3745 = vcmp.gt.f32.partialorder %v2259, 0.0
        %vm3746 = vcmp.gt.f32.partialorder %v2261, 0.0
        %vm3747 = vcmp.gt.f32.partialorder %v2265, 0.0
        %vm3748 = vcmp.gt.f32.partialorder %v2267, 0.0
        %vm3749 = vcmp.gt.f32.partialorder %v2269, 0.0
        %vm3750 = vcmp.gt.f32.partialorder %v2271, 0.0
        %vm3751 = vcmp.gt.f32.partialorder %v2275, 0.0
        %vm3752 = vcmp.gt.f32.partialorder %v2277, 0.0
        %vm3753 = vcmp.gt.f32.partialorder %v2279, 0.0
        %vm3754 = vcmp.gt.f32.partialorder %v2281, 0.0
        %vm3755 = vcmp.gt.f32.partialorder %v2285, 0.0
        %vm3756 = vcmp.gt.f32.partialorder %v2287, 0.0
        %vm3757 = vcmp.gt.f32.partialorder %v2289, 0.0
        %vm3758 = vcmp.gt.f32.partialorder %v2291, 0.0
        %vm3759 = vcmp.gt.f32.partialorder %v2295, 0.0
        %vm3760 = vcmp.gt.f32.partialorder %v2297, 0.0
        %vm3761 = vcmp.gt.f32.partialorder %v2299, 0.0
        %vm3762 = vcmp.gt.f32.partialorder %v2301, 0.0
        %vm3763 = vcmp.gt.f32.partialorder %v2305, 0.0
        %vm3764 = vcmp.gt.f32.partialorder %v2307, 0.0
        %vm3765 = vcmp.gt.f32.partialorder %v2309, 0.0
        %vm3766 = vcmp.gt.f32.partialorder %v2311, 0.0
        %vm3767 = vcmp.gt.f32.partialorder %v2315, 0.0
        %vm3768 = vcmp.gt.f32.partialorder %v2317, 0.0
        %vm3769 = vcmp.gt.f32.partialorder %v2319, 0.0
        %vm3770 = vcmp.gt.f32.partialorder %v2321, 0.0
        %vm3771 = vcmp.gt.f32.partialorder %v2325, 0.0
        %vm3772 = vcmp.gt.f32.partialorder %v2327, 0.0
        %vm3773 = vcmp.gt.f32.partialorder %v2329, 0.0
        %vm3774 = vcmp.gt.f32.partialorder %v2331, 0.0
        %vm3775 = vcmp.gt.f32.partialorder %v2335, 0.0
        %vm3776 = vcmp.gt.f32.partialorder %v2337, 0.0
        %vm3777 = vcmp.gt.f32.partialorder %v2339, 0.0
        %vm3778 = vcmp.gt.f32.partialorder %v2341, 0.0
        %vm3779 = vcmp.gt.f32.partialorder %v2345, 0.0
        %vm3780 = vcmp.gt.f32.partialorder %v2347, 0.0
        %vm3781 = vcmp.gt.f32.partialorder %v2349, 0.0
        %vm3782 = vcmp.gt.f32.partialorder %v2351, 0.0
        %vm3783 = vcmp.gt.f32.partialorder %v2355, 0.0
        %vm3784 = vcmp.gt.f32.partialorder %v2357, 0.0
        %vm3785 = vcmp.gt.f32.partialorder %v2359, 0.0
        %vm3786 = vcmp.gt.f32.partialorder %v2361, 0.0
        %vm3787 = vcmp.gt.f32.partialorder %v2365, 0.0
        %vm3788 = vcmp.gt.f32.partialorder %v2367, 0.0
        %vm3789 = vcmp.gt.f32.partialorder %v2369, 0.0
        %vm3790 = vcmp.gt.f32.partialorder %v2371, 0.0
        %vm3791 = vcmp.gt.f32.partialorder %v2375, 0.0
        %vm3792 = vcmp.gt.f32.partialorder %v2377, 0.0
        %vm3793 = vcmp.gt.f32.partialorder %v2379, 0.0
        %vm3794 = vcmp.gt.f32.partialorder %v2381, 0.0
        %vm3795 = vcmp.gt.f32.partialorder %v2385, 0.0
        %vm3796 = vcmp.gt.f32.partialorder %v2387, 0.0
        %vm3797 = vcmp.gt.f32.partialorder %v2389, 0.0
        %vm3798 = vcmp.gt.f32.partialorder %v2391, 0.0
        %vm3799 = vcmp.gt.f32.partialorder %v2395, 0.0
        %vm3800 = vcmp.gt.f32.partialorder %v2397, 0.0
        %vm3801 = vcmp.gt.f32.partialorder %v2399, 0.0
        %vm3802 = vcmp.gt.f32.partialorder %v2401, 0.0
        %vm3803 = vcmp.gt.f32.partialorder %v2405, 0.0
        %vm3804 = vcmp.gt.f32.partialorder %v2407, 0.0
        %vm3805 = vcmp.gt.f32.partialorder %v2409, 0.0
        %vm3806 = vcmp.gt.f32.partialorder %v2411, 0.0
        %vm3807 = vcmp.gt.f32.partialorder %v2415, 0.0
        %vm3808 = vcmp.gt.f32.partialorder %v2417, 0.0
        %vm3809 = vcmp.gt.f32.partialorder %v2419, 0.0
        %vm3810 = vcmp.gt.f32.partialorder %v2421, 0.0
        %vm3811 = vcmp.gt.f32.partialorder %v2425, 0.0
        %vm3812 = vcmp.gt.f32.partialorder %v2427, 0.0
        %vm3813 = vcmp.gt.f32.partialorder %v2429, 0.0
        %vm3814 = vcmp.gt.f32.partialorder %v2431, 0.0
        %vm3815 = vcmp.gt.f32.partialorder %v2435, 0.0
        %vm3816 = vcmp.gt.f32.partialorder %v2437, 0.0
        %vm3817 = vcmp.gt.f32.partialorder %v2439, 0.0
        %vm3818 = vcmp.gt.f32.partialorder %v2441, 0.0
        %vm3819 = vcmp.gt.f32.partialorder %v2445, 0.0
        %vm3820 = vcmp.gt.f32.partialorder %v2447, 0.0
        %vm3821 = vcmp.gt.f32.partialorder %v2449, 0.0
        %vm3822 = vcmp.gt.f32.partialorder %v2451, 0.0
        %vm3823 = vcmp.gt.f32.partialorder %v2455, 0.0
        %vm3824 = vcmp.gt.f32.partialorder %v2457, 0.0
        %vm3825 = vcmp.gt.f32.partialorder %v2459, 0.0
        %vm3826 = vcmp.gt.f32.partialorder %v2461, 0.0
        %vm3827 = vcmp.gt.f32.partialorder %v2465, 0.0
        %vm3828 = vcmp.gt.f32.partialorder %v2467, 0.0
        %vm3829 = vcmp.gt.f32.partialorder %v2469, 0.0
        %vm3830 = vcmp.gt.f32.partialorder %v2471, 0.0
        %vm3831 = vcmp.gt.f32.partialorder %v2475, 0.0
        %vm3832 = vcmp.gt.f32.partialorder %v2477, 0.0
        %vm3833 = vcmp.gt.f32.partialorder %v2479, 0.0
        %vm3834 = vcmp.gt.f32.partialorder %v2481, 0.0
        %vm3835 = vcmp.gt.f32.partialorder %v2485, 0.0
        %vm3836 = vcmp.gt.f32.partialorder %v2487, 0.0
        %vm3837 = vcmp.gt.f32.partialorder %v2489, 0.0
        %vm3838 = vcmp.gt.f32.partialorder %v2491, 0.0
        %vm3839 = vcmp.gt.f32.partialorder %v2495, 0.0
        %vm3840 = vcmp.gt.f32.partialorder %v2497, 0.0
        %vm3841 = vcmp.gt.f32.partialorder %v2499, 0.0
        %vm3842 = vcmp.gt.f32.partialorder %v2501, 0.0
        %vm3843 = vcmp.gt.f32.partialorder %v2505, 0.0
        %vm3844 = vcmp.gt.f32.partialorder %v2507, 0.0
        %vm3845 = vcmp.gt.f32.partialorder %v2509, 0.0
        %vm3846 = vcmp.gt.f32.partialorder %v2511, 0.0
        %vm3847 = vcmp.gt.f32.partialorder %v2515, 0.0
        %vm3848 = vcmp.gt.f32.partialorder %v2517, 0.0
        %vm3849 = vcmp.gt.f32.partialorder %v2519, 0.0
        %vm3850 = vcmp.gt.f32.partialorder %v2521, 0.0
        %vm3851 = vcmp.gt.f32.partialorder %v2525, 0.0
        %vm3852 = vcmp.gt.f32.partialorder %v2527, 0.0
        %vm3853 = vcmp.gt.f32.partialorder %v2529, 0.0
        %vm3854 = vcmp.gt.f32.partialorder %v2531, 0.0
        %vm3855 = vcmp.gt.f32.partialorder %v2535, 0.0
        %vm3856 = vcmp.gt.f32.partialorder %v2537, 0.0
        %vm3857 = vcmp.gt.f32.partialorder %v2539, 0.0
        %vm3858 = vcmp.gt.f32.partialorder %v2541, 0.0
        %vm3859 = vcmp.gt.f32.partialorder %v2545, 0.0
        %vm3860 = vcmp.gt.f32.partialorder %v2547, 0.0
        %vm3861 = vcmp.gt.f32.partialorder %v2549, 0.0
        %vm3862 = vcmp.gt.f32.partialorder %v2551, 0.0
        %vm3863 = vcmp.gt.f32.partialorder %v2555, 0.0
        %vm3864 = vcmp.gt.f32.partialorder %v2557, 0.0
        %vm3865 = vcmp.gt.f32.partialorder %v2559, 0.0
        %vm3866 = vcmp.gt.f32.partialorder %v2561, 0.0
        %vm3867 = vcmp.gt.f32.partialorder %v2565, 0.0
        %vm3868 = vcmp.gt.f32.partialorder %v2567, 0.0
        %vm3869 = vcmp.gt.f32.partialorder %v2569, 0.0
        %vm3870 = vcmp.gt.f32.partialorder %v2571, 0.0
        %vm3871 = vcmp.gt.f32.partialorder %v2575, 0.0
        %vm3872 = vcmp.gt.f32.partialorder %v2577, 0.0
        %vm3873 = vcmp.gt.f32.partialorder %v2579, 0.0
        %vm3874 = vcmp.gt.f32.partialorder %v2581, 0.0
        %vm3875 = vcmp.gt.f32.partialorder %v2585, 0.0
        %vm3876 = vcmp.gt.f32.partialorder %v2587, 0.0
        %vm3877 = vcmp.gt.f32.partialorder %v2589, 0.0
        %vm3878 = vcmp.gt.f32.partialorder %v2591, 0.0
        %vm3879 = vcmp.gt.f32.partialorder %v2595, 0.0
        %vm3880 = vcmp.gt.f32.partialorder %v2597, 0.0
        %vm3881 = vcmp.gt.f32.partialorder %v2599, 0.0
        %vm3882 = vcmp.gt.f32.partialorder %v2601, 0.0
        %v3883 = vsel %vm3627, %v1965, %v3371
        %v3884 = vsel %vm3628, %v1967, %v3372
        %v3885 = vsel %vm3629, %v1969, %v3373
        %v3886 = vsel %vm3630, %v1971, %v3374
        %v3887 = vsel %vm3631, %v1975, %v3375
        %v3888 = vsel %vm3632, %v1977, %v3376
        %v3889 = vsel %vm3633, %v1979, %v3377
        %v3890 = vsel %vm3634, %v1981, %v3378
        %v3891 = vsel %vm3635, %v1985, %v3379
        %v3892 = vsel %vm3636, %v1987, %v3380
        %v3893 = vsel %vm3637, %v1989, %v3381
        %v3894 = vsel %vm3638, %v1991, %v3382
        %v3895 = vsel %vm3639, %v1995, %v3383
        %v3896 = vsel %vm3640, %v1997, %v3384
        %v3897 = vsel %vm3641, %v1999, %v3385
        %v3898 = vsel %vm3642, %v2001, %v3386
        %v3899 = vsel %vm3643, %v2005, %v3387
        %v3900 = vsel %vm3644, %v2007, %v3388
        %v3901 = vsel %vm3645, %v2009, %v3389
        %v3902 = vsel %vm3646, %v2011, %v3390
        %v3903 = vsel %vm3647, %v2015, %v3391
        %v3904 = vsel %vm3648, %v2017, %v3392
        %v3905 = vsel %vm3649, %v2019, %v3393
        %v3906 = vsel %vm3650, %v2021, %v3394
        %v3907 = vsel %vm3651, %v2025, %v3395
        %v3908 = vsel %vm3652, %v2027, %v3396
        %v3909 = vsel %vm3653, %v2029, %v3397
        %v3910 = vsel %vm3654, %v2031, %v3398
        %v3911 = vsel %vm3655, %v2035, %v3399
        %v3912 = vsel %vm3656, %v2037, %v3400
        %v3913 = vsel %vm3657, %v2039, %v3401
        %v3914 = vsel %vm3658, %v2041, %v3402
        %v3915 = vsel %vm3659, %v2045, %v3403
        %v3916 = vsel %vm3660, %v2047, %v3404
        %v3917 = vsel %vm3661, %v2049, %v3405
        %v3918 = vsel %vm3662, %v2051, %v3406
        %v3919 = vsel %vm3663, %v2055, %v3407
        %v3920 = vsel %vm3664, %v2057, %v3408
        %v3921 = vsel %vm3665, %v2059, %v3409
        %v3922 = vsel %vm3666, %v2061, %v3410
        %v3923 = vsel %vm3667, %v2065, %v3411
        %v3924 = vsel %vm3668, %v2067, %v3412
        %v3925 = vsel %vm3669, %v2069, %v3413
        %v3926 = vsel %vm3670, %v2071, %v3414
        %v3927 = vsel %vm3671, %v2075, %v3415
        %v3928 = vsel %vm3672, %v2077, %v3416
        %v3929 = vsel %vm3673, %v2079, %v3417
        %v3930 = vsel %vm3674, %v2081, %v3418
        %v3931 = vsel %vm3675, %v2085, %v3419
        %v3932 = vsel %vm3676, %v2087, %v3420
        %v3933 = vsel %vm3677, %v2089, %v3421
        %v3934 = vsel %vm3678, %v2091, %v3422
        %v3935 = vsel %vm3679, %v2095, %v3423
        %v3936 = vsel %vm3680, %v2097, %v3424
        %v3937 = vsel %vm3681, %v2099, %v3425
        %v3938 = vsel %vm3682, %v2101, %v3426
        %v3939 = vsel %vm3683, %v2105, %v3427
        %v3940 = vsel %vm3684, %v2107, %v3428
        %v3941 = vsel %vm3685, %v2109, %v3429
        %v3942 = vsel %vm3686, %v2111, %v3430
        %v3943 = vsel %vm3687, %v2115, %v3431
        %v3944 = vsel %vm3688, %v2117, %v3432
        %v3945 = vsel %vm3689, %v2119, %v3433
        %v3946 = vsel %vm3690, %v2121, %v3434
        %v3947 = vsel %vm3691, %v2125, %v3435
        %v3948 = vsel %vm3692, %v2127, %v3436
        %v3949 = vsel %vm3693, %v2129, %v3437
        %v3950 = vsel %vm3694, %v2131, %v3438
        %v3951 = vsel %vm3695, %v2135, %v3439
        %v3952 = vsel %vm3696, %v2137, %v3440
        %v3953 = vsel %vm3697, %v2139, %v3441
        %v3954 = vsel %vm3698, %v2141, %v3442
        %v3955 = vsel %vm3699, %v2145, %v3443
        %v3956 = vsel %vm3700, %v2147, %v3444
        %v3957 = vsel %vm3701, %v2149, %v3445
        %v3958 = vsel %vm3702, %v2151, %v3446
        %v3959 = vsel %vm3703, %v2155, %v3447
        %v3960 = vsel %vm3704, %v2157, %v3448
        %v3961 = vsel %vm3705, %v2159, %v3449
        %v3962 = vsel %vm3706, %v2161, %v3450
        %v3963 = vsel %vm3707, %v2165, %v3451
        %v3964 = vsel %vm3708, %v2167, %v3452
        %v3965 = vsel %vm3709, %v2169, %v3453
        %v3966 = vsel %vm3710, %v2171, %v3454
        %v3967 = vsel %vm3711, %v2175, %v3455
        %v3968 = vsel %vm3712, %v2177, %v3456
        %v3969 = vsel %vm3713, %v2179, %v3457
        %v3970 = vsel %vm3714, %v2181, %v3458
        %v3971 = vsel %vm3715, %v2185, %v3459
        %v3972 = vsel %vm3716, %v2187, %v3460
        %v3973 = vsel %vm3717, %v2189, %v3461
        %v3974 = vsel %vm3718, %v2191, %v3462
        %v3975 = vsel %vm3719, %v2195, %v3463
        %v3976 = vsel %vm3720, %v2197, %v3464
        %v3977 = vsel %vm3721, %v2199, %v3465
        %v3978 = vsel %vm3722, %v2201, %v3466
        %v3979 = vsel %vm3723, %v2205, %v3467
        %v3980 = vsel %vm3724, %v2207, %v3468
        %v3981 = vsel %vm3725, %v2209, %v3469
        %v3982 = vsel %vm3726, %v2211, %v3470
        %v3983 = vsel %vm3727, %v2215, %v3471
        %v3984 = vsel %vm3728, %v2217, %v3472
        %v3985 = vsel %vm3729, %v2219, %v3473
        %v3986 = vsel %vm3730, %v2221, %v3474
        %v3987 = vsel %vm3731, %v2225, %v3475
        %v3988 = vsel %vm3732, %v2227, %v3476
        %v3989 = vsel %vm3733, %v2229, %v3477
        %v3990 = vsel %vm3734, %v2231, %v3478
        %v3991 = vsel %vm3735, %v2235, %v3479
        %v3992 = vsel %vm3736, %v2237, %v3480
        %v3993 = vsel %vm3737, %v2239, %v3481
        %v3994 = vsel %vm3738, %v2241, %v3482
        %v3995 = vsel %vm3739, %v2245, %v3483
        %v3996 = vsel %vm3740, %v2247, %v3484
        %v3997 = vsel %vm3741, %v2249, %v3485
        %v3998 = vsel %vm3742, %v2251, %v3486
        %v3999 = vsel %vm3743, %v2255, %v3487
        %v4000 = vsel %vm3744, %v2257, %v3488
        %v4001 = vsel %vm3745, %v2259, %v3489
        %v4002 = vsel %vm3746, %v2261, %v3490
        %v4003 = vsel %vm3747, %v2265, %v3491
        %v4004 = vsel %vm3748, %v2267, %v3492
        %v4005 = vsel %vm3749, %v2269, %v3493
        %v4006 = vsel %vm3750, %v2271, %v3494
        %v4007 = vsel %vm3751, %v2275, %v3495
        %v4008 = vsel %vm3752, %v2277, %v3496
        %v4009 = vsel %vm3753, %v2279, %v3497
        %v4010 = vsel %vm3754, %v2281, %v3498
        %v4011 = vsel %vm3755, %v2285, %v3499
        %v4012 = vsel %vm3756, %v2287, %v3500
        %v4013 = vsel %vm3757, %v2289, %v3501
        %v4014 = vsel %vm3758, %v2291, %v3502
        %v4015 = vsel %vm3759, %v2295, %v3503
        %v4016 = vsel %vm3760, %v2297, %v3504
        %v4017 = vsel %vm3761, %v2299, %v3505
        %v4018 = vsel %vm3762, %v2301, %v3506
        %v4019 = vsel %vm3763, %v2305, %v3507
        %v4020 = vsel %vm3764, %v2307, %v3508
        %v4021 = vsel %vm3765, %v2309, %v3509
        %v4022 = vsel %vm3766, %v2311, %v3510
        %v4023 = vsel %vm3767, %v2315, %v3511
        %v4024 = vsel %vm3768, %v2317, %v3512
        %v4025 = vsel %vm3769, %v2319, %v3513
        %v4026 = vsel %vm3770, %v2321, %v3514
        %v4027 = vsel %vm3771, %v2325, %v3515
        %v4028 = vsel %vm3772, %v2327, %v3516
        %v4029 = vsel %vm3773, %v2329, %v3517
        %v4030 = vsel %vm3774, %v2331, %v3518
        %v4031 = vsel %vm3775, %v2335, %v3519
        %v4032 = vsel %vm3776, %v2337, %v3520
        %v4033 = vsel %vm3777, %v2339, %v3521
        %v4034 = vsel %vm3778, %v2341, %v3522
        %v4035 = vsel %vm3779, %v2345, %v3523
        %v4036 = vsel %vm3780, %v2347, %v3524
        %v4037 = vsel %vm3781, %v2349, %v3525
        %v4038 = vsel %vm3782, %v2351, %v3526
        %v4039 = vsel %vm3783, %v2355, %v3527
        %v4040 = vsel %vm3784, %v2357, %v3528
        %v4041 = vsel %vm3785, %v2359, %v3529
        %v4042 = vsel %vm3786, %v2361, %v3530
        %v4043 = vsel %vm3787, %v2365, %v3531
        %v4044 = vsel %vm3788, %v2367, %v3532
        %v4045 = vsel %vm3789, %v2369, %v3533
        %v4046 = vsel %vm3790, %v2371, %v3534
        %v4047 = vsel %vm3791, %v2375, %v3535
        %v4048 = vsel %vm3792, %v2377, %v3536
        %v4049 = vsel %vm3793, %v2379, %v3537
        %v4050 = vsel %vm3794, %v2381, %v3538
        %v4051 = vsel %vm3795, %v2385, %v3539
        %v4052 = vsel %vm3796, %v2387, %v3540
        %v4053 = vsel %vm3797, %v2389, %v3541
        %v4054 = vsel %vm3798, %v2391, %v3542
        %v4055 = vsel %vm3799, %v2395, %v3543
        %v4056 = vsel %vm3800, %v2397, %v3544
        %v4057 = vsel %vm3801, %v2399, %v3545
        %v4058 = vsel %vm3802, %v2401, %v3546
        %v4059 = vsel %vm3803, %v2405, %v3547
        %v4060 = vsel %vm3804, %v2407, %v3548
        %v4061 = vsel %vm3805, %v2409, %v3549
        %v4062 = vsel %vm3806, %v2411, %v3550
        %v4063 = vsel %vm3807, %v2415, %v3551
        %v4064 = vsel %vm3808, %v2417, %v3552
        %v4065 = vsel %vm3809, %v2419, %v3553
        %v4066 = vsel %vm3810, %v2421, %v3554
        %v4067 = vsel %vm3811, %v2425, %v3555
        %v4068 = vsel %vm3812, %v2427, %v3556
        %v4069 = vsel %vm3813, %v2429, %v3557
        %v4070 = vsel %vm3814, %v2431, %v3558
        %v4071 = vsel %vm3815, %v2435, %v3559
        %v4072 = vsel %vm3816, %v2437, %v3560
        %v4073 = vsel %vm3817, %v2439, %v3561
        %v4074 = vsel %vm3818, %v2441, %v3562
        %v4075 = vsel %vm3819, %v2445, %v3563
        %v4076 = vsel %vm3820, %v2447, %v3564
        %v4077 = vsel %vm3821, %v2449, %v3565
        %v4078 = vsel %vm3822, %v2451, %v3566
        %v4079 = vsel %vm3823, %v2455, %v3567
        %v4080 = vsel %vm3824, %v2457, %v3568
        %v4081 = vsel %vm3825, %v2459, %v3569
        %v4082 = vsel %vm3826, %v2461, %v3570
        %v4083 = vsel %vm3827, %v2465, %v3571
        %v4084 = vsel %vm3828, %v2467, %v3572
        %v4085 = vsel %vm3829, %v2469, %v3573
        %v4086 = vsel %vm3830, %v2471, %v3574
        %v4087 = vsel %vm3831, %v2475, %v3575
        %v4088 = vsel %vm3832, %v2477, %v3576
        %v4089 = vsel %vm3833, %v2479, %v3577
        %v4090 = vsel %vm3834, %v2481, %v3578
        %v4091 = vsel %vm3835, %v2485, %v3579
        %v4092 = vsel %vm3836, %v2487, %v3580
        %v4093 = vsel %vm3837, %v2489, %v3581
        %v4094 = vsel %vm3838, %v2491, %v3582
        %v4095 = vsel %vm3839, %v2495, %v3583
        %v4096 = vsel %vm3840, %v2497, %v3584
        %v4097 = vsel %vm3841, %v2499, %v3585
        %v4098 = vsel %vm3842, %v2501, %v3586
        %v4099 = vsel %vm3843, %v2505, %v3587
        %v4100 = vsel %vm3844, %v2507, %v3588
        %v4101 = vsel %vm3845, %v2509, %v3589
        %v4102 = vsel %vm3846, %v2511, %v3590
        %v4103 = vsel %vm3847, %v2515, %v3591
        %v4104 = vsel %vm3848, %v2517, %v3592
        %v4105 = vsel %vm3849, %v2519, %v3593
        %v4106 = vsel %vm3850, %v2521, %v3594
        %v4107 = vsel %vm3851, %v2525, %v3595
        %v4108 = vsel %vm3852, %v2527, %v3596
        %v4109 = vsel %vm3853, %v2529, %v3597
        %v4110 = vsel %vm3854, %v2531, %v3598
        %v4111 = vsel %vm3855, %v2535, %v3599
        %v4112 = vsel %vm3856, %v2537, %v3600
        %v4113 = vsel %vm3857, %v2539, %v3601
        %v4114 = vsel %vm3858, %v2541, %v3602
        %v4115 = vsel %vm3859, %v2545, %v3603
        %v4116 = vsel %vm3860, %v2547, %v3604
        %v4117 = vsel %vm3861, %v2549, %v3605
        %v4118 = vsel %vm3862, %v2551, %v3606
        %v4119 = vsel %vm3863, %v2555, %v3607
        %v4120 = vsel %vm3864, %v2557, %v3608
        %v4121 = vsel %vm3865, %v2559, %v3609
        %v4122 = vsel %vm3866, %v2561, %v3610
        %v4123 = vsel %vm3867, %v2565, %v3611
        %v4124 = vsel %vm3868, %v2567, %v3612
        %v4125 = vsel %vm3869, %v2569, %v3613
        %v4126 = vsel %vm3870, %v2571, %v3614
        %v4127 = vsel %vm3871, %v2575, %v3615
        %v4128 = vsel %vm3872, %v2577, %v3616
        %v4129 = vsel %vm3873, %v2579, %v3617
        %v4130 = vsel %vm3874, %v2581, %v3618
        %v4131 = vsel %vm3875, %v2585, %v3619
        %v4132 = vsel %vm3876, %v2587, %v3620
        %v4133 = vsel %vm3877, %v2589, %v3621
        %v4134 = vsel %vm3878, %v2591, %v3622
        %v4135 = vsel %vm3879, %v2595, %v3623
        %v4136 = vsel %vm3880, %v2597, %v3624
        %v4137 = vsel %vm3881, %v2599, %v3625
        %v4138 = vsel %vm3882, %v2601, %v3626
        %v4139 = vpack.c.bf16 %v3885, %v3883
        %v4140 = vpack.c.bf16 %v3886, %v3884
        %v4141 = vpack.c.bf16 %v3889, %v3887
        %v4142 = vpack.c.bf16 %v3890, %v3888
        %v4143 = vpack.c.bf16 %v3893, %v3891
        %v4144 = vpack.c.bf16 %v3894, %v3892
        %v4145 = vpack.c.bf16 %v3897, %v3895
        %v4146 = vpack.c.bf16 %v3898, %v3896
        %v4147 = vpack.c.bf16 %v3901, %v3899
        %v4148 = vpack.c.bf16 %v3902, %v3900
        %v4149 = vpack.c.bf16 %v3905, %v3903
        %v4150 = vpack.c.bf16 %v3906, %v3904
        %v4151 = vpack.c.bf16 %v3909, %v3907
        %v4152 = vpack.c.bf16 %v3910, %v3908
        %v4153 = vpack.c.bf16 %v3913, %v3911
        %v4154 = vpack.c.bf16 %v3914, %v3912
        %v4155 = vpack.c.bf16 %v3917, %v3915
        %v4156 = vpack.c.bf16 %v3918, %v3916
        %v4157 = vpack.c.bf16 %v3921, %v3919
        %v4158 = vpack.c.bf16 %v3922, %v3920
        %v4159 = vpack.c.bf16 %v3925, %v3923
        %v4160 = vpack.c.bf16 %v3926, %v3924
        %v4161 = vpack.c.bf16 %v3929, %v3927
        %v4162 = vpack.c.bf16 %v3930, %v3928
        %v4163 = vpack.c.bf16 %v3933, %v3931
        %v4164 = vpack.c.bf16 %v3934, %v3932
        %v4165 = vpack.c.bf16 %v3937, %v3935
        %v4166 = vpack.c.bf16 %v3938, %v3936
        %v4167 = vpack.c.bf16 %v3941, %v3939
        %v4168 = vpack.c.bf16 %v3942, %v3940
        %v4169 = vpack.c.bf16 %v3945, %v3943
        %v4170 = vpack.c.bf16 %v3946, %v3944
        %v4171 = vpack.c.bf16 %v3949, %v3947
        %v4172 = vpack.c.bf16 %v3950, %v3948
        %v4173 = vpack.c.bf16 %v3953, %v3951
        %v4174 = vpack.c.bf16 %v3954, %v3952
        %v4175 = vpack.c.bf16 %v3957, %v3955
        %v4176 = vpack.c.bf16 %v3958, %v3956
        %v4177 = vpack.c.bf16 %v3961, %v3959
        %v4178 = vpack.c.bf16 %v3962, %v3960
        %v4179 = vpack.c.bf16 %v3965, %v3963
        %v4180 = vpack.c.bf16 %v3966, %v3964
        %v4181 = vpack.c.bf16 %v3969, %v3967
        %v4182 = vpack.c.bf16 %v3970, %v3968
        %v4183 = vpack.c.bf16 %v3973, %v3971
        %v4184 = vpack.c.bf16 %v3974, %v3972
        %v4185 = vpack.c.bf16 %v3977, %v3975
        %v4186 = vpack.c.bf16 %v3978, %v3976
        %v4187 = vpack.c.bf16 %v3981, %v3979
        %v4188 = vpack.c.bf16 %v3982, %v3980
        %v4189 = vpack.c.bf16 %v3985, %v3983
        %v4190 = vpack.c.bf16 %v3986, %v3984
        %v4191 = vpack.c.bf16 %v3989, %v3987
        %v4192 = vpack.c.bf16 %v3990, %v3988
        %v4193 = vpack.c.bf16 %v3993, %v3991
        %v4194 = vpack.c.bf16 %v3994, %v3992
        %v4195 = vpack.c.bf16 %v3997, %v3995
        %v4196 = vpack.c.bf16 %v3998, %v3996
        %v4197 = vpack.c.bf16 %v4001, %v3999
        %v4198 = vpack.c.bf16 %v4002, %v4000
        %v4199 = vpack.c.bf16 %v4005, %v4003
        %v4200 = vpack.c.bf16 %v4006, %v4004
        %v4201 = vpack.c.bf16 %v4009, %v4007
        %v4202 = vpack.c.bf16 %v4010, %v4008
        %v4203 = vpack.c.bf16 %v4013, %v4011
        %v4204 = vpack.c.bf16 %v4014, %v4012
        %v4205 = vpack.c.bf16 %v4017, %v4015
        %v4206 = vpack.c.bf16 %v4018, %v4016
        %v4207 = vpack.c.bf16 %v4021, %v4019
        %v4208 = vpack.c.bf16 %v4022, %v4020
        %v4209 = vpack.c.bf16 %v4025, %v4023
        %v4210 = vpack.c.bf16 %v4026, %v4024
        %v4211 = vpack.c.bf16 %v4029, %v4027
        %v4212 = vpack.c.bf16 %v4030, %v4028
        %v4213 = vpack.c.bf16 %v4033, %v4031
        %v4214 = vpack.c.bf16 %v4034, %v4032
        %v4215 = vpack.c.bf16 %v4037, %v4035
        %v4216 = vpack.c.bf16 %v4038, %v4036
        %v4217 = vpack.c.bf16 %v4041, %v4039
        %v4218 = vpack.c.bf16 %v4042, %v4040
        %v4219 = vpack.c.bf16 %v4045, %v4043
        %v4220 = vpack.c.bf16 %v4046, %v4044
        %v4221 = vpack.c.bf16 %v4049, %v4047
        %v4222 = vpack.c.bf16 %v4050, %v4048
        %v4223 = vpack.c.bf16 %v4053, %v4051
        %v4224 = vpack.c.bf16 %v4054, %v4052
        %v4225 = vpack.c.bf16 %v4057, %v4055
        %v4226 = vpack.c.bf16 %v4058, %v4056
        %v4227 = vpack.c.bf16 %v4061, %v4059
        %v4228 = vpack.c.bf16 %v4062, %v4060
        %v4229 = vpack.c.bf16 %v4065, %v4063
        %v4230 = vpack.c.bf16 %v4066, %v4064
        %v4231 = vpack.c.bf16 %v4069, %v4067
        %v4232 = vpack.c.bf16 %v4070, %v4068
        %v4233 = vpack.c.bf16 %v4073, %v4071
        %v4234 = vpack.c.bf16 %v4074, %v4072
        %v4235 = vpack.c.bf16 %v4077, %v4075
        %v4236 = vpack.c.bf16 %v4078, %v4076
        %v4237 = vpack.c.bf16 %v4081, %v4079
        %v4238 = vpack.c.bf16 %v4082, %v4080
        %v4239 = vpack.c.bf16 %v4085, %v4083
        %v4240 = vpack.c.bf16 %v4086, %v4084
        %v4241 = vpack.c.bf16 %v4089, %v4087
        %v4242 = vpack.c.bf16 %v4090, %v4088
        %v4243 = vpack.c.bf16 %v4093, %v4091
        %v4244 = vpack.c.bf16 %v4094, %v4092
        %v4245 = vpack.c.bf16 %v4097, %v4095
        %v4246 = vpack.c.bf16 %v4098, %v4096
        %v4247 = vpack.c.bf16 %v4101, %v4099
        %v4248 = vpack.c.bf16 %v4102, %v4100
        %v4249 = vpack.c.bf16 %v4105, %v4103
        %v4250 = vpack.c.bf16 %v4106, %v4104
        %v4251 = vpack.c.bf16 %v4109, %v4107
        %v4252 = vpack.c.bf16 %v4110, %v4108
        %v4253 = vpack.c.bf16 %v4113, %v4111
        %v4254 = vpack.c.bf16 %v4114, %v4112
        %v4255 = vpack.c.bf16 %v4117, %v4115
        %v4256 = vpack.c.bf16 %v4118, %v4116
        %v4257 = vpack.c.bf16 %v4121, %v4119
        %v4258 = vpack.c.bf16 %v4122, %v4120
        %v4259 = vpack.c.bf16 %v4125, %v4123
        %v4260 = vpack.c.bf16 %v4126, %v4124
        %v4261 = vpack.c.bf16 %v4129, %v4127
        %v4262 = vpack.c.bf16 %v4130, %v4128
        %v4263 = vpack.c.bf16 %v4133, %v4131
        %v4264 = vpack.c.bf16 %v4134, %v4132
        %v4265 = vpack.c.bf16 %v4137, %v4135
        %v4266 = vpack.c.bf16 %v4138, %v4136
        %v4267 = vld [vmem:[#allocation8] sm:$0xf]
        %v4268 = vld [vmem:[#allocation8 + $0x4] sm:$0xf]
        %v4269 = vld [vmem:[#allocation8 + $0x8] sm:$0xf]
        %v4270 = vld [vmem:[#allocation8 + $0xc] sm:$0xf]
        %v4271 = vld [vmem:[#allocation8 + $0x10] sm:$0xf]
        %v4272 = vld [vmem:[#allocation8 + $0x14] sm:$0xf]
        %v4273 = vld [vmem:[#allocation8 + $0x18] sm:$0xf]
        %v4274 = vld [vmem:[#allocation8 + $0x1c] sm:$0xf]
        %v4275 = vld [vmem:[#allocation8 + $0x20] sm:$0xf]
        %v4276 = vld [vmem:[#allocation8 + $0x24] sm:$0xf]
        %v4277 = vld [vmem:[#allocation8 + $0x28] sm:$0xf]
        %v4278 = vld [vmem:[#allocation8 + $0x2c] sm:$0xf]
        %v4279 = vld [vmem:[#allocation8 + $0x30] sm:$0xf]
        %v4280 = vld [vmem:[#allocation8 + $0x34] sm:$0xf]
        %v4281 = vld [vmem:[#allocation8 + $0x38] sm:$0xf]
        %v4282 = vld [vmem:[#allocation8 + $0x3c] sm:$0xf]
        %v4283 = vld [vmem:[#allocation8 + $0x40] sm:$0xf]
        %v4284 = vld [vmem:[#allocation8 + $0x44] sm:$0xf]
        %v4285 = vld [vmem:[#allocation8 + $0x48] sm:$0xf]
        %v4286 = vld [vmem:[#allocation8 + $0x4c] sm:$0xf]
        %v4287 = vld [vmem:[#allocation8 + $0x50] sm:$0xf]
        %v4288 = vld [vmem:[#allocation8 + $0x54] sm:$0xf]
        %v4289 = vld [vmem:[#allocation8 + $0x58] sm:$0xf]
        %v4290 = vld [vmem:[#allocation8 + $0x5c] sm:$0xf]
        %v4291 = vld [vmem:[#allocation8 + $0x60] sm:$0xf]
        %v4292 = vld [vmem:[#allocation8 + $0x64] sm:$0xf]
        %v4293 = vld [vmem:[#allocation8 + $0x68] sm:$0xf]
        %v4294 = vld [vmem:[#allocation8 + $0x6c] sm:$0xf]
        %v4295 = vld [vmem:[#allocation8 + $0x70] sm:$0xf]
        %v4296 = vld [vmem:[#allocation8 + $0x74] sm:$0xf]
        %v4297 = vld [vmem:[#allocation8 + $0x78] sm:$0xf]
        %v4298 = vld [vmem:[#allocation8 + $0x7c] sm:$0xf]
        %v4299 = vld [vmem:[#allocation10] sm:$0x1]
        %v4301 = vlaneseq
        %v4302 = vshrl.u32 %v4301, 7
        %v4303 = vsub.s32 0, %v4302
        %v4304 = vrot.slane %v4299, %v4303
        %v4338 = vunpack.c.l.b16 %v4267
        %v4339 = vunpack.c.l.b16 %v4268
        %v4340 = vunpack.c.l.b16 %v4269
        %v4341 = vunpack.c.l.b16 %v4270
        %v4342 = vunpack.c.l.b16 %v4271
        %v4343 = vunpack.c.l.b16 %v4272
        %v4344 = vunpack.c.l.b16 %v4273
        %v4345 = vunpack.c.l.b16 %v4274
        %v4346 = vunpack.c.l.b16 %v4275
        %v4347 = vunpack.c.l.b16 %v4276
        %v4348 = vunpack.c.l.b16 %v4277
        %v4349 = vunpack.c.l.b16 %v4278
        %v4350 = vunpack.c.l.b16 %v4279
        %v4351 = vunpack.c.l.b16 %v4280
        %v4352 = vunpack.c.l.b16 %v4281
        %v4353 = vunpack.c.l.b16 %v4282
        %v4354 = vunpack.c.l.b16 %v4283
        %v4355 = vunpack.c.l.b16 %v4284
        %v4356 = vunpack.c.l.b16 %v4285
        %v4357 = vunpack.c.l.b16 %v4286
        %v4358 = vunpack.c.l.b16 %v4287
        %v4359 = vunpack.c.l.b16 %v4288
        %v4360 = vunpack.c.l.b16 %v4289
        %v4361 = vunpack.c.l.b16 %v4290
        %v4362 = vunpack.c.l.b16 %v4291
        %v4363 = vunpack.c.l.b16 %v4292
        %v4364 = vunpack.c.l.b16 %v4293
        %v4365 = vunpack.c.l.b16 %v4294
        %v4366 = vunpack.c.l.b16 %v4295
        %v4367 = vunpack.c.l.b16 %v4296
        %v4368 = vunpack.c.l.b16 %v4297
        %v4369 = vunpack.c.l.b16 %v4298
        %v4370 = vpack.c.b16 %v4339, %v4338
        %v4371 = vpack.c.b16 %v4341, %v4340
        %v4372 = vpack.c.b16 %v4343, %v4342
        %v4373 = vpack.c.b16 %v4345, %v4344
        %v4374 = vpack.c.b16 %v4347, %v4346
        %v4375 = vpack.c.b16 %v4349, %v4348
        %v4376 = vpack.c.b16 %v4351, %v4350
        %v4377 = vpack.c.b16 %v4353, %v4352
        %v4378 = vpack.c.b16 %v4355, %v4354
        %v4379 = vpack.c.b16 %v4357, %v4356
        %v4380 = vpack.c.b16 %v4359, %v4358
        %v4381 = vpack.c.b16 %v4361, %v4360
        %v4382 = vpack.c.b16 %v4363, %v4362
        %v4383 = vpack.c.b16 %v4365, %v4364
        %v4384 = vpack.c.b16 %v4367, %v4366
        %v4385 = vpack.c.b16 %v4369, %v4368
        %4402 = vmatprep.subr.bf16.mxu0 0
        %4403 = vmatpush1.bf16.msra.mxu0 %v4377
        %4404 = vmatprep.subr.bf16.mxu0 0
        %4405 = vmatpush1.bf16.msra.mxu0 %v4376
        %4406 = vmatprep.subr.bf16.mxu0 0
        %4407 = vmatpush1.bf16.msra.mxu0 %v4375
        %4408 = vmatprep.subr.bf16.mxu0 0
        %4409 = vmatpush1.bf16.msra.mxu0 %v4374
        %4410 = vmatprep.subr.bf16.mxu0 0
        %4411 = vmatpush1.bf16.msra.mxu0 %v4373
        %4412 = vmatprep.subr.bf16.mxu0 0
        %4413 = vmatpush1.bf16.msra.mxu0 %v4372
        %4414 = vmatprep.subr.bf16.mxu0 0
        %4415 = vmatpush1.bf16.msra.mxu0 %v4371
        %4416 = vmatprep.subr.bf16.mxu0 0
        %4417 = vmatpush1.bf16.msra.mxu0 %v4370
        %4418 = vmatprep.subr.bf16.mxu0 0
        %4419 = vmatpush2.bf16.msra.mxu0 %v4385
        %4420 = vmatprep.subr.bf16.mxu0 0
        %4421 = vmatpush2.bf16.msra.mxu0 %v4384
        %4422 = vmatprep.subr.bf16.mxu0 0
        %4423 = vmatpush2.bf16.msra.mxu0 %v4383
        %4424 = vmatprep.subr.bf16.mxu0 0
        %4425 = vmatpush2.bf16.msra.mxu0 %v4382
        %4426 = vmatprep.subr.bf16.mxu0 0
        %4427 = vmatpush2.bf16.msra.mxu0 %v4381
        %4428 = vmatprep.subr.bf16.mxu0 0
        %4429 = vmatpush2.bf16.msra.mxu0 %v4380
        %4430 = vmatprep.subr.bf16.mxu0 0
        %4431 = vmatpush2.bf16.msra.mxu0 %v4379
        %4432 = vmatprep.subr.bf16.mxu0 0
        %4433 = vmatpush2.bf16.msra.mxu0 %v4378
        %4434 = vmatprep.mubr.bf16.mxu0 %v4140
        %4435 = vmatmul.mubr.bf16.gmra.mxu0 %v4139
        %v4436 = vpop.f32.mrf.mxu0
        %v4437 = vadd.f32 %v4304, %v4436
        %v4438 = vpop.f32.mrf.mxu0
        %v4439 = vpop.f32.mrf.mxu0
        %v4440 = vadd.f32 %v4304, %v4439
        %v4441 = vpop.f32.mrf.mxu0
        %4442 = vmatprep.mubr.bf16.mxu0 %v4142
        %4443 = vmatmul.mubr.bf16.gmra.mxu0 %v4141
        %v4444 = vpop.f32.mrf.mxu0
        %v4445 = vadd.f32 %v4304, %v4444
        %v4446 = vpop.f32.mrf.mxu0
        %v4447 = vpop.f32.mrf.mxu0
        %v4448 = vadd.f32 %v4304, %v4447
        %v4449 = vpop.f32.mrf.mxu0
        %4450 = vmatprep.mubr.bf16.mxu0 %v4144
        %4451 = vmatmul.mubr.bf16.gmra.mxu0 %v4143
        %v4452 = vpop.f32.mrf.mxu0
        %v4453 = vadd.f32 %v4304, %v4452
        %v4454 = vpop.f32.mrf.mxu0
        %v4455 = vpop.f32.mrf.mxu0
        %v4456 = vadd.f32 %v4304, %v4455
        %v4457 = vpop.f32.mrf.mxu0
        %4458 = vmatprep.mubr.bf16.mxu0 %v4146
        %4459 = vmatmul.mubr.bf16.gmra.mxu0 %v4145
        %v4460 = vpop.f32.mrf.mxu0
        %v4461 = vadd.f32 %v4304, %v4460
        %v4462 = vpop.f32.mrf.mxu0
        %v4463 = vpop.f32.mrf.mxu0
        %v4464 = vadd.f32 %v4304, %v4463
        %v4465 = vpop.f32.mrf.mxu0
        %4466 = vmatprep.mubr.bf16.mxu0 %v4148
        %4467 = vmatmul.mubr.bf16.gmra.mxu0 %v4147
        %v4468 = vpop.f32.mrf.mxu0
        %v4469 = vadd.f32 %v4304, %v4468
        %v4470 = vpop.f32.mrf.mxu0
        %v4471 = vpop.f32.mrf.mxu0
        %v4472 = vadd.f32 %v4304, %v4471
        %v4473 = vpop.f32.mrf.mxu0
        %4474 = vmatprep.mubr.bf16.mxu0 %v4150
        %4475 = vmatmul.mubr.bf16.gmra.mxu0 %v4149
        %v4476 = vpop.f32.mrf.mxu0
        %v4477 = vadd.f32 %v4304, %v4476
        %v4478 = vpop.f32.mrf.mxu0
        %v4479 = vpop.f32.mrf.mxu0
        %v4480 = vadd.f32 %v4304, %v4479
        %v4481 = vpop.f32.mrf.mxu0
        %4482 = vmatprep.mubr.bf16.mxu0 %v4152
        %4483 = vmatmul.mubr.bf16.gmra.mxu0 %v4151
        %v4484 = vpop.f32.mrf.mxu0
        %v4485 = vadd.f32 %v4304, %v4484
        %v4486 = vpop.f32.mrf.mxu0
        %v4487 = vpop.f32.mrf.mxu0
        %v4488 = vadd.f32 %v4304, %v4487
        %v4489 = vpop.f32.mrf.mxu0
        %4490 = vmatprep.mubr.bf16.mxu0 %v4154
        %4491 = vmatmul.mubr.bf16.gmra.mxu0 %v4153
        %v4492 = vpop.f32.mrf.mxu0
        %v4493 = vadd.f32 %v4304, %v4492
        %v4494 = vpop.f32.mrf.mxu0
        %v4495 = vpop.f32.mrf.mxu0
        %v4496 = vadd.f32 %v4304, %v4495
        %v4497 = vpop.f32.mrf.mxu0
        %4498 = vmatprep.mubr.bf16.mxu0 %v4156
        %4499 = vmatmul.mubr.bf16.gmra.mxu0 %v4155
        %v4500 = vpop.f32.mrf.mxu0
        %v4501 = vadd.f32 %v4304, %v4500
        %v4502 = vpop.f32.mrf.mxu0
        %v4503 = vpop.f32.mrf.mxu0
        %v4504 = vadd.f32 %v4304, %v4503
        %v4505 = vpop.f32.mrf.mxu0
        %4506 = vmatprep.mubr.bf16.mxu0 %v4158
        %4507 = vmatmul.mubr.bf16.gmra.mxu0 %v4157
        %v4508 = vpop.f32.mrf.mxu0
        %v4509 = vadd.f32 %v4304, %v4508
        %v4510 = vpop.f32.mrf.mxu0
        %v4511 = vpop.f32.mrf.mxu0
        %v4512 = vadd.f32 %v4304, %v4511
        %v4513 = vpop.f32.mrf.mxu0
        %4514 = vmatprep.mubr.bf16.mxu0 %v4160
        %4515 = vmatmul.mubr.bf16.gmra.mxu0 %v4159
        %v4516 = vpop.f32.mrf.mxu0
        %v4517 = vadd.f32 %v4304, %v4516
        %v4518 = vpop.f32.mrf.mxu0
        %v4519 = vpop.f32.mrf.mxu0
        %v4520 = vadd.f32 %v4304, %v4519
        %v4521 = vpop.f32.mrf.mxu0
        %4522 = vmatprep.mubr.bf16.mxu0 %v4162
        %4523 = vmatmul.mubr.bf16.gmra.mxu0 %v4161
        %v4524 = vpop.f32.mrf.mxu0
        %v4525 = vadd.f32 %v4304, %v4524
        %v4526 = vpop.f32.mrf.mxu0
        %v4527 = vpop.f32.mrf.mxu0
        %v4528 = vadd.f32 %v4304, %v4527
        %v4529 = vpop.f32.mrf.mxu0
        %4530 = vmatprep.mubr.bf16.mxu0 %v4164
        %4531 = vmatmul.mubr.bf16.gmra.mxu0 %v4163
        %v4532 = vpop.f32.mrf.mxu0
        %v4533 = vadd.f32 %v4304, %v4532
        %v4534 = vpop.f32.mrf.mxu0
        %v4535 = vpop.f32.mrf.mxu0
        %v4536 = vadd.f32 %v4304, %v4535
        %v4537 = vpop.f32.mrf.mxu0
        %4538 = vmatprep.mubr.bf16.mxu0 %v4166
        %4539 = vmatmul.mubr.bf16.gmra.mxu0 %v4165
        %v4540 = vpop.f32.mrf.mxu0
        %v4541 = vadd.f32 %v4304, %v4540
        %v4542 = vpop.f32.mrf.mxu0
        %v4543 = vpop.f32.mrf.mxu0
        %v4544 = vadd.f32 %v4304, %v4543
        %v4545 = vpop.f32.mrf.mxu0
        %4546 = vmatprep.mubr.bf16.mxu0 %v4168
        %4547 = vmatmul.mubr.bf16.gmra.mxu0 %v4167
        %v4548 = vpop.f32.mrf.mxu0
        %v4549 = vadd.f32 %v4304, %v4548
        %v4550 = vpop.f32.mrf.mxu0
        %v4551 = vpop.f32.mrf.mxu0
        %v4552 = vadd.f32 %v4304, %v4551
        %v4553 = vpop.f32.mrf.mxu0
        %4554 = vmatprep.mubr.bf16.mxu0 %v4170
        %4555 = vmatmul.mubr.bf16.gmra.mxu0 %v4169
        %v4556 = vpop.f32.mrf.mxu0
        %v4557 = vadd.f32 %v4304, %v4556
        %v4558 = vpop.f32.mrf.mxu0
        %v4559 = vpop.f32.mrf.mxu0
        %v4560 = vadd.f32 %v4304, %v4559
        %v4561 = vpop.f32.mrf.mxu0
        %4562 = vmatprep.mubr.bf16.mxu0 %v4172
        %4563 = vmatmul.mubr.bf16.gmra.mxu0 %v4171
        %v4564 = vpop.f32.mrf.mxu0
        %v4565 = vadd.f32 %v4304, %v4564
        %v4566 = vpop.f32.mrf.mxu0
        %v4567 = vpop.f32.mrf.mxu0
        %v4568 = vadd.f32 %v4304, %v4567
        %v4569 = vpop.f32.mrf.mxu0
        %4570 = vmatprep.mubr.bf16.mxu0 %v4174
        %4571 = vmatmul.mubr.bf16.gmra.mxu0 %v4173
        %v4572 = vpop.f32.mrf.mxu0
        %v4573 = vadd.f32 %v4304, %v4572
        %v4574 = vpop.f32.mrf.mxu0
        %v4575 = vpop.f32.mrf.mxu0
        %v4576 = vadd.f32 %v4304, %v4575
        %v4577 = vpop.f32.mrf.mxu0
        %4578 = vmatprep.mubr.bf16.mxu0 %v4176
        %4579 = vmatmul.mubr.bf16.gmra.mxu0 %v4175
        %v4580 = vpop.f32.mrf.mxu0
        %v4581 = vadd.f32 %v4304, %v4580
        %v4582 = vpop.f32.mrf.mxu0
        %v4583 = vpop.f32.mrf.mxu0
        %v4584 = vadd.f32 %v4304, %v4583
        %v4585 = vpop.f32.mrf.mxu0
        %4586 = vmatprep.mubr.bf16.mxu0 %v4178
        %4587 = vmatmul.mubr.bf16.gmra.mxu0 %v4177
        %v4588 = vpop.f32.mrf.mxu0
        %v4589 = vadd.f32 %v4304, %v4588
        %v4590 = vpop.f32.mrf.mxu0
        %v4591 = vpop.f32.mrf.mxu0
        %v4592 = vadd.f32 %v4304, %v4591
        %v4593 = vpop.f32.mrf.mxu0
        %4594 = vmatprep.mubr.bf16.mxu0 %v4180
        %4595 = vmatmul.mubr.bf16.gmra.mxu0 %v4179
        %v4596 = vpop.f32.mrf.mxu0
        %v4597 = vadd.f32 %v4304, %v4596
        %v4598 = vpop.f32.mrf.mxu0
        %v4599 = vpop.f32.mrf.mxu0
        %v4600 = vadd.f32 %v4304, %v4599
        %v4601 = vpop.f32.mrf.mxu0
        %4602 = vmatprep.mubr.bf16.mxu0 %v4182
        %4603 = vmatmul.mubr.bf16.gmra.mxu0 %v4181
        %v4604 = vpop.f32.mrf.mxu0
        %v4605 = vadd.f32 %v4304, %v4604
        %v4606 = vpop.f32.mrf.mxu0
        %v4607 = vpop.f32.mrf.mxu0
        %v4608 = vadd.f32 %v4304, %v4607
        %v4609 = vpop.f32.mrf.mxu0
        %4610 = vmatprep.mubr.bf16.mxu0 %v4184
        %4611 = vmatmul.mubr.bf16.gmra.mxu0 %v4183
        %v4612 = vpop.f32.mrf.mxu0
        %v4613 = vadd.f32 %v4304, %v4612
        %v4614 = vpop.f32.mrf.mxu0
        %v4615 = vpop.f32.mrf.mxu0
        %v4616 = vadd.f32 %v4304, %v4615
        %v4617 = vpop.f32.mrf.mxu0
        %4618 = vmatprep.mubr.bf16.mxu0 %v4186
        %4619 = vmatmul.mubr.bf16.gmra.mxu0 %v4185
        %v4620 = vpop.f32.mrf.mxu0
        %v4621 = vadd.f32 %v4304, %v4620
        %v4622 = vpop.f32.mrf.mxu0
        %v4623 = vpop.f32.mrf.mxu0
        %v4624 = vadd.f32 %v4304, %v4623
        %v4625 = vpop.f32.mrf.mxu0
        %4626 = vmatprep.mubr.bf16.mxu0 %v4188
        %4627 = vmatmul.mubr.bf16.gmra.mxu0 %v4187
        %v4628 = vpop.f32.mrf.mxu0
        %v4629 = vadd.f32 %v4304, %v4628
        %v4630 = vpop.f32.mrf.mxu0
        %v4631 = vpop.f32.mrf.mxu0
        %v4632 = vadd.f32 %v4304, %v4631
        %v4633 = vpop.f32.mrf.mxu0
        %4634 = vmatprep.mubr.bf16.mxu0 %v4190
        %4635 = vmatmul.mubr.bf16.gmra.mxu0 %v4189
        %v4636 = vpop.f32.mrf.mxu0
        %v4637 = vadd.f32 %v4304, %v4636
        %v4638 = vpop.f32.mrf.mxu0
        %v4639 = vpop.f32.mrf.mxu0
        %v4640 = vadd.f32 %v4304, %v4639
        %v4641 = vpop.f32.mrf.mxu0
        %4642 = vmatprep.mubr.bf16.mxu0 %v4192
        %4643 = vmatmul.mubr.bf16.gmra.mxu0 %v4191
        %v4644 = vpop.f32.mrf.mxu0
        %v4645 = vadd.f32 %v4304, %v4644
        %v4646 = vpop.f32.mrf.mxu0
        %v4647 = vpop.f32.mrf.mxu0
        %v4648 = vadd.f32 %v4304, %v4647
        %v4649 = vpop.f32.mrf.mxu0
        %4650 = vmatprep.mubr.bf16.mxu0 %v4194
        %4651 = vmatmul.mubr.bf16.gmra.mxu0 %v4193
        %v4652 = vpop.f32.mrf.mxu0
        %v4653 = vadd.f32 %v4304, %v4652
        %v4654 = vpop.f32.mrf.mxu0
        %v4655 = vpop.f32.mrf.mxu0
        %v4656 = vadd.f32 %v4304, %v4655
        %v4657 = vpop.f32.mrf.mxu0
        %4658 = vmatprep.mubr.bf16.mxu0 %v4196
        %4659 = vmatmul.mubr.bf16.gmra.mxu0 %v4195
        %v4660 = vpop.f32.mrf.mxu0
        %v4661 = vadd.f32 %v4304, %v4660
        %v4662 = vpop.f32.mrf.mxu0
        %v4663 = vpop.f32.mrf.mxu0
        %v4664 = vadd.f32 %v4304, %v4663
        %v4665 = vpop.f32.mrf.mxu0
        %4666 = vmatprep.mubr.bf16.mxu0 %v4198
        %4667 = vmatmul.mubr.bf16.gmra.mxu0 %v4197
        %v4668 = vpop.f32.mrf.mxu0
        %v4669 = vadd.f32 %v4304, %v4668
        %v4670 = vpop.f32.mrf.mxu0
        %v4671 = vpop.f32.mrf.mxu0
        %v4672 = vadd.f32 %v4304, %v4671
        %v4673 = vpop.f32.mrf.mxu0
        %4674 = vmatprep.mubr.bf16.mxu0 %v4200
        %4675 = vmatmul.mubr.bf16.gmra.mxu0 %v4199
        %v4676 = vpop.f32.mrf.mxu0
        %v4677 = vadd.f32 %v4304, %v4676
        %v4678 = vpop.f32.mrf.mxu0
        %v4679 = vpop.f32.mrf.mxu0
        %v4680 = vadd.f32 %v4304, %v4679
        %v4681 = vpop.f32.mrf.mxu0
        %4682 = vmatprep.mubr.bf16.mxu0 %v4202
        %4683 = vmatmul.mubr.bf16.gmra.mxu0 %v4201
        %v4684 = vpop.f32.mrf.mxu0
        %v4685 = vadd.f32 %v4304, %v4684
        %v4686 = vpop.f32.mrf.mxu0
        %v4687 = vpop.f32.mrf.mxu0
        %v4688 = vadd.f32 %v4304, %v4687
        %v4689 = vpop.f32.mrf.mxu0
        %4690 = vmatprep.mubr.bf16.mxu0 %v4204
        %4691 = vmatmul.mubr.bf16.gmra.mxu0 %v4203
        %v4692 = vpop.f32.mrf.mxu0
        %v4693 = vadd.f32 %v4304, %v4692
        %v4694 = vpop.f32.mrf.mxu0
        %v4695 = vpop.f32.mrf.mxu0
        %v4696 = vadd.f32 %v4304, %v4695
        %v4697 = vpop.f32.mrf.mxu0
        %4698 = vmatprep.mubr.bf16.mxu0 %v4206
        %4699 = vmatmul.mubr.bf16.gmra.mxu0 %v4205
        %v4700 = vpop.f32.mrf.mxu0
        %v4701 = vadd.f32 %v4304, %v4700
        %v4702 = vpop.f32.mrf.mxu0
        %v4703 = vpop.f32.mrf.mxu0
        %v4704 = vadd.f32 %v4304, %v4703
        %v4705 = vpop.f32.mrf.mxu0
        %4706 = vmatprep.mubr.bf16.mxu0 %v4208
        %4707 = vmatmul.mubr.bf16.gmra.mxu0 %v4207
        %v4708 = vpop.f32.mrf.mxu0
        %v4709 = vadd.f32 %v4304, %v4708
        %v4710 = vpop.f32.mrf.mxu0
        %v4711 = vpop.f32.mrf.mxu0
        %v4712 = vadd.f32 %v4304, %v4711
        %v4713 = vpop.f32.mrf.mxu0
        %4714 = vmatprep.mubr.bf16.mxu0 %v4210
        %4715 = vmatmul.mubr.bf16.gmra.mxu0 %v4209
        %v4716 = vpop.f32.mrf.mxu0
        %v4717 = vadd.f32 %v4304, %v4716
        %v4718 = vpop.f32.mrf.mxu0
        %v4719 = vpop.f32.mrf.mxu0
        %v4720 = vadd.f32 %v4304, %v4719
        %v4721 = vpop.f32.mrf.mxu0
        %4722 = vmatprep.mubr.bf16.mxu0 %v4212
        %4723 = vmatmul.mubr.bf16.gmra.mxu0 %v4211
        %v4724 = vpop.f32.mrf.mxu0
        %v4725 = vadd.f32 %v4304, %v4724
        %v4726 = vpop.f32.mrf.mxu0
        %v4727 = vpop.f32.mrf.mxu0
        %v4728 = vadd.f32 %v4304, %v4727
        %v4729 = vpop.f32.mrf.mxu0
        %4730 = vmatprep.mubr.bf16.mxu0 %v4214
        %4731 = vmatmul.mubr.bf16.gmra.mxu0 %v4213
        %v4732 = vpop.f32.mrf.mxu0
        %v4733 = vadd.f32 %v4304, %v4732
        %v4734 = vpop.f32.mrf.mxu0
        %v4735 = vpop.f32.mrf.mxu0
        %v4736 = vadd.f32 %v4304, %v4735
        %v4737 = vpop.f32.mrf.mxu0
        %4738 = vmatprep.mubr.bf16.mxu0 %v4216
        %4739 = vmatmul.mubr.bf16.gmra.mxu0 %v4215
        %v4740 = vpop.f32.mrf.mxu0
        %v4741 = vadd.f32 %v4304, %v4740
        %v4742 = vpop.f32.mrf.mxu0
        %v4743 = vpop.f32.mrf.mxu0
        %v4744 = vadd.f32 %v4304, %v4743
        %v4745 = vpop.f32.mrf.mxu0
        %4746 = vmatprep.mubr.bf16.mxu0 %v4218
        %4747 = vmatmul.mubr.bf16.gmra.mxu0 %v4217
        %v4748 = vpop.f32.mrf.mxu0
        %v4749 = vadd.f32 %v4304, %v4748
        %v4750 = vpop.f32.mrf.mxu0
        %v4751 = vpop.f32.mrf.mxu0
        %v4752 = vadd.f32 %v4304, %v4751
        %v4753 = vpop.f32.mrf.mxu0
        %4754 = vmatprep.mubr.bf16.mxu0 %v4220
        %4755 = vmatmul.mubr.bf16.gmra.mxu0 %v4219
        %v4756 = vpop.f32.mrf.mxu0
        %v4757 = vadd.f32 %v4304, %v4756
        %v4758 = vpop.f32.mrf.mxu0
        %v4759 = vpop.f32.mrf.mxu0
        %v4760 = vadd.f32 %v4304, %v4759
        %v4761 = vpop.f32.mrf.mxu0
        %4762 = vmatprep.mubr.bf16.mxu0 %v4222
        %4763 = vmatmul.mubr.bf16.gmra.mxu0 %v4221
        %v4764 = vpop.f32.mrf.mxu0
        %v4765 = vadd.f32 %v4304, %v4764
        %v4766 = vpop.f32.mrf.mxu0
        %v4767 = vpop.f32.mrf.mxu0
        %v4768 = vadd.f32 %v4304, %v4767
        %v4769 = vpop.f32.mrf.mxu0
        %4770 = vmatprep.mubr.bf16.mxu0 %v4224
        %4771 = vmatmul.mubr.bf16.gmra.mxu0 %v4223
        %v4772 = vpop.f32.mrf.mxu0
        %v4773 = vadd.f32 %v4304, %v4772
        %v4774 = vpop.f32.mrf.mxu0
        %v4775 = vpop.f32.mrf.mxu0
        %v4776 = vadd.f32 %v4304, %v4775
        %v4777 = vpop.f32.mrf.mxu0
        %4778 = vmatprep.mubr.bf16.mxu0 %v4226
        %4779 = vmatmul.mubr.bf16.gmra.mxu0 %v4225
        %v4780 = vpop.f32.mrf.mxu0
        %v4781 = vadd.f32 %v4304, %v4780
        %v4782 = vpop.f32.mrf.mxu0
        %v4783 = vpop.f32.mrf.mxu0
        %v4784 = vadd.f32 %v4304, %v4783
        %v4785 = vpop.f32.mrf.mxu0
        %4786 = vmatprep.mubr.bf16.mxu0 %v4228
        %4787 = vmatmul.mubr.bf16.gmra.mxu0 %v4227
        %v4788 = vpop.f32.mrf.mxu0
        %v4789 = vadd.f32 %v4304, %v4788
        %v4790 = vpop.f32.mrf.mxu0
        %v4791 = vpop.f32.mrf.mxu0
        %v4792 = vadd.f32 %v4304, %v4791
        %v4793 = vpop.f32.mrf.mxu0
        %4794 = vmatprep.mubr.bf16.mxu0 %v4230
        %4795 = vmatmul.mubr.bf16.gmra.mxu0 %v4229
        %v4796 = vpop.f32.mrf.mxu0
        %v4797 = vadd.f32 %v4304, %v4796
        %v4798 = vpop.f32.mrf.mxu0
        %v4799 = vpop.f32.mrf.mxu0
        %v4800 = vadd.f32 %v4304, %v4799
        %v4801 = vpop.f32.mrf.mxu0
        %4802 = vmatprep.mubr.bf16.mxu0 %v4232
        %4803 = vmatmul.mubr.bf16.gmra.mxu0 %v4231
        %v4804 = vpop.f32.mrf.mxu0
        %v4805 = vadd.f32 %v4304, %v4804
        %v4806 = vpop.f32.mrf.mxu0
        %v4807 = vpop.f32.mrf.mxu0
        %v4808 = vadd.f32 %v4304, %v4807
        %v4809 = vpop.f32.mrf.mxu0
        %4810 = vmatprep.mubr.bf16.mxu0 %v4234
        %4811 = vmatmul.mubr.bf16.gmra.mxu0 %v4233
        %v4812 = vpop.f32.mrf.mxu0
        %v4813 = vadd.f32 %v4304, %v4812
        %v4814 = vpop.f32.mrf.mxu0
        %v4815 = vpop.f32.mrf.mxu0
        %v4816 = vadd.f32 %v4304, %v4815
        %v4817 = vpop.f32.mrf.mxu0
        %4818 = vmatprep.mubr.bf16.mxu0 %v4236
        %4819 = vmatmul.mubr.bf16.gmra.mxu0 %v4235
        %v4820 = vpop.f32.mrf.mxu0
        %v4821 = vadd.f32 %v4304, %v4820
        %v4822 = vpop.f32.mrf.mxu0
        %v4823 = vpop.f32.mrf.mxu0
        %v4824 = vadd.f32 %v4304, %v4823
        %v4825 = vpop.f32.mrf.mxu0
        %4826 = vmatprep.mubr.bf16.mxu0 %v4238
        %4827 = vmatmul.mubr.bf16.gmra.mxu0 %v4237
        %v4828 = vpop.f32.mrf.mxu0
        %v4829 = vadd.f32 %v4304, %v4828
        %v4830 = vpop.f32.mrf.mxu0
        %v4831 = vpop.f32.mrf.mxu0
        %v4832 = vadd.f32 %v4304, %v4831
        %v4833 = vpop.f32.mrf.mxu0
        %4834 = vmatprep.mubr.bf16.mxu0 %v4240
        %4835 = vmatmul.mubr.bf16.gmra.mxu0 %v4239
        %v4836 = vpop.f32.mrf.mxu0
        %v4837 = vadd.f32 %v4304, %v4836
        %v4838 = vpop.f32.mrf.mxu0
        %v4839 = vpop.f32.mrf.mxu0
        %v4840 = vadd.f32 %v4304, %v4839
        %v4841 = vpop.f32.mrf.mxu0
        %4842 = vmatprep.mubr.bf16.mxu0 %v4242
        %4843 = vmatmul.mubr.bf16.gmra.mxu0 %v4241
        %v4844 = vpop.f32.mrf.mxu0
        %v4845 = vadd.f32 %v4304, %v4844
        %v4846 = vpop.f32.mrf.mxu0
        %v4847 = vpop.f32.mrf.mxu0
        %v4848 = vadd.f32 %v4304, %v4847
        %v4849 = vpop.f32.mrf.mxu0
        %4850 = vmatprep.mubr.bf16.mxu0 %v4244
        %4851 = vmatmul.mubr.bf16.gmra.mxu0 %v4243
        %v4852 = vpop.f32.mrf.mxu0
        %v4853 = vadd.f32 %v4304, %v4852
        %v4854 = vpop.f32.mrf.mxu0
        %v4855 = vpop.f32.mrf.mxu0
        %v4856 = vadd.f32 %v4304, %v4855
        %v4857 = vpop.f32.mrf.mxu0
        %4858 = vmatprep.mubr.bf16.mxu0 %v4246
        %4859 = vmatmul.mubr.bf16.gmra.mxu0 %v4245
        %v4860 = vpop.f32.mrf.mxu0
        %v4861 = vadd.f32 %v4304, %v4860
        %v4862 = vpop.f32.mrf.mxu0
        %v4863 = vpop.f32.mrf.mxu0
        %v4864 = vadd.f32 %v4304, %v4863
        %v4865 = vpop.f32.mrf.mxu0
        %4866 = vmatprep.mubr.bf16.mxu0 %v4248
        %4867 = vmatmul.mubr.bf16.gmra.mxu0 %v4247
        %v4868 = vpop.f32.mrf.mxu0
        %v4869 = vadd.f32 %v4304, %v4868
        %v4870 = vpop.f32.mrf.mxu0
        %v4871 = vpop.f32.mrf.mxu0
        %v4872 = vadd.f32 %v4304, %v4871
        %v4873 = vpop.f32.mrf.mxu0
        %4874 = vmatprep.mubr.bf16.mxu0 %v4250
        %4875 = vmatmul.mubr.bf16.gmra.mxu0 %v4249
        %v4876 = vpop.f32.mrf.mxu0
        %v4877 = vadd.f32 %v4304, %v4876
        %v4878 = vpop.f32.mrf.mxu0
        %v4879 = vpop.f32.mrf.mxu0
        %v4880 = vadd.f32 %v4304, %v4879
        %v4881 = vpop.f32.mrf.mxu0
        %4882 = vmatprep.mubr.bf16.mxu0 %v4252
        %4883 = vmatmul.mubr.bf16.gmra.mxu0 %v4251
        %v4884 = vpop.f32.mrf.mxu0
        %v4885 = vadd.f32 %v4304, %v4884
        %v4886 = vpop.f32.mrf.mxu0
        %v4887 = vpop.f32.mrf.mxu0
        %v4888 = vadd.f32 %v4304, %v4887
        %v4889 = vpop.f32.mrf.mxu0
        %4890 = vmatprep.mubr.bf16.mxu0 %v4254
        %4891 = vmatmul.mubr.bf16.gmra.mxu0 %v4253
        %v4892 = vpop.f32.mrf.mxu0
        %v4893 = vadd.f32 %v4304, %v4892
        %v4894 = vpop.f32.mrf.mxu0
        %v4895 = vpop.f32.mrf.mxu0
        %v4896 = vadd.f32 %v4304, %v4895
        %v4897 = vpop.f32.mrf.mxu0
        %4898 = vmatprep.mubr.bf16.mxu0 %v4256
        %4899 = vmatmul.mubr.bf16.gmra.mxu0 %v4255
        %v4900 = vpop.f32.mrf.mxu0
        %v4901 = vadd.f32 %v4304, %v4900
        %v4902 = vpop.f32.mrf.mxu0
        %v4903 = vpop.f32.mrf.mxu0
        %v4904 = vadd.f32 %v4304, %v4903
        %v4905 = vpop.f32.mrf.mxu0
        %4906 = vmatprep.mubr.bf16.mxu0 %v4258
        %4907 = vmatmul.mubr.bf16.gmra.mxu0 %v4257
        %v4908 = vpop.f32.mrf.mxu0
        %v4909 = vadd.f32 %v4304, %v4908
        %v4910 = vpop.f32.mrf.mxu0
        %v4911 = vpop.f32.mrf.mxu0
        %v4912 = vadd.f32 %v4304, %v4911
        %v4913 = vpop.f32.mrf.mxu0
        %4914 = vmatprep.mubr.bf16.mxu0 %v4260
        %4915 = vmatmul.mubr.bf16.gmra.mxu0 %v4259
        %v4916 = vpop.f32.mrf.mxu0
        %v4917 = vadd.f32 %v4304, %v4916
        %v4918 = vpop.f32.mrf.mxu0
        %v4919 = vpop.f32.mrf.mxu0
        %v4920 = vadd.f32 %v4304, %v4919
        %v4921 = vpop.f32.mrf.mxu0
        %4922 = vmatprep.mubr.bf16.mxu0 %v4262
        %4923 = vmatmul.mubr.bf16.gmra.mxu0 %v4261
        %v4924 = vpop.f32.mrf.mxu0
        %v4925 = vadd.f32 %v4304, %v4924
        %v4926 = vpop.f32.mrf.mxu0
        %v4927 = vpop.f32.mrf.mxu0
        %v4928 = vadd.f32 %v4304, %v4927
        %v4929 = vpop.f32.mrf.mxu0
        %4930 = vmatprep.mubr.bf16.mxu0 %v4264
        %4931 = vmatmul.mubr.bf16.gmra.mxu0 %v4263
        %v4932 = vpop.f32.mrf.mxu0
        %v4933 = vadd.f32 %v4304, %v4932
        %v4934 = vpop.f32.mrf.mxu0
        %v4935 = vpop.f32.mrf.mxu0
        %v4936 = vadd.f32 %v4304, %v4935
        %v4937 = vpop.f32.mrf.mxu0
        %4938 = vmatprep.mubr.bf16.mxu0 %v4266
        %4939 = vmatmul.mubr.bf16.gmra.mxu0 %v4265
        %v4940 = vpop.f32.mrf.mxu0
        %v4941 = vadd.f32 %v4304, %v4940
        %v4942 = vpop.f32.mrf.mxu0
        %v4943 = vpop.f32.mrf.mxu0
        %v4944 = vadd.f32 %v4304, %v4943
        %v4945 = vpop.f32.mrf.mxu0
        %4946 = vdwg.mxu0
        %v4947 = vmin.f32 %v4437, 0.0
        %v4948 = vmin.f32 %v4440, 0.0
        %v4949 = vmin.f32 %v4445, 0.0
        %v4950 = vmin.f32 %v4448, 0.0
        %v4951 = vmin.f32 %v4453, 0.0
        %v4952 = vmin.f32 %v4456, 0.0
        %v4953 = vmin.f32 %v4461, 0.0
        %v4954 = vmin.f32 %v4464, 0.0
        %v4955 = vmin.f32 %v4469, 0.0
        %v4956 = vmin.f32 %v4472, 0.0
        %v4957 = vmin.f32 %v4477, 0.0
        %v4958 = vmin.f32 %v4480, 0.0
        %v4959 = vmin.f32 %v4485, 0.0
        %v4960 = vmin.f32 %v4488, 0.0
        %v4961 = vmin.f32 %v4493, 0.0
        %v4962 = vmin.f32 %v4496, 0.0
        %v4963 = vmin.f32 %v4501, 0.0
        %v4964 = vmin.f32 %v4504, 0.0
        %v4965 = vmin.f32 %v4509, 0.0
        %v4966 = vmin.f32 %v4512, 0.0
        %v4967 = vmin.f32 %v4517, 0.0
        %v4968 = vmin.f32 %v4520, 0.0
        %v4969 = vmin.f32 %v4525, 0.0
        %v4970 = vmin.f32 %v4528, 0.0
        %v4971 = vmin.f32 %v4533, 0.0
        %v4972 = vmin.f32 %v4536, 0.0
        %v4973 = vmin.f32 %v4541, 0.0
        %v4974 = vmin.f32 %v4544, 0.0
        %v4975 = vmin.f32 %v4549, 0.0
        %v4976 = vmin.f32 %v4552, 0.0
        %v4977 = vmin.f32 %v4557, 0.0
        %v4978 = vmin.f32 %v4560, 0.0
        %v4979 = vmin.f32 %v4565, 0.0
        %v4980 = vmin.f32 %v4568, 0.0
        %v4981 = vmin.f32 %v4573, 0.0
        %v4982 = vmin.f32 %v4576, 0.0
        %v4983 = vmin.f32 %v4581, 0.0
        %v4984 = vmin.f32 %v4584, 0.0
        %v4985 = vmin.f32 %v4589, 0.0
        %v4986 = vmin.f32 %v4592, 0.0
        %v4987 = vmin.f32 %v4597, 0.0
        %v4988 = vmin.f32 %v4600, 0.0
        %v4989 = vmin.f32 %v4605, 0.0
        %v4990 = vmin.f32 %v4608, 0.0
        %v4991 = vmin.f32 %v4613, 0.0
        %v4992 = vmin.f32 %v4616, 0.0
        %v4993 = vmin.f32 %v4621, 0.0
        %v4994 = vmin.f32 %v4624, 0.0
        %v4995 = vmin.f32 %v4629, 0.0
        %v4996 = vmin.f32 %v4632, 0.0
        %v4997 = vmin.f32 %v4637, 0.0
        %v4998 = vmin.f32 %v4640, 0.0
        %v4999 = vmin.f32 %v4645, 0.0
        %v5000 = vmin.f32 %v4648, 0.0
        %v5001 = vmin.f32 %v4653, 0.0
        %v5002 = vmin.f32 %v4656, 0.0
        %v5003 = vmin.f32 %v4661, 0.0
        %v5004 = vmin.f32 %v4664, 0.0
        %v5005 = vmin.f32 %v4669, 0.0
        %v5006 = vmin.f32 %v4672, 0.0
        %v5007 = vmin.f32 %v4677, 0.0
        %v5008 = vmin.f32 %v4680, 0.0
        %v5009 = vmin.f32 %v4685, 0.0
        %v5010 = vmin.f32 %v4688, 0.0
        %v5011 = vmin.f32 %v4693, 0.0
        %v5012 = vmin.f32 %v4696, 0.0
        %v5013 = vmin.f32 %v4701, 0.0
        %v5014 = vmin.f32 %v4704, 0.0
        %v5015 = vmin.f32 %v4709, 0.0
        %v5016 = vmin.f32 %v4712, 0.0
        %v5017 = vmin.f32 %v4717, 0.0
        %v5018 = vmin.f32 %v4720, 0.0
        %v5019 = vmin.f32 %v4725, 0.0
        %v5020 = vmin.f32 %v4728, 0.0
        %v5021 = vmin.f32 %v4733, 0.0
        %v5022 = vmin.f32 %v4736, 0.0
        %v5023 = vmin.f32 %v4741, 0.0
        %v5024 = vmin.f32 %v4744, 0.0
        %v5025 = vmin.f32 %v4749, 0.0
        %v5026 = vmin.f32 %v4752, 0.0
        %v5027 = vmin.f32 %v4757, 0.0
        %v5028 = vmin.f32 %v4760, 0.0
        %v5029 = vmin.f32 %v4765, 0.0
        %v5030 = vmin.f32 %v4768, 0.0
        %v5031 = vmin.f32 %v4773, 0.0
        %v5032 = vmin.f32 %v4776, 0.0
        %v5033 = vmin.f32 %v4781, 0.0
        %v5034 = vmin.f32 %v4784, 0.0
        %v5035 = vmin.f32 %v4789, 0.0
        %v5036 = vmin.f32 %v4792, 0.0
        %v5037 = vmin.f32 %v4797, 0.0
        %v5038 = vmin.f32 %v4800, 0.0
        %v5039 = vmin.f32 %v4805, 0.0
        %v5040 = vmin.f32 %v4808, 0.0
        %v5041 = vmin.f32 %v4813, 0.0
        %v5042 = vmin.f32 %v4816, 0.0
        %v5043 = vmin.f32 %v4821, 0.0
        %v5044 = vmin.f32 %v4824, 0.0
        %v5045 = vmin.f32 %v4829, 0.0
        %v5046 = vmin.f32 %v4832, 0.0
        %v5047 = vmin.f32 %v4837, 0.0
        %v5048 = vmin.f32 %v4840, 0.0
        %v5049 = vmin.f32 %v4845, 0.0
        %v5050 = vmin.f32 %v4848, 0.0
        %v5051 = vmin.f32 %v4853, 0.0
        %v5052 = vmin.f32 %v4856, 0.0
        %v5053 = vmin.f32 %v4861, 0.0
        %v5054 = vmin.f32 %v4864, 0.0
        %v5055 = vmin.f32 %v4869, 0.0
        %v5056 = vmin.f32 %v4872, 0.0
        %v5057 = vmin.f32 %v4877, 0.0
        %v5058 = vmin.f32 %v4880, 0.0
        %v5059 = vmin.f32 %v4885, 0.0
        %v5060 = vmin.f32 %v4888, 0.0
        %v5061 = vmin.f32 %v4893, 0.0
        %v5062 = vmin.f32 %v4896, 0.0
        %v5063 = vmin.f32 %v4901, 0.0
        %v5064 = vmin.f32 %v4904, 0.0
        %v5065 = vmin.f32 %v4909, 0.0
        %v5066 = vmin.f32 %v4912, 0.0
        %v5067 = vmin.f32 %v4917, 0.0
        %v5068 = vmin.f32 %v4920, 0.0
        %v5069 = vmin.f32 %v4925, 0.0
        %v5070 = vmin.f32 %v4928, 0.0
        %v5071 = vmin.f32 %v4933, 0.0
        %v5072 = vmin.f32 %v4936, 0.0
        %v5073 = vmin.f32 %v4941, 0.0
        %v5074 = vmin.f32 %v4944, 0.0
        %v5075 = vmul.f32 %v4947, 1.442695
        %v5076 = vpow.pop %v5075
        %v5077 = vmul.f32 %v4948, 1.442695
        %v5078 = vpow.pop %v5077
        %v5079 = vmul.f32 %v4949, 1.442695
        %v5080 = vpow.pop %v5079
        %v5081 = vmul.f32 %v4950, 1.442695
        %v5082 = vpow.pop %v5081
        %v5083 = vmul.f32 %v4951, 1.442695
        %v5084 = vpow.pop %v5083
        %v5085 = vmul.f32 %v4952, 1.442695
        %v5086 = vpow.pop %v5085
        %v5087 = vmul.f32 %v4953, 1.442695
        %v5088 = vpow.pop %v5087
        %v5089 = vmul.f32 %v4954, 1.442695
        %v5090 = vpow.pop %v5089
        %v5091 = vmul.f32 %v4955, 1.442695
        %v5092 = vpow.pop %v5091
        %v5093 = vmul.f32 %v4956, 1.442695
        %v5094 = vpow.pop %v5093
        %v5095 = vmul.f32 %v4957, 1.442695
        %v5096 = vpow.pop %v5095
        %v5097 = vmul.f32 %v4958, 1.442695
        %v5098 = vpow.pop %v5097
        %v5099 = vmul.f32 %v4959, 1.442695
        %v5100 = vpow.pop %v5099
        %v5101 = vmul.f32 %v4960, 1.442695
        %v5102 = vpow.pop %v5101
        %v5103 = vmul.f32 %v4961, 1.442695
        %v5104 = vpow.pop %v5103
        %v5105 = vmul.f32 %v4962, 1.442695
        %v5106 = vpow.pop %v5105
        %v5107 = vmul.f32 %v4963, 1.442695
        %v5108 = vpow.pop %v5107
        %v5109 = vmul.f32 %v4964, 1.442695
        %v5110 = vpow.pop %v5109
        %v5111 = vmul.f32 %v4965, 1.442695
        %v5112 = vpow.pop %v5111
        %v5113 = vmul.f32 %v4966, 1.442695
        %v5114 = vpow.pop %v5113
        %v5115 = vmul.f32 %v4967, 1.442695
        %v5116 = vpow.pop %v5115
        %v5117 = vmul.f32 %v4968, 1.442695
        %v5118 = vpow.pop %v5117
        %v5119 = vmul.f32 %v4969, 1.442695
        %v5120 = vpow.pop %v5119
        %v5121 = vmul.f32 %v4970, 1.442695
        %v5122 = vpow.pop %v5121
        %v5123 = vmul.f32 %v4971, 1.442695
        %v5124 = vpow.pop %v5123
        %v5125 = vmul.f32 %v4972, 1.442695
        %v5126 = vpow.pop %v5125
        %v5127 = vmul.f32 %v4973, 1.442695
        %v5128 = vpow.pop %v5127
        %v5129 = vmul.f32 %v4974, 1.442695
        %v5130 = vpow.pop %v5129
        %v5131 = vmul.f32 %v4975, 1.442695
        %v5132 = vpow.pop %v5131
        %v5133 = vmul.f32 %v4976, 1.442695
        %v5134 = vpow.pop %v5133
        %v5135 = vmul.f32 %v4977, 1.442695
        %v5136 = vpow.pop %v5135
        %v5137 = vmul.f32 %v4978, 1.442695
        %v5138 = vpow.pop %v5137
        %v5139 = vmul.f32 %v4979, 1.442695
        %v5140 = vpow.pop %v5139
        %v5141 = vmul.f32 %v4980, 1.442695
        %v5142 = vpow.pop %v5141
        %v5143 = vmul.f32 %v4981, 1.442695
        %v5144 = vpow.pop %v5143
        %v5145 = vmul.f32 %v4982, 1.442695
        %v5146 = vpow.pop %v5145
        %v5147 = vmul.f32 %v4983, 1.442695
        %v5148 = vpow.pop %v5147
        %v5149 = vmul.f32 %v4984, 1.442695
        %v5150 = vpow.pop %v5149
        %v5151 = vmul.f32 %v4985, 1.442695
        %v5152 = vpow.pop %v5151
        %v5153 = vmul.f32 %v4986, 1.442695
        %v5154 = vpow.pop %v5153
        %v5155 = vmul.f32 %v4987, 1.442695
        %v5156 = vpow.pop %v5155
        %v5157 = vmul.f32 %v4988, 1.442695
        %v5158 = vpow.pop %v5157
        %v5159 = vmul.f32 %v4989, 1.442695
        %v5160 = vpow.pop %v5159
        %v5161 = vmul.f32 %v4990, 1.442695
        %v5162 = vpow.pop %v5161
        %v5163 = vmul.f32 %v4991, 1.442695
        %v5164 = vpow.pop %v5163
        %v5165 = vmul.f32 %v4992, 1.442695
        %v5166 = vpow.pop %v5165
        %v5167 = vmul.f32 %v4993, 1.442695
        %v5168 = vpow.pop %v5167
        %v5169 = vmul.f32 %v4994, 1.442695
        %v5170 = vpow.pop %v5169
        %v5171 = vmul.f32 %v4995, 1.442695
        %v5172 = vpow.pop %v5171
        %v5173 = vmul.f32 %v4996, 1.442695
        %v5174 = vpow.pop %v5173
        %v5175 = vmul.f32 %v4997, 1.442695
        %v5176 = vpow.pop %v5175
        %v5177 = vmul.f32 %v4998, 1.442695
        %v5178 = vpow.pop %v5177
        %v5179 = vmul.f32 %v4999, 1.442695
        %v5180 = vpow.pop %v5179
        %v5181 = vmul.f32 %v5000, 1.442695
        %v5182 = vpow.pop %v5181
        %v5183 = vmul.f32 %v5001, 1.442695
        %v5184 = vpow.pop %v5183
        %v5185 = vmul.f32 %v5002, 1.442695
        %v5186 = vpow.pop %v5185
        %v5187 = vmul.f32 %v5003, 1.442695
        %v5188 = vpow.pop %v5187
        %v5189 = vmul.f32 %v5004, 1.442695
        %v5190 = vpow.pop %v5189
        %v5191 = vmul.f32 %v5005, 1.442695
        %v5192 = vpow.pop %v5191
        %v5193 = vmul.f32 %v5006, 1.442695
        %v5194 = vpow.pop %v5193
        %v5195 = vmul.f32 %v5007, 1.442695
        %v5196 = vpow.pop %v5195
        %v5197 = vmul.f32 %v5008, 1.442695
        %v5198 = vpow.pop %v5197
        %v5199 = vmul.f32 %v5009, 1.442695
        %v5200 = vpow.pop %v5199
        %v5201 = vmul.f32 %v5010, 1.442695
        %v5202 = vpow.pop %v5201
        %v5203 = vmul.f32 %v5011, 1.442695
        %v5204 = vpow.pop %v5203
        %v5205 = vmul.f32 %v5012, 1.442695
        %v5206 = vpow.pop %v5205
        %v5207 = vmul.f32 %v5013, 1.442695
        %v5208 = vpow.pop %v5207
        %v5209 = vmul.f32 %v5014, 1.442695
        %v5210 = vpow.pop %v5209
        %v5211 = vmul.f32 %v5015, 1.442695
        %v5212 = vpow.pop %v5211
        %v5213 = vmul.f32 %v5016, 1.442695
        %v5214 = vpow.pop %v5213
        %v5215 = vmul.f32 %v5017, 1.442695
        %v5216 = vpow.pop %v5215
        %v5217 = vmul.f32 %v5018, 1.442695
        %v5218 = vpow.pop %v5217
        %v5219 = vmul.f32 %v5019, 1.442695
        %v5220 = vpow.pop %v5219
        %v5221 = vmul.f32 %v5020, 1.442695
        %v5222 = vpow.pop %v5221
        %v5223 = vmul.f32 %v5021, 1.442695
        %v5224 = vpow.pop %v5223
        %v5225 = vmul.f32 %v5022, 1.442695
        %v5226 = vpow.pop %v5225
        %v5227 = vmul.f32 %v5023, 1.442695
        %v5228 = vpow.pop %v5227
        %v5229 = vmul.f32 %v5024, 1.442695
        %v5230 = vpow.pop %v5229
        %v5231 = vmul.f32 %v5025, 1.442695
        %v5232 = vpow.pop %v5231
        %v5233 = vmul.f32 %v5026, 1.442695
        %v5234 = vpow.pop %v5233
        %v5235 = vmul.f32 %v5027, 1.442695
        %v5236 = vpow.pop %v5235
        %v5237 = vmul.f32 %v5028, 1.442695
        %v5238 = vpow.pop %v5237
        %v5239 = vmul.f32 %v5029, 1.442695
        %v5240 = vpow.pop %v5239
        %v5241 = vmul.f32 %v5030, 1.442695
        %v5242 = vpow.pop %v5241
        %v5243 = vmul.f32 %v5031, 1.442695
        %v5244 = vpow.pop %v5243
        %v5245 = vmul.f32 %v5032, 1.442695
        %v5246 = vpow.pop %v5245
        %v5247 = vmul.f32 %v5033, 1.442695
        %v5248 = vpow.pop %v5247
        %v5249 = vmul.f32 %v5034, 1.442695
        %v5250 = vpow.pop %v5249
        %v5251 = vmul.f32 %v5035, 1.442695
        %v5252 = vpow.pop %v5251
        %v5253 = vmul.f32 %v5036, 1.442695
        %v5254 = vpow.pop %v5253
        %v5255 = vmul.f32 %v5037, 1.442695
        %v5256 = vpow.pop %v5255
        %v5257 = vmul.f32 %v5038, 1.442695
        %v5258 = vpow.pop %v5257
        %v5259 = vmul.f32 %v5039, 1.442695
        %v5260 = vpow.pop %v5259
        %v5261 = vmul.f32 %v5040, 1.442695
        %v5262 = vpow.pop %v5261
        %v5263 = vmul.f32 %v5041, 1.442695
        %v5264 = vpow.pop %v5263
        %v5265 = vmul.f32 %v5042, 1.442695
        %v5266 = vpow.pop %v5265
        %v5267 = vmul.f32 %v5043, 1.442695
        %v5268 = vpow.pop %v5267
        %v5269 = vmul.f32 %v5044, 1.442695
        %v5270 = vpow.pop %v5269
        %v5271 = vmul.f32 %v5045, 1.442695
        %v5272 = vpow.pop %v5271
        %v5273 = vmul.f32 %v5046, 1.442695
        %v5274 = vpow.pop %v5273
        %v5275 = vmul.f32 %v5047, 1.442695
        %v5276 = vpow.pop %v5275
        %v5277 = vmul.f32 %v5048, 1.442695
        %v5278 = vpow.pop %v5277
        %v5279 = vmul.f32 %v5049, 1.442695
        %v5280 = vpow.pop %v5279
        %v5281 = vmul.f32 %v5050, 1.442695
        %v5282 = vpow.pop %v5281
        %v5283 = vmul.f32 %v5051, 1.442695
        %v5284 = vpow.pop %v5283
        %v5285 = vmul.f32 %v5052, 1.442695
        %v5286 = vpow.pop %v5285
        %v5287 = vmul.f32 %v5053, 1.442695
        %v5288 = vpow.pop %v5287
        %v5289 = vmul.f32 %v5054, 1.442695
        %v5290 = vpow.pop %v5289
        %v5291 = vmul.f32 %v5055, 1.442695
        %v5292 = vpow.pop %v5291
        %v5293 = vmul.f32 %v5056, 1.442695
        %v5294 = vpow.pop %v5293
        %v5295 = vmul.f32 %v5057, 1.442695
        %v5296 = vpow.pop %v5295
        %v5297 = vmul.f32 %v5058, 1.442695
        %v5298 = vpow.pop %v5297
        %v5299 = vmul.f32 %v5059, 1.442695
        %v5300 = vpow.pop %v5299
        %v5301 = vmul.f32 %v5060, 1.442695
        %v5302 = vpow.pop %v5301
        %v5303 = vmul.f32 %v5061, 1.442695
        %v5304 = vpow.pop %v5303
        %v5305 = vmul.f32 %v5062, 1.442695
        %v5306 = vpow.pop %v5305
        %v5307 = vmul.f32 %v5063, 1.442695
        %v5308 = vpow.pop %v5307
        %v5309 = vmul.f32 %v5064, 1.442695
        %v5310 = vpow.pop %v5309
        %v5311 = vmul.f32 %v5065, 1.442695
        %v5312 = vpow.pop %v5311
        %v5313 = vmul.f32 %v5066, 1.442695
        %v5314 = vpow.pop %v5313
        %v5315 = vmul.f32 %v5067, 1.442695
        %v5316 = vpow.pop %v5315
        %v5317 = vmul.f32 %v5068, 1.442695
        %v5318 = vpow.pop %v5317
        %v5319 = vmul.f32 %v5069, 1.442695
        %v5320 = vpow.pop %v5319
        %v5321 = vmul.f32 %v5070, 1.442695
        %v5322 = vpow.pop %v5321
        %v5323 = vmul.f32 %v5071, 1.442695
        %v5324 = vpow.pop %v5323
        %v5325 = vmul.f32 %v5072, 1.442695
        %v5326 = vpow.pop %v5325
        %v5327 = vmul.f32 %v5073, 1.442695
        %v5328 = vpow.pop %v5327
        %v5329 = vmul.f32 %v5074, 1.442695
        %v5330 = vpow.pop %v5329
        %v5331 = vsub.f32 %v5076, 1.0
        %v5332 = vsub.f32 %v5078, 1.0
        %v5333 = vsub.f32 %v5080, 1.0
        %v5334 = vsub.f32 %v5082, 1.0
        %v5335 = vsub.f32 %v5084, 1.0
        %v5336 = vsub.f32 %v5086, 1.0
        %v5337 = vsub.f32 %v5088, 1.0
        %v5338 = vsub.f32 %v5090, 1.0
        %v5339 = vsub.f32 %v5092, 1.0
        %v5340 = vsub.f32 %v5094, 1.0
        %v5341 = vsub.f32 %v5096, 1.0
        %v5342 = vsub.f32 %v5098, 1.0
        %v5343 = vsub.f32 %v5100, 1.0
        %v5344 = vsub.f32 %v5102, 1.0
        %v5345 = vsub.f32 %v5104, 1.0
        %v5346 = vsub.f32 %v5106, 1.0
        %v5347 = vsub.f32 %v5108, 1.0
        %v5348 = vsub.f32 %v5110, 1.0
        %v5349 = vsub.f32 %v5112, 1.0
        %v5350 = vsub.f32 %v5114, 1.0
        %v5351 = vsub.f32 %v5116, 1.0
        %v5352 = vsub.f32 %v5118, 1.0
        %v5353 = vsub.f32 %v5120, 1.0
        %v5354 = vsub.f32 %v5122, 1.0
        %v5355 = vsub.f32 %v5124, 1.0
        %v5356 = vsub.f32 %v5126, 1.0
        %v5357 = vsub.f32 %v5128, 1.0
        %v5358 = vsub.f32 %v5130, 1.0
        %v5359 = vsub.f32 %v5132, 1.0
        %v5360 = vsub.f32 %v5134, 1.0
        %v5361 = vsub.f32 %v5136, 1.0
        %v5362 = vsub.f32 %v5138, 1.0
        %v5363 = vsub.f32 %v5140, 1.0
        %v5364 = vsub.f32 %v5142, 1.0
        %v5365 = vsub.f32 %v5144, 1.0
        %v5366 = vsub.f32 %v5146, 1.0
        %v5367 = vsub.f32 %v5148, 1.0
        %v5368 = vsub.f32 %v5150, 1.0
        %v5369 = vsub.f32 %v5152, 1.0
        %v5370 = vsub.f32 %v5154, 1.0
        %v5371 = vsub.f32 %v5156, 1.0
        %v5372 = vsub.f32 %v5158, 1.0
        %v5373 = vsub.f32 %v5160, 1.0
        %v5374 = vsub.f32 %v5162, 1.0
        %v5375 = vsub.f32 %v5164, 1.0
        %v5376 = vsub.f32 %v5166, 1.0
        %v5377 = vsub.f32 %v5168, 1.0
        %v5378 = vsub.f32 %v5170, 1.0
        %v5379 = vsub.f32 %v5172, 1.0
        %v5380 = vsub.f32 %v5174, 1.0
        %v5381 = vsub.f32 %v5176, 1.0
        %v5382 = vsub.f32 %v5178, 1.0
        %v5383 = vsub.f32 %v5180, 1.0
        %v5384 = vsub.f32 %v5182, 1.0
        %v5385 = vsub.f32 %v5184, 1.0
        %v5386 = vsub.f32 %v5186, 1.0
        %v5387 = vsub.f32 %v5188, 1.0
        %v5388 = vsub.f32 %v5190, 1.0
        %v5389 = vsub.f32 %v5192, 1.0
        %v5390 = vsub.f32 %v5194, 1.0
        %v5391 = vsub.f32 %v5196, 1.0
        %v5392 = vsub.f32 %v5198, 1.0
        %v5393 = vsub.f32 %v5200, 1.0
        %v5394 = vsub.f32 %v5202, 1.0
        %v5395 = vsub.f32 %v5204, 1.0
        %v5396 = vsub.f32 %v5206, 1.0
        %v5397 = vsub.f32 %v5208, 1.0
        %v5398 = vsub.f32 %v5210, 1.0
        %v5399 = vsub.f32 %v5212, 1.0
        %v5400 = vsub.f32 %v5214, 1.0
        %v5401 = vsub.f32 %v5216, 1.0
        %v5402 = vsub.f32 %v5218, 1.0
        %v5403 = vsub.f32 %v5220, 1.0
        %v5404 = vsub.f32 %v5222, 1.0
        %v5405 = vsub.f32 %v5224, 1.0
        %v5406 = vsub.f32 %v5226, 1.0
        %v5407 = vsub.f32 %v5228, 1.0
        %v5408 = vsub.f32 %v5230, 1.0
        %v5409 = vsub.f32 %v5232, 1.0
        %v5410 = vsub.f32 %v5234, 1.0
        %v5411 = vsub.f32 %v5236, 1.0
        %v5412 = vsub.f32 %v5238, 1.0
        %v5413 = vsub.f32 %v5240, 1.0
        %v5414 = vsub.f32 %v5242, 1.0
        %v5415 = vsub.f32 %v5244, 1.0
        %v5416 = vsub.f32 %v5246, 1.0
        %v5417 = vsub.f32 %v5248, 1.0
        %v5418 = vsub.f32 %v5250, 1.0
        %v5419 = vsub.f32 %v5252, 1.0
        %v5420 = vsub.f32 %v5254, 1.0
        %v5421 = vsub.f32 %v5256, 1.0
        %v5422 = vsub.f32 %v5258, 1.0
        %v5423 = vsub.f32 %v5260, 1.0
        %v5424 = vsub.f32 %v5262, 1.0
        %v5425 = vsub.f32 %v5264, 1.0
        %v5426 = vsub.f32 %v5266, 1.0
        %v5427 = vsub.f32 %v5268, 1.0
        %v5428 = vsub.f32 %v5270, 1.0
        %v5429 = vsub.f32 %v5272, 1.0
        %v5430 = vsub.f32 %v5274, 1.0
        %v5431 = vsub.f32 %v5276, 1.0
        %v5432 = vsub.f32 %v5278, 1.0
        %v5433 = vsub.f32 %v5280, 1.0
        %v5434 = vsub.f32 %v5282, 1.0
        %v5435 = vsub.f32 %v5284, 1.0
        %v5436 = vsub.f32 %v5286, 1.0
        %v5437 = vsub.f32 %v5288, 1.0
        %v5438 = vsub.f32 %v5290, 1.0
        %v5439 = vsub.f32 %v5292, 1.0
        %v5440 = vsub.f32 %v5294, 1.0
        %v5441 = vsub.f32 %v5296, 1.0
        %v5442 = vsub.f32 %v5298, 1.0
        %v5443 = vsub.f32 %v5300, 1.0
        %v5444 = vsub.f32 %v5302, 1.0
        %v5445 = vsub.f32 %v5304, 1.0
        %v5446 = vsub.f32 %v5306, 1.0
        %v5447 = vsub.f32 %v5308, 1.0
        %v5448 = vsub.f32 %v5310, 1.0
        %v5449 = vsub.f32 %v5312, 1.0
        %v5450 = vsub.f32 %v5314, 1.0
        %v5451 = vsub.f32 %v5316, 1.0
        %v5452 = vsub.f32 %v5318, 1.0
        %v5453 = vsub.f32 %v5320, 1.0
        %v5454 = vsub.f32 %v5322, 1.0
        %v5455 = vsub.f32 %v5324, 1.0
        %v5456 = vsub.f32 %v5326, 1.0
        %v5457 = vsub.f32 %v5328, 1.0
        %v5458 = vsub.f32 %v5330, 1.0
        %vm5459 = vcmp.gt.f32.partialorder %v4437, 0.0
        %vm5460 = vcmp.gt.f32.partialorder %v4440, 0.0
        %vm5461 = vcmp.gt.f32.partialorder %v4445, 0.0
        %vm5462 = vcmp.gt.f32.partialorder %v4448, 0.0
        %vm5463 = vcmp.gt.f32.partialorder %v4453, 0.0
        %vm5464 = vcmp.gt.f32.partialorder %v4456, 0.0
        %vm5465 = vcmp.gt.f32.partialorder %v4461, 0.0
        %vm5466 = vcmp.gt.f32.partialorder %v4464, 0.0
        %vm5467 = vcmp.gt.f32.partialorder %v4469, 0.0
        %vm5468 = vcmp.gt.f32.partialorder %v4472, 0.0
        %vm5469 = vcmp.gt.f32.partialorder %v4477, 0.0
        %vm5470 = vcmp.gt.f32.partialorder %v4480, 0.0
        %vm5471 = vcmp.gt.f32.partialorder %v4485, 0.0
        %vm5472 = vcmp.gt.f32.partialorder %v4488, 0.0
        %vm5473 = vcmp.gt.f32.partialorder %v4493, 0.0
        %vm5474 = vcmp.gt.f32.partialorder %v4496, 0.0
        %vm5475 = vcmp.gt.f32.partialorder %v4501, 0.0
        %vm5476 = vcmp.gt.f32.partialorder %v4504, 0.0
        %vm5477 = vcmp.gt.f32.partialorder %v4509, 0.0
        %vm5478 = vcmp.gt.f32.partialorder %v4512, 0.0
        %vm5479 = vcmp.gt.f32.partialorder %v4517, 0.0
        %vm5480 = vcmp.gt.f32.partialorder %v4520, 0.0
        %vm5481 = vcmp.gt.f32.partialorder %v4525, 0.0
        %vm5482 = vcmp.gt.f32.partialorder %v4528, 0.0
        %vm5483 = vcmp.gt.f32.partialorder %v4533, 0.0
        %vm5484 = vcmp.gt.f32.partialorder %v4536, 0.0
        %vm5485 = vcmp.gt.f32.partialorder %v4541, 0.0
        %vm5486 = vcmp.gt.f32.partialorder %v4544, 0.0
        %vm5487 = vcmp.gt.f32.partialorder %v4549, 0.0
        %vm5488 = vcmp.gt.f32.partialorder %v4552, 0.0
        %vm5489 = vcmp.gt.f32.partialorder %v4557, 0.0
        %vm5490 = vcmp.gt.f32.partialorder %v4560, 0.0
        %vm5491 = vcmp.gt.f32.partialorder %v4565, 0.0
        %vm5492 = vcmp.gt.f32.partialorder %v4568, 0.0
        %vm5493 = vcmp.gt.f32.partialorder %v4573, 0.0
        %vm5494 = vcmp.gt.f32.partialorder %v4576, 0.0
        %vm5495 = vcmp.gt.f32.partialorder %v4581, 0.0
        %vm5496 = vcmp.gt.f32.partialorder %v4584, 0.0
        %vm5497 = vcmp.gt.f32.partialorder %v4589, 0.0
        %vm5498 = vcmp.gt.f32.partialorder %v4592, 0.0
        %vm5499 = vcmp.gt.f32.partialorder %v4597, 0.0
        %vm5500 = vcmp.gt.f32.partialorder %v4600, 0.0
        %vm5501 = vcmp.gt.f32.partialorder %v4605, 0.0
        %vm5502 = vcmp.gt.f32.partialorder %v4608, 0.0
        %vm5503 = vcmp.gt.f32.partialorder %v4613, 0.0
        %vm5504 = vcmp.gt.f32.partialorder %v4616, 0.0
        %vm5505 = vcmp.gt.f32.partialorder %v4621, 0.0
        %vm5506 = vcmp.gt.f32.partialorder %v4624, 0.0
        %vm5507 = vcmp.gt.f32.partialorder %v4629, 0.0
        %vm5508 = vcmp.gt.f32.partialorder %v4632, 0.0
        %vm5509 = vcmp.gt.f32.partialorder %v4637, 0.0
        %vm5510 = vcmp.gt.f32.partialorder %v4640, 0.0
        %vm5511 = vcmp.gt.f32.partialorder %v4645, 0.0
        %vm5512 = vcmp.gt.f32.partialorder %v4648, 0.0
        %vm5513 = vcmp.gt.f32.partialorder %v4653, 0.0
        %vm5514 = vcmp.gt.f32.partialorder %v4656, 0.0
        %vm5515 = vcmp.gt.f32.partialorder %v4661, 0.0
        %vm5516 = vcmp.gt.f32.partialorder %v4664, 0.0
        %vm5517 = vcmp.gt.f32.partialorder %v4669, 0.0
        %vm5518 = vcmp.gt.f32.partialorder %v4672, 0.0
        %vm5519 = vcmp.gt.f32.partialorder %v4677, 0.0
        %vm5520 = vcmp.gt.f32.partialorder %v4680, 0.0
        %vm5521 = vcmp.gt.f32.partialorder %v4685, 0.0
        %vm5522 = vcmp.gt.f32.partialorder %v4688, 0.0
        %vm5523 = vcmp.gt.f32.partialorder %v4693, 0.0
        %vm5524 = vcmp.gt.f32.partialorder %v4696, 0.0
        %vm5525 = vcmp.gt.f32.partialorder %v4701, 0.0
        %vm5526 = vcmp.gt.f32.partialorder %v4704, 0.0
        %vm5527 = vcmp.gt.f32.partialorder %v4709, 0.0
        %vm5528 = vcmp.gt.f32.partialorder %v4712, 0.0
        %vm5529 = vcmp.gt.f32.partialorder %v4717, 0.0
        %vm5530 = vcmp.gt.f32.partialorder %v4720, 0.0
        %vm5531 = vcmp.gt.f32.partialorder %v4725, 0.0
        %vm5532 = vcmp.gt.f32.partialorder %v4728, 0.0
        %vm5533 = vcmp.gt.f32.partialorder %v4733, 0.0
        %vm5534 = vcmp.gt.f32.partialorder %v4736, 0.0
        %vm5535 = vcmp.gt.f32.partialorder %v4741, 0.0
        %vm5536 = vcmp.gt.f32.partialorder %v4744, 0.0
        %vm5537 = vcmp.gt.f32.partialorder %v4749, 0.0
        %vm5538 = vcmp.gt.f32.partialorder %v4752, 0.0
        %vm5539 = vcmp.gt.f32.partialorder %v4757, 0.0
        %vm5540 = vcmp.gt.f32.partialorder %v4760, 0.0
        %vm5541 = vcmp.gt.f32.partialorder %v4765, 0.0
        %vm5542 = vcmp.gt.f32.partialorder %v4768, 0.0
        %vm5543 = vcmp.gt.f32.partialorder %v4773, 0.0
        %vm5544 = vcmp.gt.f32.partialorder %v4776, 0.0
        %vm5545 = vcmp.gt.f32.partialorder %v4781, 0.0
        %vm5546 = vcmp.gt.f32.partialorder %v4784, 0.0
        %vm5547 = vcmp.gt.f32.partialorder %v4789, 0.0
        %vm5548 = vcmp.gt.f32.partialorder %v4792, 0.0
        %vm5549 = vcmp.gt.f32.partialorder %v4797, 0.0
        %vm5550 = vcmp.gt.f32.partialorder %v4800, 0.0
        %vm5551 = vcmp.gt.f32.partialorder %v4805, 0.0
        %vm5552 = vcmp.gt.f32.partialorder %v4808, 0.0
        %vm5553 = vcmp.gt.f32.partialorder %v4813, 0.0
        %vm5554 = vcmp.gt.f32.partialorder %v4816, 0.0
        %vm5555 = vcmp.gt.f32.partialorder %v4821, 0.0
        %vm5556 = vcmp.gt.f32.partialorder %v4824, 0.0
        %vm5557 = vcmp.gt.f32.partialorder %v4829, 0.0
        %vm5558 = vcmp.gt.f32.partialorder %v4832, 0.0
        %vm5559 = vcmp.gt.f32.partialorder %v4837, 0.0
        %vm5560 = vcmp.gt.f32.partialorder %v4840, 0.0
        %vm5561 = vcmp.gt.f32.partialorder %v4845, 0.0
        %vm5562 = vcmp.gt.f32.partialorder %v4848, 0.0
        %vm5563 = vcmp.gt.f32.partialorder %v4853, 0.0
        %vm5564 = vcmp.gt.f32.partialorder %v4856, 0.0
        %vm5565 = vcmp.gt.f32.partialorder %v4861, 0.0
        %vm5566 = vcmp.gt.f32.partialorder %v4864, 0.0
        %vm5567 = vcmp.gt.f32.partialorder %v4869, 0.0
        %vm5568 = vcmp.gt.f32.partialorder %v4872, 0.0
        %vm5569 = vcmp.gt.f32.partialorder %v4877, 0.0
        %vm5570 = vcmp.gt.f32.partialorder %v4880, 0.0
        %vm5571 = vcmp.gt.f32.partialorder %v4885, 0.0
        %vm5572 = vcmp.gt.f32.partialorder %v4888, 0.0
        %vm5573 = vcmp.gt.f32.partialorder %v4893, 0.0
        %vm5574 = vcmp.gt.f32.partialorder %v4896, 0.0
        %vm5575 = vcmp.gt.f32.partialorder %v4901, 0.0
        %vm5576 = vcmp.gt.f32.partialorder %v4904, 0.0
        %vm5577 = vcmp.gt.f32.partialorder %v4909, 0.0
        %vm5578 = vcmp.gt.f32.partialorder %v4912, 0.0
        %vm5579 = vcmp.gt.f32.partialorder %v4917, 0.0
        %vm5580 = vcmp.gt.f32.partialorder %v4920, 0.0
        %vm5581 = vcmp.gt.f32.partialorder %v4925, 0.0
        %vm5582 = vcmp.gt.f32.partialorder %v4928, 0.0
        %vm5583 = vcmp.gt.f32.partialorder %v4933, 0.0
        %vm5584 = vcmp.gt.f32.partialorder %v4936, 0.0
        %vm5585 = vcmp.gt.f32.partialorder %v4941, 0.0
        %vm5586 = vcmp.gt.f32.partialorder %v4944, 0.0
        %v5587 = vsel %vm5459, %v4437, %v5331
        %v5588 = vsel %vm5460, %v4440, %v5332
        %v5589 = vsel %vm5461, %v4445, %v5333
        %v5590 = vsel %vm5462, %v4448, %v5334
        %v5591 = vsel %vm5463, %v4453, %v5335
        %v5592 = vsel %vm5464, %v4456, %v5336
        %v5593 = vsel %vm5465, %v4461, %v5337
        %v5594 = vsel %vm5466, %v4464, %v5338
        %v5595 = vsel %vm5467, %v4469, %v5339
        %v5596 = vsel %vm5468, %v4472, %v5340
        %v5597 = vsel %vm5469, %v4477, %v5341
        %v5598 = vsel %vm5470, %v4480, %v5342
        %v5599 = vsel %vm5471, %v4485, %v5343
        %v5600 = vsel %vm5472, %v4488, %v5344
        %v5601 = vsel %vm5473, %v4493, %v5345
        %v5602 = vsel %vm5474, %v4496, %v5346
        %v5603 = vsel %vm5475, %v4501, %v5347
        %v5604 = vsel %vm5476, %v4504, %v5348
        %v5605 = vsel %vm5477, %v4509, %v5349
        %v5606 = vsel %vm5478, %v4512, %v5350
        %v5607 = vsel %vm5479, %v4517, %v5351
        %v5608 = vsel %vm5480, %v4520, %v5352
        %v5609 = vsel %vm5481, %v4525, %v5353
        %v5610 = vsel %vm5482, %v4528, %v5354
        %v5611 = vsel %vm5483, %v4533, %v5355
        %v5612 = vsel %vm5484, %v4536, %v5356
        %v5613 = vsel %vm5485, %v4541, %v5357
        %v5614 = vsel %vm5486, %v4544, %v5358
        %v5615 = vsel %vm5487, %v4549, %v5359
        %v5616 = vsel %vm5488, %v4552, %v5360
        %v5617 = vsel %vm5489, %v4557, %v5361
        %v5618 = vsel %vm5490, %v4560, %v5362
        %v5619 = vsel %vm5491, %v4565, %v5363
        %v5620 = vsel %vm5492, %v4568, %v5364
        %v5621 = vsel %vm5493, %v4573, %v5365
        %v5622 = vsel %vm5494, %v4576, %v5366
        %v5623 = vsel %vm5495, %v4581, %v5367
        %v5624 = vsel %vm5496, %v4584, %v5368
        %v5625 = vsel %vm5497, %v4589, %v5369
        %v5626 = vsel %vm5498, %v4592, %v5370
        %v5627 = vsel %vm5499, %v4597, %v5371
        %v5628 = vsel %vm5500, %v4600, %v5372
        %v5629 = vsel %vm5501, %v4605, %v5373
        %v5630 = vsel %vm5502, %v4608, %v5374
        %v5631 = vsel %vm5503, %v4613, %v5375
        %v5632 = vsel %vm5504, %v4616, %v5376
        %v5633 = vsel %vm5505, %v4621, %v5377
        %v5634 = vsel %vm5506, %v4624, %v5378
        %v5635 = vsel %vm5507, %v4629, %v5379
        %v5636 = vsel %vm5508, %v4632, %v5380
        %v5637 = vsel %vm5509, %v4637, %v5381
        %v5638 = vsel %vm5510, %v4640, %v5382
        %v5639 = vsel %vm5511, %v4645, %v5383
        %v5640 = vsel %vm5512, %v4648, %v5384
        %v5641 = vsel %vm5513, %v4653, %v5385
        %v5642 = vsel %vm5514, %v4656, %v5386
        %v5643 = vsel %vm5515, %v4661, %v5387
        %v5644 = vsel %vm5516, %v4664, %v5388
        %v5645 = vsel %vm5517, %v4669, %v5389
        %v5646 = vsel %vm5518, %v4672, %v5390
        %v5647 = vsel %vm5519, %v4677, %v5391
        %v5648 = vsel %vm5520, %v4680, %v5392
        %v5649 = vsel %vm5521, %v4685, %v5393
        %v5650 = vsel %vm5522, %v4688, %v5394
        %v5651 = vsel %vm5523, %v4693, %v5395
        %v5652 = vsel %vm5524, %v4696, %v5396
        %v5653 = vsel %vm5525, %v4701, %v5397
        %v5654 = vsel %vm5526, %v4704, %v5398
        %v5655 = vsel %vm5527, %v4709, %v5399
        %v5656 = vsel %vm5528, %v4712, %v5400
        %v5657 = vsel %vm5529, %v4717, %v5401
        %v5658 = vsel %vm5530, %v4720, %v5402
        %v5659 = vsel %vm5531, %v4725, %v5403
        %v5660 = vsel %vm5532, %v4728, %v5404
        %v5661 = vsel %vm5533, %v4733, %v5405
        %v5662 = vsel %vm5534, %v4736, %v5406
        %v5663 = vsel %vm5535, %v4741, %v5407
        %v5664 = vsel %vm5536, %v4744, %v5408
        %v5665 = vsel %vm5537, %v4749, %v5409
        %v5666 = vsel %vm5538, %v4752, %v5410
        %v5667 = vsel %vm5539, %v4757, %v5411
        %v5668 = vsel %vm5540, %v4760, %v5412
        %v5669 = vsel %vm5541, %v4765, %v5413
        %v5670 = vsel %vm5542, %v4768, %v5414
        %v5671 = vsel %vm5543, %v4773, %v5415
        %v5672 = vsel %vm5544, %v4776, %v5416
        %v5673 = vsel %vm5545, %v4781, %v5417
        %v5674 = vsel %vm5546, %v4784, %v5418
        %v5675 = vsel %vm5547, %v4789, %v5419
        %v5676 = vsel %vm5548, %v4792, %v5420
        %v5677 = vsel %vm5549, %v4797, %v5421
        %v5678 = vsel %vm5550, %v4800, %v5422
        %v5679 = vsel %vm5551, %v4805, %v5423
        %v5680 = vsel %vm5552, %v4808, %v5424
        %v5681 = vsel %vm5553, %v4813, %v5425
        %v5682 = vsel %vm5554, %v4816, %v5426
        %v5683 = vsel %vm5555, %v4821, %v5427
        %v5684 = vsel %vm5556, %v4824, %v5428
        %v5685 = vsel %vm5557, %v4829, %v5429
        %v5686 = vsel %vm5558, %v4832, %v5430
        %v5687 = vsel %vm5559, %v4837, %v5431
        %v5688 = vsel %vm5560, %v4840, %v5432
        %v5689 = vsel %vm5561, %v4845, %v5433
        %v5690 = vsel %vm5562, %v4848, %v5434
        %v5691 = vsel %vm5563, %v4853, %v5435
        %v5692 = vsel %vm5564, %v4856, %v5436
        %v5693 = vsel %vm5565, %v4861, %v5437
        %v5694 = vsel %vm5566, %v4864, %v5438
        %v5695 = vsel %vm5567, %v4869, %v5439
        %v5696 = vsel %vm5568, %v4872, %v5440
        %v5697 = vsel %vm5569, %v4877, %v5441
        %v5698 = vsel %vm5570, %v4880, %v5442
        %v5699 = vsel %vm5571, %v4885, %v5443
        %v5700 = vsel %vm5572, %v4888, %v5444
        %v5701 = vsel %vm5573, %v4893, %v5445
        %v5702 = vsel %vm5574, %v4896, %v5446
        %v5703 = vsel %vm5575, %v4901, %v5447
        %v5704 = vsel %vm5576, %v4904, %v5448
        %v5705 = vsel %vm5577, %v4909, %v5449
        %v5706 = vsel %vm5578, %v4912, %v5450
        %v5707 = vsel %vm5579, %v4917, %v5451
        %v5708 = vsel %vm5580, %v4920, %v5452
        %v5709 = vsel %vm5581, %v4925, %v5453
        %v5710 = vsel %vm5582, %v4928, %v5454
        %v5711 = vsel %vm5583, %v4933, %v5455
        %v5712 = vsel %vm5584, %v4936, %v5456
        %v5713 = vsel %vm5585, %v4941, %v5457
        %v5714 = vsel %vm5586, %v4944, %v5458
        %v5715 = vadd.f32 %v5587, %v5588
        %v5716 = vadd.f32 %v5715, %v5589
        %v5717 = vadd.f32 %v5716, %v5590
        %v5718 = vadd.f32 %v5717, %v5591
        %v5719 = vadd.f32 %v5718, %v5592
        %v5720 = vadd.f32 %v5719, %v5593
        %v5721 = vadd.f32 %v5720, %v5594
        %v5722 = vadd.f32 %v5721, %v5595
        %v5723 = vadd.f32 %v5722, %v5596
        %v5724 = vadd.f32 %v5723, %v5597
        %v5725 = vadd.f32 %v5724, %v5598
        %v5726 = vadd.f32 %v5725, %v5599
        %v5727 = vadd.f32 %v5726, %v5600
        %v5728 = vadd.f32 %v5727, %v5601
        %v5729 = vadd.f32 %v5728, %v5602
        %v5730 = vrot.slane %v5729, 4
        %v5731 = vadd.f32 %v5729, %v5730
        %v5732 = vrot.slane %v5731, 2
        %v5733 = vadd.f32 %v5731, %v5732
        %v5734 = vrot.slane %v5733, 1
        %v5735 = vadd.f32 %v5733, %v5734
        %v5736 = vadd.f32 %v5603, %v5604
        %v5737 = vadd.f32 %v5736, %v5605
        %v5738 = vadd.f32 %v5737, %v5606
        %v5739 = vadd.f32 %v5738, %v5607
        %v5740 = vadd.f32 %v5739, %v5608
        %v5741 = vadd.f32 %v5740, %v5609
        %v5742 = vadd.f32 %v5741, %v5610
        %v5743 = vadd.f32 %v5742, %v5611
        %v5744 = vadd.f32 %v5743, %v5612
        %v5745 = vadd.f32 %v5744, %v5613
        %v5746 = vadd.f32 %v5745, %v5614
        %v5747 = vadd.f32 %v5746, %v5615
        %v5748 = vadd.f32 %v5747, %v5616
        %v5749 = vadd.f32 %v5748, %v5617
        %v5750 = vadd.f32 %v5749, %v5618
        %v5751 = vrot.slane %v5750, 4
        %v5752 = vadd.f32 %v5750, %v5751
        %v5753 = vrot.slane %v5752, 2
        %v5754 = vadd.f32 %v5752, %v5753
        %v5755 = vrot.slane %v5754, 1
        %v5756 = vadd.f32 %v5754, %v5755
        %v5757 = vadd.f32 %v5619, %v5620
        %v5758 = vadd.f32 %v5757, %v5621
        %v5759 = vadd.f32 %v5758, %v5622
        %v5760 = vadd.f32 %v5759, %v5623
        %v5761 = vadd.f32 %v5760, %v5624
        %v5762 = vadd.f32 %v5761, %v5625
        %v5763 = vadd.f32 %v5762, %v5626
        %v5764 = vadd.f32 %v5763, %v5627
        %v5765 = vadd.f32 %v5764, %v5628
        %v5766 = vadd.f32 %v5765, %v5629
        %v5767 = vadd.f32 %v5766, %v5630
        %v5768 = vadd.f32 %v5767, %v5631
        %v5769 = vadd.f32 %v5768, %v5632
        %v5770 = vadd.f32 %v5769, %v5633
        %v5771 = vadd.f32 %v5770, %v5634
        %v5772 = vrot.slane %v5771, 4
        %v5773 = vadd.f32 %v5771, %v5772
        %v5774 = vrot.slane %v5773, 2
        %v5775 = vadd.f32 %v5773, %v5774
        %v5776 = vrot.slane %v5775, 1
        %v5777 = vadd.f32 %v5775, %v5776
        %v5778 = vadd.f32 %v5635, %v5636
        %v5779 = vadd.f32 %v5778, %v5637
        %v5780 = vadd.f32 %v5779, %v5638
        %v5781 = vadd.f32 %v5780, %v5639
        %v5782 = vadd.f32 %v5781, %v5640
        %v5783 = vadd.f32 %v5782, %v5641
        %v5784 = vadd.f32 %v5783, %v5642
        %v5785 = vadd.f32 %v5784, %v5643
        %v5786 = vadd.f32 %v5785, %v5644
        %v5787 = vadd.f32 %v5786, %v5645
        %v5788 = vadd.f32 %v5787, %v5646
        %v5789 = vadd.f32 %v5788, %v5647
        %v5790 = vadd.f32 %v5789, %v5648
        %v5791 = vadd.f32 %v5790, %v5649
        %v5792 = vadd.f32 %v5791, %v5650
        %v5793 = vrot.slane %v5792, 4
        %v5794 = vadd.f32 %v5792, %v5793
        %v5795 = vrot.slane %v5794, 2
        %v5796 = vadd.f32 %v5794, %v5795
        %v5797 = vrot.slane %v5796, 1
        %v5798 = vadd.f32 %v5796, %v5797
        %v5799 = vadd.f32 %v5651, %v5652
        %v5800 = vadd.f32 %v5799, %v5653
        %v5801 = vadd.f32 %v5800, %v5654
        %v5802 = vadd.f32 %v5801, %v5655
        %v5803 = vadd.f32 %v5802, %v5656
        %v5804 = vadd.f32 %v5803, %v5657
        %v5805 = vadd.f32 %v5804, %v5658
        %v5806 = vadd.f32 %v5805, %v5659
        %v5807 = vadd.f32 %v5806, %v5660
        %v5808 = vadd.f32 %v5807, %v5661
        %v5809 = vadd.f32 %v5808, %v5662
        %v5810 = vadd.f32 %v5809, %v5663
        %v5811 = vadd.f32 %v5810, %v5664
        %v5812 = vadd.f32 %v5811, %v5665
        %v5813 = vadd.f32 %v5812, %v5666
        %v5814 = vrot.slane %v5813, 4
        %v5815 = vadd.f32 %v5813, %v5814
        %v5816 = vrot.slane %v5815, 2
        %v5817 = vadd.f32 %v5815, %v5816
        %v5818 = vrot.slane %v5817, 1
        %v5819 = vadd.f32 %v5817, %v5818
        %v5820 = vadd.f32 %v5667, %v5668
        %v5821 = vadd.f32 %v5820, %v5669
        %v5822 = vadd.f32 %v5821, %v5670
        %v5823 = vadd.f32 %v5822, %v5671
        %v5824 = vadd.f32 %v5823, %v5672
        %v5825 = vadd.f32 %v5824, %v5673
        %v5826 = vadd.f32 %v5825, %v5674
        %v5827 = vadd.f32 %v5826, %v5675
        %v5828 = vadd.f32 %v5827, %v5676
        %v5829 = vadd.f32 %v5828, %v5677
        %v5830 = vadd.f32 %v5829, %v5678
        %v5831 = vadd.f32 %v5830, %v5679
        %v5832 = vadd.f32 %v5831, %v5680
        %v5833 = vadd.f32 %v5832, %v5681
        %v5834 = vadd.f32 %v5833, %v5682
        %v5835 = vrot.slane %v5834, 4
        %v5836 = vadd.f32 %v5834, %v5835
        %v5837 = vrot.slane %v5836, 2
        %v5838 = vadd.f32 %v5836, %v5837
        %v5839 = vrot.slane %v5838, 1
        %v5840 = vadd.f32 %v5838, %v5839
        %v5841 = vadd.f32 %v5683, %v5684
        %v5842 = vadd.f32 %v5841, %v5685
        %v5843 = vadd.f32 %v5842, %v5686
        %v5844 = vadd.f32 %v5843, %v5687
        %v5845 = vadd.f32 %v5844, %v5688
        %v5846 = vadd.f32 %v5845, %v5689
        %v5847 = vadd.f32 %v5846, %v5690
        %v5848 = vadd.f32 %v5847, %v5691
        %v5849 = vadd.f32 %v5848, %v5692
        %v5850 = vadd.f32 %v5849, %v5693
        %v5851 = vadd.f32 %v5850, %v5694
        %v5852 = vadd.f32 %v5851, %v5695
        %v5853 = vadd.f32 %v5852, %v5696
        %v5854 = vadd.f32 %v5853, %v5697
        %v5855 = vadd.f32 %v5854, %v5698
        %v5856 = vrot.slane %v5855, 4
        %v5857 = vadd.f32 %v5855, %v5856
        %v5858 = vrot.slane %v5857, 2
        %v5859 = vadd.f32 %v5857, %v5858
        %v5860 = vrot.slane %v5859, 1
        %v5861 = vadd.f32 %v5859, %v5860
        %v5862 = vadd.f32 %v5699, %v5700
        %v5863 = vadd.f32 %v5862, %v5701
        %v5864 = vadd.f32 %v5863, %v5702
        %v5865 = vadd.f32 %v5864, %v5703
        %v5866 = vadd.f32 %v5865, %v5704
        %v5867 = vadd.f32 %v5866, %v5705
        %v5868 = vadd.f32 %v5867, %v5706
        %v5869 = vadd.f32 %v5868, %v5707
        %v5870 = vadd.f32 %v5869, %v5708
        %v5871 = vadd.f32 %v5870, %v5709
        %v5872 = vadd.f32 %v5871, %v5710
        %v5873 = vadd.f32 %v5872, %v5711
        %v5874 = vadd.f32 %v5873, %v5712
        %v5875 = vadd.f32 %v5874, %v5713
        %v5876 = vadd.f32 %v5875, %v5714
        %v5877 = vrot.slane %v5876, 4
        %v5878 = vadd.f32 %v5876, %v5877
        %v5879 = vrot.slane %v5878, 2
        %v5880 = vadd.f32 %v5878, %v5879
        %v5881 = vrot.slane %v5880, 1
        %v5882 = vadd.f32 %v5880, %v5881
        %v5883 = vmul.f32 %v5735, 0.0078125
        %v5884 = vmul.f32 %v5756, 0.0078125
        %v5885 = vmul.f32 %v5777, 0.0078125
        %v5886 = vmul.f32 %v5798, 0.0078125
        %v5887 = vmul.f32 %v5819, 0.0078125
        %v5888 = vmul.f32 %v5840, 0.0078125
        %v5889 = vmul.f32 %v5861, 0.0078125
        %v5890 = vmul.f32 %v5882, 0.0078125
        %v5891 = vpack.c.bf16 %v5883, %v5883
        %v5892 = vpack.c.bf16 %v5884, %v5884
        %v5893 = vpack.c.bf16 %v5885, %v5885
        %v5894 = vpack.c.bf16 %v5886, %v5886
        %v5895 = vpack.c.bf16 %v5887, %v5887
        %v5896 = vpack.c.bf16 %v5888, %v5888
        %v5897 = vpack.c.bf16 %v5889, %v5889
        %v5898 = vpack.c.bf16 %v5890, %v5890
        %v5899 = vld [vmem:[#allocation11] sm:$0xf]
        %v5900 = vld [vmem:[#allocation11 + $0x4] sm:$0xf]
        %v5901 = vld [vmem:[#allocation11 + $0x8] sm:$0xf]
        %v5902 = vld [vmem:[#allocation11 + $0xc] sm:$0xf]
        %v5903 = vld [vmem:[#allocation11 + $0x10] sm:$0xf]
        %v5904 = vld [vmem:[#allocation11 + $0x14] sm:$0xf]
        %v5905 = vld [vmem:[#allocation11 + $0x18] sm:$0xf]
        %v5906 = vld [vmem:[#allocation11 + $0x1c] sm:$0xf]
        %v5907 = vld [vmem:[#allocation11 + $0x20] sm:$0xf]
        %v5908 = vld [vmem:[#allocation11 + $0x24] sm:$0xf]
        %v5909 = vld [vmem:[#allocation11 + $0x28] sm:$0xf]
        %v5910 = vld [vmem:[#allocation11 + $0x2c] sm:$0xf]
        %v5911 = vld [vmem:[#allocation11 + $0x30] sm:$0xf]
        %v5912 = vld [vmem:[#allocation11 + $0x34] sm:$0xf]
        %v5913 = vld [vmem:[#allocation11 + $0x38] sm:$0xf]
        %v5914 = vld [vmem:[#allocation11 + $0x3c] sm:$0xf]
        %v5915 = vld [vmem:[#allocation13] sm:$0x1]
        %v5917 = vlaneseq
        %v5918 = vshrl.u32 %v5917, 7
        %v5919 = vsub.s32 0, %v5918
        %v5920 = vrot.slane %v5915, %v5919
        %v5930 = vunpack.c.l.b16 %v5891
        %v5931 = vunpack.c.l.b16 %v5892
        %v5932 = vunpack.c.l.b16 %v5893
        %v5933 = vunpack.c.l.b16 %v5894
        %v5934 = vunpack.c.l.b16 %v5895
        %v5935 = vunpack.c.l.b16 %v5896
        %v5936 = vunpack.c.l.b16 %v5897
        %v5937 = vunpack.c.l.b16 %v5898
        %vm5938 = vcmask 1041409
        %v5939 = vsel %vm5938, %v5931, %v5930
        %vm5940 = vcmask 1042434
        %v5941 = vsel %vm5940, %v5932, %v5939
        %vm5942 = vcmask 1043459
        %v5943 = vsel %vm5942, %v5933, %v5941
        %vm5944 = vcmask 1044484
        %v5945 = vsel %vm5944, %v5934, %v5943
        %vm5946 = vcmask 1045509
        %v5947 = vsel %vm5946, %v5935, %v5945
        %vm5948 = vcmask 1046534
        %v5949 = vsel %vm5948, %v5936, %v5947
        %vm5950 = vcmask 1047559
        %v5951 = vsel %vm5950, %v5937, %v5949
        %v5952 = vpack.c.b16 %v5951, %v5951
        %v5970 = vunpack.c.l.b16 %v5899
        %v5971 = vunpack.c.l.b16 %v5900
        %v5972 = vunpack.c.l.b16 %v5901
        %v5973 = vunpack.c.l.b16 %v5902
        %v5974 = vunpack.c.l.b16 %v5903
        %v5975 = vunpack.c.l.b16 %v5904
        %v5976 = vunpack.c.l.b16 %v5905
        %v5977 = vunpack.c.l.b16 %v5906
        %v5978 = vunpack.c.l.b16 %v5907
        %v5979 = vunpack.c.l.b16 %v5908
        %v5980 = vunpack.c.l.b16 %v5909
        %v5981 = vunpack.c.l.b16 %v5910
        %v5982 = vunpack.c.l.b16 %v5911
        %v5983 = vunpack.c.l.b16 %v5912
        %v5984 = vunpack.c.l.b16 %v5913
        %v5985 = vunpack.c.l.b16 %v5914
        %v5986 = vpack.c.b16 %v5971, %v5970
        %v5987 = vpack.c.b16 %v5973, %v5972
        %v5988 = vpack.c.b16 %v5975, %v5974
        %v5989 = vpack.c.b16 %v5977, %v5976
        %v5990 = vpack.c.b16 %v5979, %v5978
        %v5991 = vpack.c.b16 %v5981, %v5980
        %v5992 = vpack.c.b16 %v5983, %v5982
        %v5993 = vpack.c.b16 %v5985, %v5984
        %6002 = vmatprep.subr.bf16.mxu0 0
        %6003 = vmatpush1.bf16.msra.mxu0 %v5993
        %6004 = vmatprep.subr.bf16.mxu0 0
        %6005 = vmatpush1.bf16.msra.mxu0 %v5992
        %6006 = vmatprep.subr.bf16.mxu0 0
        %6007 = vmatpush1.bf16.msra.mxu0 %v5991
        %6008 = vmatprep.subr.bf16.mxu0 0
        %6009 = vmatpush1.bf16.msra.mxu0 %v5990
        %6010 = vmatprep.subr.bf16.mxu0 0
        %6011 = vmatpush1.bf16.msra.mxu0 %v5989
        %6012 = vmatprep.subr.bf16.mxu0 0
        %6013 = vmatpush1.bf16.msra.mxu0 %v5988
        %6014 = vmatprep.subr.bf16.mxu0 0
        %6015 = vmatpush1.bf16.msra.mxu0 %v5987
        %6016 = vmatprep.subr.bf16.mxu0 0
        %6017 = vmatpush1.bf16.msra.mxu0 %v5986
        %6018 = vmatprep.subr.bf16.mxu0 0
        %6019 = vmatpush2.bf16.msra.mxu0 0
        %6020 = vmatprep.subr.bf16.mxu0 0
        %6021 = vmatpush2.bf16.msra.mxu0 0
        %6022 = vmatprep.subr.bf16.mxu0 0
        %6023 = vmatpush2.bf16.msra.mxu0 0
        %6024 = vmatprep.subr.bf16.mxu0 0
        %6025 = vmatpush2.bf16.msra.mxu0 0
        %6026 = vmatprep.subr.bf16.mxu0 0
        %6027 = vmatpush2.bf16.msra.mxu0 0
        %6028 = vmatprep.subr.bf16.mxu0 0
        %6029 = vmatpush2.bf16.msra.mxu0 0
        %6030 = vmatprep.subr.bf16.mxu0 0
        %6031 = vmatpush2.bf16.msra.mxu0 0
        %6032 = vmatprep.subr.bf16.mxu0 0
        %6033 = vmatpush2.bf16.msra.mxu0 0
        %6034 = vmatprep.mubr.bf16.mxu0 0
        %6035 = vmatmul.mubr.bf16.gmra.mxu0 %v5952
        %v6036 = vpop.f32.mrf.mxu0
        %v6037 = vadd.f32 %v5920, %v6036
        %v6038 = vpop.f32.mrf.mxu0
        %v6039 = vpop.f32.mrf.mxu0
        %v6040 = vpop.f32.mrf.mxu0
        %6041 = vdwg.mxu0
        %v6042 = vlaneseq
        %v6043 = vand.u32 %v6042, 127
        %vm6044 = vcmp.lt.s32.totalorder %v6043, 10
        %v6045 = vsel %vm6044, %v6037, -1e+30
        %6046 = vmax.xlane.f32.xlu0 %v6045
        %v6047 = vpop.xlane.xlu0 %6046
        %v6048 = vsub.f32 %v6045, %v6047
        %v6049 = vmul.f32 %v6048, 1.442695
        %v6050 = vpow.pop %v6049
        %6051 = vadd.xlane.f32.xlu0 %v6050
        %v6052 = vpop.xlane.xlu0 %6051
        %v6053 = vlog2.pop %v6052
        %v6054 = vmul.f32 %v6053, 0.6931472
        %v6055 = vsub.f32 %v6048, %v6054
        %6056 = vst [vmem:[%s378] sm:$0xff] %v6055
        %s6057 = sand.u32 %s187, 1
        %s6058 = scalar_lea.sflag [#allocation4], %s6057
        %s6059 = sand.u32 %s187, 1
        %s6060 = smul.addr %s6059, 8
        %s6061 = scalar_lea.vmem [#allocation14], %s6060
        // Predicated region
        $region77: #{tpu_custom_call.1} parent=47 // pred_check
          %p6062 = pneg %p197
        $region78: #{tpu_custom_call.1} parent=47 // pred_check_branch
          %6064 = sbr.rel (%p6062) target = $region80
        $region79: #{tpu_custom_call.1} parent=47 // pred_region
          %s6066 = ssub.s32 128, 128
          %6067 = vsyncadd %s6058, %s6066
          %s6068 = smul.addr %s27, 128
          %s6069 = scalar_lea.hbm %s7, %s6068
          %s6071 = sshll.u32 %s6061, 4
          %s6072 = int_to_ptr.vmem [resolvable:$true] %s6071
          %6074 = dma.vmem_to_hbm [thread:$0]  %s6072, 128, %s6069, %s6058
        $region80: #{tpu_custom_call.1} parent=47 // pred_fallthru
          _
      $region48: #{tpu_custom_call.1} parent=5 // pred_fallthru
        _
      %p6075 = scmp.le.s32.totalorder 2, %s22
      // Predicated region
      $region81: #{tpu_custom_call.1} parent=5 // pred_check
        %p6076 = pneg %p6075
      $region82: #{tpu_custom_call.1} parent=5 // pred_check_branch
        %6078 = sbr.rel (%p6076) target = $region84
      $region83: #{tpu_custom_call.1} parent=5 // pred_region
        %s6079 = ssub.s32 %s22, 2
        // Predicated region
        $region85: #{tpu_custom_call.1} parent=83 // pred_check
          %p6080 = pneg %p203
        $region86: #{tpu_custom_call.1} parent=83 // pred_check_branch
          %6082 = sbr.rel (%p6080) target = $region88
        $region87: #{tpu_custom_call.1} parent=83 // pred_region
          %s6083 = sand.u32 %s188, 1
          %s6084 = scalar_lea.sflag [#allocation4], %s6083
          %s6085 = sand.u32 %s188, 1
          %s6086 = smul.addr %s6085, 8
          %s6087 = scalar_lea.vmem [#allocation14], %s6086
          %6088 = dma.done %s6084, 128
        $region88: #{tpu_custom_call.1} parent=83 // pred_fallthru
          _
      $region84: #{tpu_custom_call.1} parent=5 // pred_fallthru
        _
    $region6: #{tpu_custom_call.1} parent=1 // loop_footer
      %s26 = sadd.s32 1, %s22
    $region7: #{tpu_custom_call.1} parent=1 // loop_footer_branch
      %21 = sbr.rel target = $region3
    $region8: #{tpu_custom_call.1} parent=1 // loop_exit
      _
    %6089 = vsyncpa [#allocation3], 1
    %s6090 = scalar_lea.sflag [#allocation3], 1
    %6091 = vsyncpa %s6090, 1
    %6092 = vsyncpa [#allocation6], 1
    %6093 = vsyncpa [#allocation9], 1
    %6094 = vsyncpa [#allocation12], 1
    %6095 = vsyncpa [#allocation4], 1
    %s6096 = scalar_lea.sflag [#allocation4], 1
    %6097 = vsyncpa %s6096, 1

</llo_original>
